<compile_context>
chip_gen: v5e
topology: v5e:2x2
jax: 0.10.0
libtpu: 0.0.40
codegen_flags: <defaults>
</compile_context>

<pallas_src>
import functools

import jax
import jax.numpy as jnp
from jax.experimental import pallas as pl
from jax.experimental.pallas import tpu as pltpu


def _layernorm(v, g, b, eps=1e-5):
    # nn.LayerNorm over the last axis (biased variance, eps=1e-5), f32 math.
    mu = jnp.mean(v, axis=-1, keepdims=True)
    var = jnp.mean((v - mu) ** 2, axis=-1, keepdims=True)
    return (v - mu) * jax.lax.rsqrt(var + eps) * g + b


def vit_fused_kernel(xp_ref, wp_ref, poscls_ref,
                     ln1g_ref, ln1b_ref, wqkv_ref, wo_ref, bo_ref,
                     ln2g_ref, ln2b_ref, w1_ref, b1_ref, w2_ref, b2_ref,
                     lnfg_ref, lnfb_ref, wh_ref, bh_ref,
                     out_ref, tok_ref, *, num_heads, seq_pad, seq_real):
    l = pl.program_id(1)
    n_layers = pl.num_programs(1)

    rows, D = tok_ref.shape              # rows = B_blk * seq_pad
    S = seq_pad
    Bb = rows // S
    H = num_heads
    hd = D // H
    scale = float(hd) ** -0.5
    bf16 = jnp.bfloat16

    # ---- patch embedding + cls token + positional embedding (layer step 0) ----
    @pl.when(l == 0)
    def _embed():
        # xp rows: per sample [zero cls slot | N patch rows | zero padding].
        # poscls rows: [cls token | pos_embed + conv bias | zeros].
        emb = jnp.dot(xp_ref[...].astype(bf16), wp_ref[...],
                      preferred_element_type=jnp.float32)            # (rows, D)
        tok_ref[...] = (emb.reshape(Bb, S, D) + poscls_ref[...]).reshape(rows, D)

    x = tok_ref[...]                                                 # f32 residual stream

    # ---- self-attention (pre-norm), qkv_bias=False ----
    h1 = _layernorm(x, ln1g_ref[...], ln1b_ref[...])
    qkv = jnp.dot(h1.astype(bf16), wqkv_ref[...],
                  preferred_element_type=jnp.float32)                # (rows, 3D)
    qkv3 = qkv.reshape(Bb, S, 3 * D)                                 # sublane split only

    def heads(base):
        # Aligned hd-lane slices + one stack per tensor; the batch dim is
        # (H * B_blk) so both attention einsums are single batched MXU calls.
        parts = [qkv3[:, :, base + h * hd: base + (h + 1) * hd] for h in range(H)]
        return jnp.stack(parts, axis=0).reshape(H * Bb, S, hd).astype(bf16)

    q3, k3, v3 = heads(0), heads(D), heads(2 * D)

    att = jnp.einsum('hqd,hkd->hqk', q3, k3,
                     preferred_element_type=jnp.float32) * scale     # (H*Bb, S, S)
    # Mask padded key columns (tokens >= seq_real are sublane padding).
    kmask = jax.lax.broadcasted_iota(jnp.int32, (1, 1, S), 2) < seq_real
    att = jnp.where(kmask, att, -1e30)
    att = att - jnp.max(att, axis=-1, keepdims=True)
    p = jnp.exp(att)
    p = p * pl.reciprocal(jnp.sum(p, axis=-1, keepdims=True), approx=True)
    o3 = jnp.einsum('hqk,hkd->hqd', p.astype(bf16), v3,
                    preferred_element_type=jnp.float32)              # (H*Bb, S, hd)
    o4 = o3.reshape(H, Bb, S, hd)
    o = jnp.concatenate([o4[h] for h in range(H)], axis=-1).reshape(rows, D)
    x = x + jnp.dot(o.astype(bf16), wo_ref[...],
                    preferred_element_type=jnp.float32) + bo_ref[...]

    # ---- MLP (pre-norm): Linear -> GELU -> Linear (dropout rate = 0) ----
    h2 = _layernorm(x, ln2g_ref[...], ln2b_ref[...])
    m = jnp.dot(h2.astype(bf16), w1_ref[...],
                preferred_element_type=jnp.float32) + b1_ref[...]
    # TODO(synk): PyTorch nn.GELU defaults to exact erf GELU; the tanh
    # approximation is used because erf lowering is not guaranteed in Mosaic.
    m = jax.nn.gelu(m, approximate=True)
    m = jnp.dot(m.astype(bf16), w2_ref[...],
                preferred_element_type=jnp.float32) + b2_ref[...]
    x = x + m
    tok_ref[...] = x

    # ---- final LN + classifier head on the cls tokens (last layer step) ----
    @pl.when(l == n_layers - 1)
    def _head():
        cls = jnp.concatenate([x[i * S:i * S + 1, :] for i in range(Bb)], axis=0)
        clsn = _layernorm(cls, lnfg_ref[...], lnfb_ref[...])
        out_ref[...] = jnp.dot(clsn.astype(bf16), wh_ref[...],
                               preferred_element_type=jnp.float32) + bh_ref[...]


def vit_forward(x_nchw, params, *, patch_size, num_heads, block_batch=2):
    B, C_in, Himg, Wimg = x_nchw.shape
    P = patch_size
    gh, gw = Himg // P, Wimg // P
    N = gh * gw
    S_real = N + 1                               # patches + cls token
    S_pad = ((S_real + 7) // 8) * 8              # sublane-aligned token count

    assert B % block_batch == 0, "block_batch must divide the batch size"
    Bb = block_batch
    nb = B // Bb

    D = params["w_patch"].shape[-1]
    L = params["w_qkv"].shape[0]
    M = params["w1"].shape[-1]
    C = params["w_head"].shape[-1]

    # im2col for the stride-P conv patch embedding (pure layout glue); per
    # sample: row 0 is the zero cls slot, rows >= S_real are zero padding.
    xp = x_nchw.reshape(B, C_in, gh, P, gw, P)
    xp = xp.transpose(0, 2, 4, 1, 3, 5).reshape(B, N, C_in * P * P)
    xp = jnp.pad(xp, ((0, 0), (1, S_pad - S_real), (0, 0)))          # (B, S_pad, K)
    K = xp.shape[-1]
    xp = xp.reshape(B * S_pad, K)

    # Row 0 = cls token, rows 1..N = pos_embed + conv bias, rest zeros.
    poscls = jnp.concatenate(
        [params["cls_token"],
         params["pos_embed"] + params["b_patch"],
         jnp.zeros((S_pad - S_real, D), jnp.float32)], axis=0)        # (S_pad, D)

    per_layer = lambda b, l: (l, 0, 0)
    const2 = lambda b, l: (0, 0)

    # ---- VMEM budget: 2x streamed per-layer weights + resident constants +
    # activation working set (v5e/v6e: 128 MiB, v7x: 64 MiB physical). ----
    nbytes = lambda a: int(a.size) * a.dtype.itemsize
    stream = sum(nbytes(params[k]) for k in
                 ("ln1_g", "ln1_b", "w_qkv", "w_o", "b_o",
                  "ln2_g", "ln2_b", "w1", "b1", "w2", "b2")) // L
    resident = (nbytes(params["w_patch"]) + poscls.size * 4
                + nbytes(params["w_head"]) + nbytes(params["b_head"])
                + nbytes(params["ln_g"]) + nbytes(params["ln_b"])
                + 2 * Bb * S_pad * K * 4)
    acts = 4 * Bb * S_pad * (7 * D + M) + 4 * Bb * num_heads * S_pad * S_pad
    need = 2 * stream + resident + acts + 4 * Bb * S_pad * D
    vmem_limit = int(min(96 * 2 ** 20, max(32 * 2 ** 20, 2 * need)))

    kern = functools.partial(vit_fused_kernel, num_heads=num_heads,
                             seq_pad=S_pad, seq_real=S_real)
    out = pl.pallas_call(
        kern,
        out_shape=jax.ShapeDtypeStruct((nb, Bb, C), jnp.float32),
        grid=(nb, L),
        in_specs=[
            pl.BlockSpec((Bb * S_pad, K), lambda b, l: (b, 0)),   # patch rows (per block)
            pl.BlockSpec((K, D), const2),                         # flattened conv weight
            pl.BlockSpec((S_pad, D), const2),                     # cls / pos / conv-bias
            pl.BlockSpec((None, 1, D), per_layer),                # ln1 gamma
            pl.BlockSpec((None, 1, D), per_layer),                # ln1 beta
            pl.BlockSpec((None, D, 3 * D), per_layer),            # W_qkv (bf16)
            pl.BlockSpec((None, D, D), per_layer),                # W_o (bf16)
            pl.BlockSpec((None, 1, D), per_layer),                # b_o
            pl.BlockSpec((None, 1, D), per_layer),                # ln2 gamma
            pl.BlockSpec((None, 1, D), per_layer),                # ln2 beta
            pl.BlockSpec((None, D, M), per_layer),                # MLP W1 (bf16)
            pl.BlockSpec((None, 1, M), per_layer),                # MLP b1
            pl.BlockSpec((None, M, D), per_layer),                # MLP W2 (bf16)
            pl.BlockSpec((None, 1, D), per_layer),                # MLP b2
            pl.BlockSpec((1, D), const2),                         # final LN gamma
            pl.BlockSpec((1, D), const2),                         # final LN beta
            pl.BlockSpec((D, C), const2),                         # head weight (bf16)
            pl.BlockSpec((1, C), const2),                         # head bias
        ],
        out_specs=pl.BlockSpec((None, Bb, C), lambda b, l: (b, 0, 0)),
        scratch_shapes=[pltpu.VMEM((Bb * S_pad, D), jnp.float32)],   # resident tokens
        compiler_params=pltpu.CompilerParams(
            # NOTE: the layer axis must remain the innermost, sequentially
            # iterated ("arbitrary") axis — the token scratch is a carry that
            # is re-initialized at l==0 and consumed at l==L-1.
            dimension_semantics=("parallel", "arbitrary"),
            vmem_limit_bytes=vmem_limit),
    )(xp, params["w_patch"], poscls,
      params["ln1_g"], params["ln1_b"], params["w_qkv"], params["w_o"], params["b_o"],
      params["ln2_g"], params["ln2_b"], params["w1"], params["b1"], params["w2"],
      params["b2"], params["ln_g"], params["ln_b"], params["w_head"], params["b_head"])
    return out.reshape(B, C)


def init_params(key, *, in_ch, patch_size, img_size, hidden, mlp_dim,
                num_layers, num_heads, num_classes, wdtype=jnp.bfloat16):
    assert hidden % num_heads == 0
    P = patch_size
    n_patches = (img_size // P) ** 2
    K = in_ch * P * P
    L = num_layers
    ks = jax.random.split(key, 8)

    def nrm(k, shape, std=0.02, dtype=jnp.float32):
        return (jax.random.normal(k, shape, jnp.float32) * std).astype(dtype)

    return {
        # patch embedding (conv as flattened matmul) — weights in bf16 for the MXU
        "w_patch": nrm(ks[0], (K, hidden), dtype=wdtype),
        "b_patch": jnp.zeros((1, hidden), jnp.float32),
        # posenc modeled as a learnable positional embedding (one of PosEncType's
        # options); sincos variants would just precompute this table differently.
        "pos_embed": nrm(ks[1], (n_patches, hidden)),
        "cls_token": nrm(ks[2], (1, hidden)),
        # final norm + classifier head
        "ln_g": jnp.ones((1, hidden), jnp.float32),
        "ln_b": jnp.zeros((1, hidden), jnp.float32),
        "w_head": nrm(ks[3], (hidden, num_classes), dtype=wdtype),
        "b_head": jnp.zeros((1, num_classes), jnp.float32),
        # transformer layers, stacked along a leading L axis
        "ln1_g": jnp.ones((L, 1, hidden), jnp.float32),
        "ln1_b": jnp.zeros((L, 1, hidden), jnp.float32),
        "w_qkv": nrm(ks[4], (L, hidden, 3 * hidden), dtype=wdtype),  # qkv_bias=False
        "w_o": nrm(ks[5], (L, hidden, hidden), dtype=wdtype),
        "b_o": jnp.zeros((L, 1, hidden), jnp.float32),
        "ln2_g": jnp.ones((L, 1, hidden), jnp.float32),
        "ln2_b": jnp.zeros((L, 1, hidden), jnp.float32),
        "w1": nrm(ks[6], (L, hidden, mlp_dim), dtype=wdtype),
        "b1": jnp.zeros((L, 1, mlp_dim), jnp.float32),
        "w2": nrm(ks[7], (L, mlp_dim, hidden), dtype=wdtype),
        "b2": jnp.zeros((L, 1, hidden), jnp.float32),
    }


if __name__ == "__main__":
    # Small, lane-friendly configuration: 16x16 image, 4x4 patches -> 16 patches,
    # +1 cls token = 17 tokens (padded to 24); hidden=128 (lane-dense), 4 heads
    # (head_dim=32), mlp=256, 2 layers, 2 classes (spec default num_classes=2,
    # in_channels=1).  batch=4 with block_batch=2 -> 2 parallel batch blocks.
    B, IN_CH, IMG, PATCH = 4, 1, 16, 4
    HIDDEN, MLP_DIM, LAYERS, HEADS, NUM_CLASSES = 128, 256, 2, 4, 2
    BLOCK_BATCH = 2

    root = jax.random.PRNGKey(0)
    k_params, k_x = jax.random.split(root)
    params = init_params(k_params, in_ch=IN_CH, patch_size=PATCH, img_size=IMG,
                         hidden=HIDDEN, mlp_dim=MLP_DIM, num_layers=LAYERS,
                         num_heads=HEADS, num_classes=NUM_CLASSES)
    x = jax.random.normal(k_x, (B, IN_CH, IMG, IMG), jnp.float32)

    fwd = jax.jit(functools.partial(vit_forward, patch_size=PATCH,
                                    num_heads=HEADS, block_batch=BLOCK_BATCH))
    logits = jax.block_until_ready(fwd(x, params))

    assert logits.shape == (B, NUM_CLASSES), logits.shape
    assert bool(jnp.all(jnp.isfinite(logits)))
    print("KERNEL_OK")
</pallas_src>

<mosaic_0001>
module attributes {stable_mosaic.version = 11 : i64} {
  func.func @vit_fused_kernel(%arg0: i32, %arg1: i32, %arg2: memref<48x16xf32, #tpu.memory_space<vmem>>, %arg3: memref<16x128xbf16, #tpu.memory_space<vmem>>, %arg4: memref<24x128xf32, #tpu.memory_space<vmem>>, %arg5: memref<1x1x128xf32, #tpu.memory_space<vmem>>, %arg6: memref<1x1x128xf32, #tpu.memory_space<vmem>>, %arg7: memref<1x128x384xbf16, #tpu.memory_space<vmem>>, %arg8: memref<1x128x128xbf16, #tpu.memory_space<vmem>>, %arg9: memref<1x1x128xf32, #tpu.memory_space<vmem>>, %arg10: memref<1x1x128xf32, #tpu.memory_space<vmem>>, %arg11: memref<1x1x128xf32, #tpu.memory_space<vmem>>, %arg12: memref<1x128x256xbf16, #tpu.memory_space<vmem>>, %arg13: memref<1x1x256xf32, #tpu.memory_space<vmem>>, %arg14: memref<1x256x128xbf16, #tpu.memory_space<vmem>>, %arg15: memref<1x1x128xf32, #tpu.memory_space<vmem>>, %arg16: memref<1x128xf32, #tpu.memory_space<vmem>>, %arg17: memref<1x128xf32, #tpu.memory_space<vmem>>, %arg18: memref<128x2xbf16, #tpu.memory_space<vmem>>, %arg19: memref<1x2xf32, #tpu.memory_space<vmem>>, %arg20: memref<1x2x2xf32, #tpu.memory_space<vmem>>, %arg21: memref<48x128xf32, #tpu.memory_space<vmem>>) attributes {dimension_semantics = [#tpu.dimension_semantics<parallel>, #tpu.dimension_semantics<arbitrary>], iteration_bounds = array<i64: 2, 2>, scalar_prefetch = 0 : i64, scratch_operands = 1 : i64, tpu.core_type = #tpu.core_type<tc>, window_params = [{transform_indices = @transform_0, window_bounds = array<i64: 48, 16>}, {pipeline_mode = #tpu.pipeline_mode<synchronous>, transform_indices = @transform_1, window_bounds = array<i64: 16, 128>}, {pipeline_mode = #tpu.pipeline_mode<synchronous>, transform_indices = @transform_2, window_bounds = array<i64: 24, 128>}, {transform_indices = @transform_3, window_bounds = array<i64: 1, 1, 128>}, {transform_indices = @transform_4, window_bounds = array<i64: 1, 1, 128>}, {transform_indices = @transform_5, window_bounds = array<i64: 1, 128, 384>}, {transform_indices = @transform_6, window_bounds = array<i64: 1, 128, 128>}, {transform_indices = @transform_7, window_bounds = array<i64: 1, 1, 128>}, {transform_indices = @transform_8, window_bounds = array<i64: 1, 1, 128>}, {transform_indices = @transform_9, window_bounds = array<i64: 1, 1, 128>}, {transform_indices = @transform_10, window_bounds = array<i64: 1, 128, 256>}, {transform_indices = @transform_11, window_bounds = array<i64: 1, 1, 256>}, {transform_indices = @transform_12, window_bounds = array<i64: 1, 256, 128>}, {transform_indices = @transform_13, window_bounds = array<i64: 1, 1, 128>}, {pipeline_mode = #tpu.pipeline_mode<synchronous>, transform_indices = @transform_14, window_bounds = array<i64: 1, 128>}, {pipeline_mode = #tpu.pipeline_mode<synchronous>, transform_indices = @transform_15, window_bounds = array<i64: 1, 128>}, {pipeline_mode = #tpu.pipeline_mode<synchronous>, transform_indices = @transform_16, window_bounds = array<i64: 128, 2>}, {pipeline_mode = #tpu.pipeline_mode<synchronous>, transform_indices = @transform_17, window_bounds = array<i64: 1, 2>}, {transform_indices = @transform_18, window_bounds = array<i64: 1, 2, 2>}]} {
    %c0_i32 = arith.constant 0 : i32
    %0 = arith.cmpi eq, %arg1, %c0_i32 : i32
    %1 = arith.extui %0 : i1 to i32
    %c0_i32_0 = arith.constant 0 : i32
    %2 = arith.cmpi ne, %1, %c0_i32_0 : i32
    scf.if %2 {
      %c0_61 = arith.constant 0 : index
      %c0_62 = arith.constant 0 : index
      %170 = vector.load %arg2[%c0_61, %c0_62] : memref<48x16xf32, #tpu.memory_space<vmem>>, vector<48x16xf32>
      %171 = arith.truncf %170 : vector<48x16xf32> to vector<48x16xbf16>
      %c0_63 = arith.constant 0 : index
      %c0_64 = arith.constant 0 : index
      %172 = vector.load %arg3[%c0_63, %c0_64] : memref<16x128xbf16, #tpu.memory_space<vmem>>, vector<16x128xbf16>
      %cst_65 = arith.constant dense<0.000000e+00> : vector<48x128xf32>
      %173 = tpu.matmul %171, %172, %cst_65 {dimension_numbers = #tpu.dot_dimension_numbers<[1], [0], [0], [1], [0, 0, 1, 1], [], []>} : vector<48x16xbf16>, vector<16x128xbf16>, vector<48x128xf32> -> vector<48x128xf32>
      %174 = vector.shape_cast %173 : vector<48x128xf32> to vector<2x24x128xf32>
      %c0_66 = arith.constant 0 : index
      %c0_67 = arith.constant 0 : index
      %175 = vector.load %arg4[%c0_66, %c0_67] : memref<24x128xf32, #tpu.memory_space<vmem>>, vector<24x128xf32>
      %176 = vector.shape_cast %175 : vector<24x128xf32> to vector<1x24x128xf32>
      %177 = vector.broadcast %176 : vector<1x24x128xf32> to vector<2x24x128xf32>
      %178 = arith.addf %174, %177 : vector<2x24x128xf32>
      %179 = vector.shape_cast %178 : vector<2x24x128xf32> to vector<48x128xf32>
      %c0_68 = arith.constant 0 : index
      %c0_69 = arith.constant 0 : index
      %180 = vector.load %arg21[%c0_68, %c0_69] : memref<48x128xf32, #tpu.memory_space<vmem>>, vector<48x128xf32>
      tpu.vector_store %arg21[%c0_68, %c0_69], %179 {strides = array<i32>} : memref<48x128xf32, #tpu.memory_space<vmem>>, vector<48x128xf32>,
    } else {
    }
    %c0 = arith.constant 0 : index
    %c0_1 = arith.constant 0 : index
    %3 = vector.load %arg21[%c0, %c0_1] : memref<48x128xf32, #tpu.memory_space<vmem>>, vector<48x128xf32>
    %c0_2 = arith.constant 0 : index
    %c0_3 = arith.constant 0 : index
    %c0_4 = arith.constant 0 : index
    %4 = vector.load %arg5[%c0_2, %c0_3, %c0_4] : memref<1x1x128xf32, #tpu.memory_space<vmem>>, vector<1x1x128xf32>
    %5 = vector.shape_cast %4 : vector<1x1x128xf32> to vector<1x128xf32>
    %c0_5 = arith.constant 0 : index
    %c0_6 = arith.constant 0 : index
    %c0_7 = arith.constant 0 : index
    %6 = vector.load %arg6[%c0_5, %c0_6, %c0_7] : memref<1x1x128xf32, #tpu.memory_space<vmem>>, vector<1x1x128xf32>
    %7 = vector.shape_cast %6 : vector<1x1x128xf32> to vector<1x128xf32>
    %cst = arith.constant dense<0.000000e+00> : vector<48xf32>
    %8 = vector.multi_reduction <add>, %3, %cst [1] : vector<48x128xf32> to vector<48xf32>
    %9 = vector.shape_cast %8 : vector<48xf32> to vector<48x1xf32>
    %cst_8 = arith.constant 1.280000e+02 : f32
    %10 = vector.broadcast %cst_8 : f32 to vector<48x1xf32>
    %11 = arith.divf %9, %10 : vector<48x1xf32>
    %12 = vector.broadcast %11 : vector<48x1xf32> to vector<48x128xf32>
    %13 = arith.subf %3, %12 : vector<48x128xf32>
    %14 = arith.mulf %13, %13 : vector<48x128xf32>
    %cst_9 = arith.constant dense<0.000000e+00> : vector<48xf32>
    %15 = vector.multi_reduction <add>, %14, %cst_9 [1] : vector<48x128xf32> to vector<48xf32>
    %16 = vector.shape_cast %15 : vector<48xf32> to vector<48x1xf32>
    %cst_10 = arith.constant 1.280000e+02 : f32
    %17 = vector.broadcast %cst_10 : f32 to vector<48x1xf32>
    %18 = arith.divf %16, %17 : vector<48x1xf32>
    %19 = vector.broadcast %11 : vector<48x1xf32> to vector<48x128xf32>
    %20 = arith.subf %3, %19 : vector<48x128xf32>
    %cst_11 = arith.constant 9.99999974E-6 : f32
    %21 = vector.broadcast %cst_11 : f32 to vector<48x1xf32>
    %22 = arith.addf %18, %21 : vector<48x1xf32>
    %23 = math.rsqrt %22 : vector<48x1xf32>
    %24 = vector.broadcast %23 : vector<48x1xf32> to vector<48x128xf32>
    %25 = arith.mulf %20, %24 : vector<48x128xf32>
    %26 = vector.broadcast %5 : vector<1x128xf32> to vector<48x128xf32>
    %27 = arith.mulf %25, %26 : vector<48x128xf32>
    %28 = vector.broadcast %7 : vector<1x128xf32> to vector<48x128xf32>
    %29 = arith.addf %27, %28 : vector<48x128xf32>
    %30 = arith.truncf %29 : vector<48x128xf32> to vector<48x128xbf16>
    %c0_12 = arith.constant 0 : index
    %c0_13 = arith.constant 0 : index
    %c0_14 = arith.constant 0 : index
    %31 = vector.load %arg7[%c0_12, %c0_13, %c0_14] : memref<1x128x384xbf16, #tpu.memory_space<vmem>>, vector<1x128x384xbf16>
    %32 = vector.shape_cast %31 : vector<1x128x384xbf16> to vector<128x384xbf16>
    %cst_15 = arith.constant dense<0.000000e+00> : vector<48x384xf32>
    %33 = tpu.matmul %30, %32, %cst_15 {dimension_numbers = #tpu.dot_dimension_numbers<[1], [0], [0], [1], [0, 0, 1, 1], [], []>} : vector<48x128xbf16>, vector<128x384xbf16>, vector<48x384xf32> -> vector<48x384xf32>
    %34 = vector.shape_cast %33 : vector<48x384xf32> to vector<2x24x384xf32>
    %35 = vector.extract_strided_slice %34 {offsets = [0, 0, 0], sizes = [2, 24, 32], strides = [1, 1, 1]} : vector<2x24x384xf32> to vector<2x24x32xf32>
    %36 = vector.extract_strided_slice %34 {offsets = [0, 0, 32], sizes = [2, 24, 32], strides = [1, 1, 1]} : vector<2x24x384xf32> to vector<2x24x32xf32>
    %37 = vector.extract_strided_slice %34 {offsets = [0, 0, 64], sizes = [2, 24, 32], strides = [1, 1, 1]} : vector<2x24x384xf32> to vector<2x24x32xf32>
    %38 = vector.extract_strided_slice %34 {offsets = [0, 0, 96], sizes = [2, 24, 32], strides = [1, 1, 1]} : vector<2x24x384xf32> to vector<2x24x32xf32>
    %39 = vector.shape_cast %35 : vector<2x24x32xf32> to vector<1x2x24x32xf32>
    %40 = vector.shape_cast %36 : vector<2x24x32xf32> to vector<1x2x24x32xf32>
    %41 = vector.shape_cast %37 : vector<2x24x32xf32> to vector<1x2x24x32xf32>
    %42 = vector.shape_cast %38 : vector<2x24x32xf32> to vector<1x2x24x32xf32>
    %43 = tpu.concatenate %39, %40, %41, %42 in 0 : vector<1x2x24x32xf32>, vector<1x2x24x32xf32>, vector<1x2x24x32xf32>, vector<1x2x24x32xf32> -> vector<4x2x24x32xf32>
    %44 = vector.shape_cast %43 : vector<4x2x24x32xf32> to vector<8x24x32xf32>
    %45 = arith.truncf %44 : vector<8x24x32xf32> to vector<8x24x32xbf16>
    %46 = vector.extract_strided_slice %34 {offsets = [0, 0, 128], sizes = [2, 24, 32], strides = [1, 1, 1]} : vector<2x24x384xf32> to vector<2x24x32xf32>
    %47 = vector.extract_strided_slice %34 {offsets = [0, 0, 160], sizes = [2, 24, 32], strides = [1, 1, 1]} : vector<2x24x384xf32> to vector<2x24x32xf32>
    %48 = vector.extract_strided_slice %34 {offsets = [0, 0, 192], sizes = [2, 24, 32], strides = [1, 1, 1]} : vector<2x24x384xf32> to vector<2x24x32xf32>
    %49 = vector.extract_strided_slice %34 {offsets = [0, 0, 224], sizes = [2, 24, 32], strides = [1, 1, 1]} : vector<2x24x384xf32> to vector<2x24x32xf32>
    %50 = vector.shape_cast %46 : vector<2x24x32xf32> to vector<1x2x24x32xf32>
    %51 = vector.shape_cast %47 : vector<2x24x32xf32> to vector<1x2x24x32xf32>
    %52 = vector.shape_cast %48 : vector<2x24x32xf32> to vector<1x2x24x32xf32>
    %53 = vector.shape_cast %49 : vector<2x24x32xf32> to vector<1x2x24x32xf32>
    %54 = tpu.concatenate %50, %51, %52, %53 in 0 : vector<1x2x24x32xf32>, vector<1x2x24x32xf32>, vector<1x2x24x32xf32>, vector<1x2x24x32xf32> -> vector<4x2x24x32xf32>
    %55 = vector.shape_cast %54 : vector<4x2x24x32xf32> to vector<8x24x32xf32>
    %56 = arith.truncf %55 : vector<8x24x32xf32> to vector<8x24x32xbf16>
    %57 = vector.extract_strided_slice %34 {offsets = [0, 0, 256], sizes = [2, 24, 32], strides = [1, 1, 1]} : vector<2x24x384xf32> to vector<2x24x32xf32>
    %58 = vector.extract_strided_slice %34 {offsets = [0, 0, 288], sizes = [2, 24, 32], strides = [1, 1, 1]} : vector<2x24x384xf32> to vector<2x24x32xf32>
    %59 = vector.extract_strided_slice %34 {offsets = [0, 0, 320], sizes = [2, 24, 32], strides = [1, 1, 1]} : vector<2x24x384xf32> to vector<2x24x32xf32>
    %60 = vector.extract_strided_slice %34 {offsets = [0, 0, 352], sizes = [2, 24, 32], strides = [1, 1, 1]} : vector<2x24x384xf32> to vector<2x24x32xf32>
    %61 = vector.shape_cast %57 : vector<2x24x32xf32> to vector<1x2x24x32xf32>
    %62 = vector.shape_cast %58 : vector<2x24x32xf32> to vector<1x2x24x32xf32>
    %63 = vector.shape_cast %59 : vector<2x24x32xf32> to vector<1x2x24x32xf32>
    %64 = vector.shape_cast %60 : vector<2x24x32xf32> to vector<1x2x24x32xf32>
    %65 = tpu.concatenate %61, %62, %63, %64 in 0 : vector<1x2x24x32xf32>, vector<1x2x24x32xf32>, vector<1x2x24x32xf32>, vector<1x2x24x32xf32> -> vector<4x2x24x32xf32>
    %66 = vector.shape_cast %65 : vector<4x2x24x32xf32> to vector<8x24x32xf32>
    %67 = arith.truncf %66 : vector<8x24x32xf32> to vector<8x24x32xbf16>
    "tpu.trace_start"() <{level = 10 : i32, message = "hqd,hkd->hqk"}> : () -> ()
    %cst_16 = arith.constant dense<0.000000e+00> : vector<8x24x24xf32>
    %68 = tpu.matmul %45, %56, %cst_16 {dimension_numbers = #tpu.dot_dimension_numbers<[2], [2], [1], [1], [0, 0, 0, 1, 1, 1], [0], [0]>} : vector<8x24x32xbf16>, vector<8x24x32xbf16>, vector<8x24x24xf32> -> vector<8x24x24xf32>
    "tpu.trace_stop"() : () -> ()
    %cst_17 = arith.constant 0.176776692 : f32
    %69 = vector.broadcast %cst_17 : f32 to vector<8x24x24xf32>
    %70 = arith.mulf %68, %69 : vector<8x24x24xf32>
    %71 = tpu.iota {dimensions = array<i32: 2>} : vector<1x1x24xi32>
    %c17_i32 = arith.constant 17 : i32
    %72 = vector.broadcast %c17_i32 : i32 to vector<1x1x24xi32>
    %73 = arith.cmpi slt, %71, %72 : vector<1x1x24xi32>
    %cst_18 = arith.constant -1.000000e+30 : f32
    %74 = vector.shape_cast %73 : vector<1x1x24xi1> to vector<1x1x24xi1>
    %75 = vector.broadcast %74 : vector<1x1x24xi1> to vector<8x24x24xi1>
    %76 = vector.broadcast %cst_18 : f32 to vector<8x24x24xf32>
    %77 = arith.select %75, %70, %76 : vector<8x24x24xi1>, vector<8x24x24xf32>
    %cst_19 = arith.constant dense<0xFF800000> : vector<8x24xf32>
    %78 = vector.multi_reduction <maximumf>, %77, %cst_19 [2] : vector<8x24x24xf32> to vector<8x24xf32>
    %79 = vector.shape_cast %78 : vector<8x24xf32> to vector<8x24x1xf32>
    %80 = vector.broadcast %79 : vector<8x24x1xf32> to vector<8x24x24xf32>
    %81 = arith.subf %77, %80 : vector<8x24x24xf32>
    %82 = math.exp %81 : vector<8x24x24xf32>
    %cst_20 = arith.constant dense<0.000000e+00> : vector<8x24xf32>
    %83 = vector.multi_reduction <add>, %82, %cst_20 [2] : vector<8x24x24xf32> to vector<8x24xf32>
    %84 = vector.shape_cast %83 : vector<8x24xf32> to vector<8x24x1xf32>
    %85 = tpu.reciprocal %84 {approx = true} : vector<8x24x1xf32> -> vector<8x24x1xf32>
    %86 = vector.broadcast %85 : vector<8x24x1xf32> to vector<8x24x24xf32>
    %87 = arith.mulf %82, %86 : vector<8x24x24xf32>
    %88 = arith.truncf %87 : vector<8x24x24xf32> to vector<8x24x24xbf16>
    "tpu.trace_start"() <{level = 10 : i32, message = "hqk,hkd->hqd"}> : () -> ()
    %cst_21 = arith.constant dense<0.000000e+00> : vector<8x24x32xf32>
    %89 = tpu.matmul %88, %67, %cst_21 {dimension_numbers = #tpu.dot_dimension_numbers<[2], [1], [1], [2], [0, 0, 0, 1, 1, 2], [0], [0]>} : vector<8x24x24xbf16>, vector<8x24x32xbf16>, vector<8x24x32xf32> -> vector<8x24x32xf32>
    "tpu.trace_stop"() : () -> ()
    %90 = vector.shape_cast %89 : vector<8x24x32xf32> to vector<4x2x24x32xf32>
    %91 = vector.extract_strided_slice %90 {offsets = [0, 0, 0, 0], sizes = [1, 2, 24, 32], strides = [1, 1, 1, 1]} : vector<4x2x24x32xf32> to vector<1x2x24x32xf32>
    %92 = vector.shape_cast %91 : vector<1x2x24x32xf32> to vector<2x24x32xf32>
    %93 = vector.extract_strided_slice %90 {offsets = [1, 0, 0, 0], sizes = [1, 2, 24, 32], strides = [1, 1, 1, 1]} : vector<4x2x24x32xf32> to vector<1x2x24x32xf32>
    %94 = vector.shape_cast %93 : vector<1x2x24x32xf32> to vector<2x24x32xf32>
    %95 = vector.extract_strided_slice %90 {offsets = [2, 0, 0, 0], sizes = [1, 2, 24, 32], strides = [1, 1, 1, 1]} : vector<4x2x24x32xf32> to vector<1x2x24x32xf32>
    %96 = vector.shape_cast %95 : vector<1x2x24x32xf32> to vector<2x24x32xf32>
    %97 = vector.extract_strided_slice %90 {offsets = [3, 0, 0, 0], sizes = [1, 2, 24, 32], strides = [1, 1, 1, 1]} : vector<4x2x24x32xf32> to vector<1x2x24x32xf32>
    %98 = vector.shape_cast %97 : vector<1x2x24x32xf32> to vector<2x24x32xf32>
    %99 = tpu.concatenate %92, %94, %96, %98 in 2 : vector<2x24x32xf32>, vector<2x24x32xf32>, vector<2x24x32xf32>, vector<2x24x32xf32> -> vector<2x24x128xf32>
    %100 = vector.shape_cast %99 : vector<2x24x128xf32> to vector<48x128xf32>
    %101 = arith.truncf %100 : vector<48x128xf32> to vector<48x128xbf16>
    %c0_22 = arith.constant 0 : index
    %c0_23 = arith.constant 0 : index
    %c0_24 = arith.constant 0 : index
    %102 = vector.load %arg8[%c0_22, %c0_23, %c0_24] : memref<1x128x128xbf16, #tpu.memory_space<vmem>>, vector<1x128x128xbf16>
    %103 = vector.shape_cast %102 : vector<1x128x128xbf16> to vector<128x128xbf16>
    %cst_25 = arith.constant dense<0.000000e+00> : vector<48x128xf32>
    %104 = tpu.matmul %101, %103, %cst_25 {dimension_numbers = #tpu.dot_dimension_numbers<[1], [0], [0], [1], [0, 0, 1, 1], [], []>} : vector<48x128xbf16>, vector<128x128xbf16>, vector<48x128xf32> -> vector<48x128xf32>
    %105 = arith.addf %3, %104 : vector<48x128xf32>
    %c0_26 = arith.constant 0 : index
    %c0_27 = arith.constant 0 : index
    %c0_28 = arith.constant 0 : index
    %106 = vector.load %arg9[%c0_26, %c0_27, %c0_28] : memref<1x1x128xf32, #tpu.memory_space<vmem>>, vector<1x1x128xf32>
    %107 = vector.shape_cast %106 : vector<1x1x128xf32> to vector<1x128xf32>
    %108 = vector.broadcast %107 : vector<1x128xf32> to vector<48x128xf32>
    %109 = arith.addf %105, %108 : vector<48x128xf32>
    %c0_29 = arith.constant 0 : index
    %c0_30 = arith.constant 0 : index
    %c0_31 = arith.constant 0 : index
    %110 = vector.load %arg10[%c0_29, %c0_30, %c0_31] : memref<1x1x128xf32, #tpu.memory_space<vmem>>, vector<1x1x128xf32>
    %111 = vector.shape_cast %110 : vector<1x1x128xf32> to vector<1x128xf32>
    %c0_32 = arith.constant 0 : index
    %c0_33 = arith.constant 0 : index
    %c0_34 = arith.constant 0 : index
    %112 = vector.load %arg11[%c0_32, %c0_33, %c0_34] : memref<1x1x128xf32, #tpu.memory_space<vmem>>, vector<1x1x128xf32>
    %113 = vector.shape_cast %112 : vector<1x1x128xf32> to vector<1x128xf32>
    %cst_35 = arith.constant dense<0.000000e+00> : vector<48xf32>
    %114 = vector.multi_reduction <add>, %109, %cst_35 [1] : vector<48x128xf32> to vector<48xf32>
    %115 = vector.shape_cast %114 : vector<48xf32> to vector<48x1xf32>
    %cst_36 = arith.constant 1.280000e+02 : f32
    %116 = vector.broadcast %cst_36 : f32 to vector<48x1xf32>
    %117 = arith.divf %115, %116 : vector<48x1xf32>
    %118 = vector.broadcast %117 : vector<48x1xf32> to vector<48x128xf32>
    %119 = arith.subf %109, %118 : vector<48x128xf32>
    %120 = arith.mulf %119, %119 : vector<48x128xf32>
    %cst_37 = arith.constant dense<0.000000e+00> : vector<48xf32>
    %121 = vector.multi_reduction <add>, %120, %cst_37 [1] : vector<48x128xf32> to vector<48xf32>
    %122 = vector.shape_cast %121 : vector<48xf32> to vector<48x1xf32>
    %cst_38 = arith.constant 1.280000e+02 : f32
    %123 = vector.broadcast %cst_38 : f32 to vector<48x1xf32>
    %124 = arith.divf %122, %123 : vector<48x1xf32>
    %125 = vector.broadcast %117 : vector<48x1xf32> to vector<48x128xf32>
    %126 = arith.subf %109, %125 : vector<48x128xf32>
    %cst_39 = arith.constant 9.99999974E-6 : f32
    %127 = vector.broadcast %cst_39 : f32 to vector<48x1xf32>
    %128 = arith.addf %124, %127 : vector<48x1xf32>
    %129 = math.rsqrt %128 : vector<48x1xf32>
    %130 = vector.broadcast %129 : vector<48x1xf32> to vector<48x128xf32>
    %131 = arith.mulf %126, %130 : vector<48x128xf32>
    %132 = vector.broadcast %111 : vector<1x128xf32> to vector<48x128xf32>
    %133 = arith.mulf %131, %132 : vector<48x128xf32>
    %134 = vector.broadcast %113 : vector<1x128xf32> to vector<48x128xf32>
    %135 = arith.addf %133, %134 : vector<48x128xf32>
    %136 = arith.truncf %135 : vector<48x128xf32> to vector<48x128xbf16>
    %c0_40 = arith.constant 0 : index
    %c0_41 = arith.constant 0 : index
    %c0_42 = arith.constant 0 : index
    %137 = vector.load %arg12[%c0_40, %c0_41, %c0_42] : memref<1x128x256xbf16, #tpu.memory_space<vmem>>, vector<1x128x256xbf16>
    %138 = vector.shape_cast %137 : vector<1x128x256xbf16> to vector<128x256xbf16>
    %cst_43 = arith.constant dense<0.000000e+00> : vector<48x256xf32>
    %139 = tpu.matmul %136, %138, %cst_43 {dimension_numbers = #tpu.dot_dimension_numbers<[1], [0], [0], [1], [0, 0, 1, 1], [], []>} : vector<48x128xbf16>, vector<128x256xbf16>, vector<48x256xf32> -> vector<48x256xf32>
    %c0_44 = arith.constant 0 : index
    %c0_45 = arith.constant 0 : index
    %c0_46 = arith.constant 0 : index
    %140 = vector.load %arg13[%c0_44, %c0_45, %c0_46] : memref<1x1x256xf32, #tpu.memory_space<vmem>>, vector<1x1x256xf32>
    %141 = vector.shape_cast %140 : vector<1x1x256xf32> to vector<1x256xf32>
    %142 = vector.broadcast %141 : vector<1x256xf32> to vector<48x256xf32>
    %143 = arith.addf %139, %142 : vector<48x256xf32>
    %144 = arith.mulf %143, %143 : vector<48x256xf32>
    %145 = arith.mulf %143, %144 : vector<48x256xf32>
    %cst_47 = arith.constant 4.471500e-02 : f32
    %146 = vector.broadcast %cst_47 : f32 to vector<48x256xf32>
    %147 = arith.mulf %146, %145 : vector<48x256xf32>
    %148 = arith.addf %143, %147 : vector<48x256xf32>
    %cst_48 = arith.constant 0.797884583 : f32
    %149 = vector.broadcast %cst_48 : f32 to vector<48x256xf32>
    %150 = arith.mulf %149, %148 : vector<48x256xf32>
    %151 = math.tanh %150 : vector<48x256xf32>
    %cst_49 = arith.constant 1.000000e+00 : f32
    %152 = vector.broadcast %cst_49 : f32 to vector<48x256xf32>
    %153 = arith.addf %152, %151 : vector<48x256xf32>
    %cst_50 = arith.constant 5.000000e-01 : f32
    %154 = vector.broadcast %cst_50 : f32 to vector<48x256xf32>
    %155 = arith.mulf %154, %153 : vector<48x256xf32>
    %156 = arith.mulf %143, %155 : vector<48x256xf32>
    %157 = arith.truncf %156 : vector<48x256xf32> to vector<48x256xbf16>
    %c0_51 = arith.constant 0 : index
    %c0_52 = arith.constant 0 : index
    %c0_53 = arith.constant 0 : index
    %158 = vector.load %arg14[%c0_51, %c0_52, %c0_53] : memref<1x256x128xbf16, #tpu.memory_space<vmem>>, vector<1x256x128xbf16>
    %159 = vector.shape_cast %158 : vector<1x256x128xbf16> to vector<256x128xbf16>
    %cst_54 = arith.constant dense<0.000000e+00> : vector<48x128xf32>
    %160 = tpu.matmul %157, %159, %cst_54 {dimension_numbers = #tpu.dot_dimension_numbers<[1], [0], [0], [1], [0, 0, 1, 1], [], []>} : vector<48x256xbf16>, vector<256x128xbf16>, vector<48x128xf32> -> vector<48x128xf32>
    %c0_55 = arith.constant 0 : index
    %c0_56 = arith.constant 0 : index
    %c0_57 = arith.constant 0 : index
    %161 = vector.load %arg15[%c0_55, %c0_56, %c0_57] : memref<1x1x128xf32, #tpu.memory_space<vmem>>, vector<1x1x128xf32>
    %162 = vector.shape_cast %161 : vector<1x1x128xf32> to vector<1x128xf32>
    %163 = vector.broadcast %162 : vector<1x128xf32> to vector<48x128xf32>
    %164 = arith.addf %160, %163 : vector<48x128xf32>
    %165 = arith.addf %109, %164 : vector<48x128xf32>
    %c0_58 = arith.constant 0 : index
    %c0_59 = arith.constant 0 : index
    %166 = vector.load %arg21[%c0_58, %c0_59] : memref<48x128xf32, #tpu.memory_space<vmem>>, vector<48x128xf32>
    tpu.vector_store %arg21[%c0_58, %c0_59], %165 {strides = array<i32>} : memref<48x128xf32, #tpu.memory_space<vmem>>, vector<48x128xf32>,
    %c1_i32 = arith.constant 1 : i32
    %167 = arith.cmpi eq, %arg1, %c1_i32 : i32
    %168 = arith.extui %167 : i1 to i32
    %c0_i32_60 = arith.constant 0 : i32
    %169 = arith.cmpi ne, %168, %c0_i32_60 : i32
    scf.if %169 {
      %170 = vector.extract_strided_slice %165 {offsets = [0, 0], sizes = [1, 128], strides = [1, 1]} : vector<48x128xf32> to vector<1x128xf32>
      %171 = vector.extract_strided_slice %165 {offsets = [24, 0], sizes = [1, 128], strides = [1, 1]} : vector<48x128xf32> to vector<1x128xf32>
      %172 = tpu.concatenate %170, %171 in 0 : vector<1x128xf32>, vector<1x128xf32> -> vector<2x128xf32>
      %c0_61 = arith.constant 0 : index
      %c0_62 = arith.constant 0 : index
      %173 = vector.load %arg16[%c0_61, %c0_62] : memref<1x128xf32, #tpu.memory_space<vmem>>, vector<1x128xf32>
      %c0_63 = arith.constant 0 : index
      %c0_64 = arith.constant 0 : index
      %174 = vector.load %arg17[%c0_63, %c0_64] : memref<1x128xf32, #tpu.memory_space<vmem>>, vector<1x128xf32>
      %cst_65 = arith.constant dense<0.000000e+00> : vector<2xf32>
      %175 = vector.multi_reduction <add>, %172, %cst_65 [1] : vector<2x128xf32> to vector<2xf32>
      %176 = vector.shape_cast %175 : vector<2xf32> to vector<2x1xf32>
      %cst_66 = arith.constant 1.280000e+02 : f32
      %177 = vector.broadcast %cst_66 : f32 to vector<2x1xf32>
      %178 = arith.divf %176, %177 : vector<2x1xf32>
      %179 = vector.broadcast %178 : vector<2x1xf32> to vector<2x128xf32>
      %180 = arith.subf %172, %179 : vector<2x128xf32>
      %181 = arith.mulf %180, %180 : vector<2x128xf32>
      %cst_67 = arith.constant dense<0.000000e+00> : vector<2xf32>
      %182 = vector.multi_reduction <add>, %181, %cst_67 [1] : vector<2x128xf32> to vector<2xf32>
      %183 = vector.shape_cast %182 : vector<2xf32> to vector<2x1xf32>
      %cst_68 = arith.constant 1.280000e+02 : f32
      %184 = vector.broadcast %cst_68 : f32 to vector<2x1xf32>
      %185 = arith.divf %183, %184 : vector<2x1xf32>
      %186 = vector.broadcast %178 : vector<2x1xf32> to vector<2x128xf32>
      %187 = arith.subf %172, %186 : vector<2x128xf32>
      %cst_69 = arith.constant 9.99999974E-6 : f32
      %188 = vector.broadcast %cst_69 : f32 to vector<2x1xf32>
      %189 = arith.addf %185, %188 : vector<2x1xf32>
      %190 = math.rsqrt %189 : vector<2x1xf32>
      %191 = vector.broadcast %190 : vector<2x1xf32> to vector<2x128xf32>
      %192 = arith.mulf %187, %191 : vector<2x128xf32>
      %193 = vector.broadcast %173 : vector<1x128xf32> to vector<2x128xf32>
      %194 = arith.mulf %192, %193 : vector<2x128xf32>
      %195 = vector.broadcast %174 : vector<1x128xf32> to vector<2x128xf32>
      %196 = arith.addf %194, %195 : vector<2x128xf32>
      %197 = arith.truncf %196 : vector<2x128xf32> to vector<2x128xbf16>
      %c0_70 = arith.constant 0 : index
      %c0_71 = arith.constant 0 : index
      %198 = vector.load %arg18[%c0_70, %c0_71] : memref<128x2xbf16, #tpu.memory_space<vmem>>, vector<128x2xbf16>
      %cst_72 = arith.constant dense<0.000000e+00> : vector<2x2xf32>
      %199 = tpu.matmul %197, %198, %cst_72 {dimension_numbers = #tpu.dot_dimension_numbers<[1], [0], [0], [1], [0, 0, 1, 1], [], []>} : vector<2x128xbf16>, vector<128x2xbf16>, vector<2x2xf32> -> vector<2x2xf32>
      %c0_73 = arith.constant 0 : index
      %c0_74 = arith.constant 0 : index
      %200 = vector.load %arg19[%c0_73, %c0_74] : memref<1x2xf32, #tpu.memory_space<vmem>>, vector<1x2xf32>
      %201 = vector.broadcast %200 : vector<1x2xf32> to vector<2x2xf32>
      %202 = arith.addf %199, %201 : vector<2x2xf32>
      %c0_75 = arith.constant 0 : index
      %c0_76 = arith.constant 0 : index
      %c0_77 = arith.constant 0 : index
      %203 = vector.load %arg20[%c0_75, %c0_76, %c0_77] : memref<1x2x2xf32, #tpu.memory_space<vmem>>, vector<1x2x2xf32>
      %204 = vector.shape_cast %203 : vector<1x2x2xf32> to vector<2x2xf32>
      %205 = vector.shape_cast %202 : vector<2x2xf32> to vector<1x2x2xf32>
      tpu.vector_store %arg20[%c0_75, %c0_76, %c0_77], %205 {strides = array<i32>} : memref<1x2x2xf32, #tpu.memory_space<vmem>>, vector<1x2x2xf32>,
    } else {
    }
    return
  }
  func.func @transform_0(%arg0: i32, %arg1: i32) -> (i32, i32) {
    %c0_i32 = arith.constant 0 : i32
    %c0_i32_0 = arith.constant 0 : i32
    return %arg0, %c0_i32 : i32, i32
  }
  func.func @transform_1(%arg0: i32, %arg1: i32) -> (i32, i32) {
    %c0_i32 = arith.constant 0 : i32
    %c0_i32_0 = arith.constant 0 : i32
    %c0_i32_1 = arith.constant 0 : i32
    return %c0_i32, %c0_i32_0 : i32, i32
  }
  func.func @transform_2(%arg0: i32, %arg1: i32) -> (i32, i32) {
    %c0_i32 = arith.constant 0 : i32
    %c0_i32_0 = arith.constant 0 : i32
    %c0_i32_1 = arith.constant 0 : i32
    return %c0_i32, %c0_i32_0 : i32, i32
  }
  func.func @transform_3(%arg0: i32, %arg1: i32) -> (i32, i32, i32) {
    %c0_i32 = arith.constant 0 : i32
    %c0_i32_0 = arith.constant 0 : i32
    %c0_i32_1 = arith.constant 0 : i32
    return %arg1, %c0_i32, %c0_i32_0 : i32, i32, i32
  }
  func.func @transform_4(%arg0: i32, %arg1: i32) -> (i32, i32, i32) {
    %c0_i32 = arith.constant 0 : i32
    %c0_i32_0 = arith.constant 0 : i32
    %c0_i32_1 = arith.constant 0 : i32
    return %arg1, %c0_i32, %c0_i32_0 : i32, i32, i32
  }
  func.func @transform_5(%arg0: i32, %arg1: i32) -> (i32, i32, i32) {
    %c0_i32 = arith.constant 0 : i32
    %c0_i32_0 = arith.constant 0 : i32
    %c0_i32_1 = arith.constant 0 : i32
    return %arg1, %c0_i32, %c0_i32_0 : i32, i32, i32
  }
  func.func @transform_6(%arg0: i32, %arg1: i32) -> (i32, i32, i32) {
    %c0_i32 = arith.constant 0 : i32
    %c0_i32_0 = arith.constant 0 : i32
    %c0_i32_1 = arith.constant 0 : i32
    return %arg1, %c0_i32, %c0_i32_0 : i32, i32, i32
  }
  func.func @transform_7(%arg0: i32, %arg1: i32) -> (i32, i32, i32) {
    %c0_i32 = arith.constant 0 : i32
    %c0_i32_0 = arith.constant 0 : i32
    %c0_i32_1 = arith.constant 0 : i32
    return %arg1, %c0_i32, %c0_i32_0 : i32, i32, i32
  }
  func.func @transform_8(%arg0: i32, %arg1: i32) -> (i32, i32, i32) {
    %c0_i32 = arith.constant 0 : i32
    %c0_i32_0 = arith.constant 0 : i32
    %c0_i32_1 = arith.constant 0 : i32
    return %arg1, %c0_i32, %c0_i32_0 : i32, i32, i32
  }
  func.func @transform_9(%arg0: i32, %arg1: i32) -> (i32, i32, i32) {
    %c0_i32 = arith.constant 0 : i32
    %c0_i32_0 = arith.constant 0 : i32
    %c0_i32_1 = arith.constant 0 : i32
    return %arg1, %c0_i32, %c0_i32_0 : i32, i32, i32
  }
  func.func @transform_10(%arg0: i32, %arg1: i32) -> (i32, i32, i32) {
    %c0_i32 = arith.constant 0 : i32
    %c0_i32_0 = arith.constant 0 : i32
    %c0_i32_1 = arith.constant 0 : i32
    return %arg1, %c0_i32, %c0_i32_0 : i32, i32, i32
  }
  func.func @transform_11(%arg0: i32, %arg1: i32) -> (i32, i32, i32) {
    %c0_i32 = arith.constant 0 : i32
    %c0_i32_0 = arith.constant 0 : i32
    %c0_i32_1 = arith.constant 0 : i32
    return %arg1, %c0_i32, %c0_i32_0 : i32, i32, i32
  }
  func.func @transform_12(%arg0: i32, %arg1: i32) -> (i32, i32, i32) {
    %c0_i32 = arith.constant 0 : i32
    %c0_i32_0 = arith.constant 0 : i32
    %c0_i32_1 = arith.constant 0 : i32
    return %arg1, %c0_i32, %c0_i32_0 : i32, i32, i32
  }
  func.func @transform_13(%arg0: i32, %arg1: i32) -> (i32, i32, i32) {
    %c0_i32 = arith.constant 0 : i32
    %c0_i32_0 = arith.constant 0 : i32
    %c0_i32_1 = arith.constant 0 : i32
    return %arg1, %c0_i32, %c0_i32_0 : i32, i32, i32
  }
  func.func @transform_14(%arg0: i32, %arg1: i32) -> (i32, i32) {
    %c0_i32 = arith.constant 0 : i32
    %c0_i32_0 = arith.constant 0 : i32
    %c0_i32_1 = arith.constant 0 : i32
    return %c0_i32, %c0_i32_0 : i32, i32
  }
  func.func @transform_15(%arg0: i32, %arg1: i32) -> (i32, i32) {
    %c0_i32 = arith.constant 0 : i32
    %c0_i32_0 = arith.constant 0 : i32
    %c0_i32_1 = arith.constant 0 : i32
    return %c0_i32, %c0_i32_0 : i32, i32
  }
  func.func @transform_16(%arg0: i32, %arg1: i32) -> (i32, i32) {
    %c0_i32 = arith.constant 0 : i32
    %c0_i32_0 = arith.constant 0 : i32
    %c0_i32_1 = arith.constant 0 : i32
    return %c0_i32, %c0_i32_0 : i32, i32
  }
  func.func @transform_17(%arg0: i32, %arg1: i32) -> (i32, i32) {
    %c0_i32 = arith.constant 0 : i32
    %c0_i32_0 = arith.constant 0 : i32
    %c0_i32_1 = arith.constant 0 : i32
    return %c0_i32, %c0_i32_0 : i32, i32
  }
  func.func @transform_18(%arg0: i32, %arg1: i32) -> (i32, i32, i32) {
    %c0_i32 = arith.constant 0 : i32
    %c0_i32_0 = arith.constant 0 : i32
    %c0_i32_1 = arith.constant 0 : i32
    return %arg0, %c0_i32, %c0_i32_0 : i32, i32, i32
  }
}

</mosaic_0001>

<llo_original>
// kernel: vit_forward.1
$region0: #{vit_forward.1}
  #allocation0 [shape = 'u32[]', space=smem, size = 0x4, offset = 0x4, fixed_abs, tag = 'smem constant byte address 0x4 - core index']
  #allocation1 [shape = 'u32[72,128]{1,0:T(1,128)}', space=vmem, size = 0x9000, scoped, tag = 'internal scratch']
  #allocation2 [shape = 'f32[48,128]{1,0:T(8,128)}', space=vmem, size = 0x6000, scoped, tag = 'scratch operand']
  %s0 = inlined_call_operand.vmem [shape: f32[96,16], index: 0, kind: input, shape index: {}]
  %s1 = inlined_call_operand.vmem [shape: bf16[16,128], index: 1, kind: input, shape index: {}]
  %s2 = inlined_call_operand.vmem [shape: f32[24,128], index: 2, kind: input, shape index: {}]
  %s3 = inlined_call_operand.vmem [shape: f32[2,1,128], index: 3, kind: input, shape index: {}]
  %s4 = inlined_call_operand.vmem [shape: f32[2,1,128], index: 4, kind: input, shape index: {}]
  %s5 = inlined_call_operand.vmem [shape: bf16[2,128,384], index: 5, kind: input, shape index: {}]
  %s6 = inlined_call_operand.vmem [shape: bf16[2,128,128], index: 6, kind: input, shape index: {}]
  %s7 = inlined_call_operand.vmem [shape: f32[2,1,128], index: 7, kind: input, shape index: {}]
  %s8 = inlined_call_operand.vmem [shape: f32[2,1,128], index: 8, kind: input, shape index: {}]
  %s9 = inlined_call_operand.vmem [shape: f32[2,1,128], index: 9, kind: input, shape index: {}]
  %s10 = inlined_call_operand.vmem [shape: bf16[2,128,256], index: 10, kind: input, shape index: {}]
  %s11 = inlined_call_operand.vmem [shape: f32[2,1,256], index: 11, kind: input, shape index: {}]
  %s12 = inlined_call_operand.vmem [shape: bf16[2,256,128], index: 12, kind: input, shape index: {}]
  %s13 = inlined_call_operand.vmem [shape: f32[2,1,128], index: 13, kind: input, shape index: {}]
  %s14 = inlined_call_operand.vmem [shape: f32[1,128], index: 14, kind: input, shape index: {}]
  %s15 = inlined_call_operand.vmem [shape: f32[1,128], index: 15, kind: input, shape index: {}]
  %s16 = inlined_call_operand.vmem [shape: bf16[128,2], index: 16, kind: input, shape index: {}]
  %s17 = inlined_call_operand.vmem [shape: f32[1,2], index: 17, kind: input, shape index: {}]
  %s18 = inlined_call_operand.vmem [shape: f32[2,2,2], index: 18, kind: output, shape index: {}]
  %s19 = sld [smem:[#allocation0]]
  $region113: #{vit_forward.1} parent=0
    _
  %s21 = ssub.s32 1, %s19
  %s22 = scalar_select 0, %s21, %s19
  loop: start=0, step=1, limit=6
  $region2: #{vit_forward.1} parent=0 // loop_pre_header
    _
  $region3: #{vit_forward.1} parent=0 // loop_header
    %s24 = sphi 0, %s28
    %p25 = scmp.ge.s32.totalorder %s24, 6
    %s31 = sphi 0, %s43
    %s32 = sphi 0, %s39
    %s33 = sphi 0, %s31
    %s34 = sphi 0, %s32
    %s35 = sphi 0, %s33
    %s36 = sphi 0, %s34
    %s46 = sphi 0, %s48
    %s49 = sphi 0, %s46
    %s50 = sphi 0, %s49
    %s66 = sphi 0, %s50
    %s70 = sphi 0, %s70
    %s72 = sphi 0, %s70
    %s73 = sphi 0, %s72
    %s87 = sphi 0, %s73
    %s91 = sphi 0, %s91
    %s93 = sphi 0, %s91
    %s94 = sphi 0, %s93
    %s108 = sphi 0, %s94
    %s114 = sphi 0, %s116
    %s117 = sphi 0, %s114
    %s118 = sphi 0, %s117
    %s134 = sphi 0, %s118
    %s140 = sphi 0, %s142
    %s143 = sphi 0, %s140
    %s144 = sphi 0, %s143
    %s160 = sphi 0, %s144
    %s166 = sphi 0, %s168
    %s169 = sphi 0, %s166
    %s170 = sphi 0, %s169
    %s186 = sphi 0, %s170
    %s192 = sphi 0, %s194
    %s195 = sphi 0, %s192
    %s196 = sphi 0, %s195
    %s212 = sphi 0, %s196
    %s218 = sphi 0, %s220
    %s221 = sphi 0, %s218
    %s222 = sphi 0, %s221
    %s238 = sphi 0, %s222
    %s244 = sphi 0, %s246
    %s247 = sphi 0, %s244
    %s248 = sphi 0, %s247
    %s264 = sphi 0, %s248
    %s270 = sphi 0, %s272
    %s273 = sphi 0, %s270
    %s274 = sphi 0, %s273
    %s290 = sphi 0, %s274
    %s296 = sphi 0, %s298
    %s299 = sphi 0, %s296
    %s300 = sphi 0, %s299
    %s316 = sphi 0, %s300
    %s322 = sphi 0, %s324
    %s325 = sphi 0, %s322
    %s326 = sphi 0, %s325
    %s342 = sphi 0, %s326
    %s348 = sphi 0, %s350
    %s351 = sphi 0, %s348
    %s352 = sphi 0, %s351
    %s368 = sphi 0, %s352
    %s374 = sphi 0, %s376
    %s377 = sphi 0, %s374
    %s378 = sphi 0, %s377
    %s394 = sphi 0, %s378
    %s398 = sphi 0, %s398
    %s400 = sphi 0, %s398
    %s401 = sphi 0, %s400
    %s415 = sphi 0, %s401
    %s419 = sphi 0, %s419
    %s421 = sphi 0, %s419
    %s422 = sphi 0, %s421
    %s436 = sphi 0, %s422
    %s440 = sphi 0, %s440
    %s442 = sphi 0, %s440
    %s443 = sphi 0, %s442
    %s457 = sphi 0, %s443
    %s461 = sphi 0, %s461
    %s463 = sphi 0, %s461
    %s464 = sphi 0, %s463
    %s478 = sphi 0, %s464
    %s484 = sphi 0, %s486
    %s487 = sphi 0, %s484
    %s488 = sphi 0, %s487
    %s504 = sphi 0, %s488
  $region4: #{vit_forward.1} parent=0 // loop_header_branch
    %27 = sbr.rel (%p25) target = $region8
  $region5: #{vit_forward.1} parent=0 // loop_body
    %s29 = ssub.s32 %s24, 1
    %s30 = ssub.s32 %s24, 2
    %s37 = sadd.s32 1, %s32
    %p38 = scmp.ge.s32.totalorder %s37, 2
    %s39 = scalar_select %p38, 0, %s37
    %s40 = sadd.s32 1, %s31
    %s41 = scalar_select %p38, %s40, %s31
    %p42 = scmp.ge.s32.totalorder %s41, 2
    %s43 = scalar_select %p42, 0, %s41
    %s44 = ssub.s32 %s31, %s43
    %p45 = scmp.eq.s32.totalorder %s44, 0
    %s47 = sadd.s32 %s46, 1
    %s48 = scalar_select %p45, %s46, %s47
    %p51 = pneg %p45
    %p52 = scmp.eq.s32.totalorder %s24, 3
    %p53 = por %p51, %p52
    %p54 = scmp.ne.s32.totalorder %s46, %s49
    %p55 = scmp.eq.s32.totalorder %s24, 0
    %p56 = por %p54, %p55
    %p57 = scmp.ne.s32.totalorder %s46, %s49
    %p58 = scmp.eq.s32.totalorder %s29, 3
    %p59 = por %p57, %p58
    %p60 = scmp.ne.s32.totalorder %s49, %s50
    %p61 = scmp.eq.s32.totalorder %s29, 0
    %p62 = por %p60, %p61
    %p63 = scmp.ne.s32.totalorder %s49, %s50
    %p64 = scmp.eq.s32.totalorder %s30, 3
    %p65 = por %p63, %p64
    %p67 = scmp.ne.s32.totalorder %s50, %s66
    %p68 = scmp.eq.s32.totalorder %s30, 0
    %p69 = por %p67, %p68
    %s71 = sadd.s32 %s70, 1
    %p74 = scmp.eq.s32.totalorder %s24, 3
    %p75 = scmp.ne.s32.totalorder %s70, %s72
    %p76 = scmp.eq.s32.totalorder %s24, 0
    %p77 = por %p75, %p76
    %p78 = scmp.ne.s32.totalorder %s70, %s72
    %p79 = scmp.eq.s32.totalorder %s29, 3
    %p80 = por %p78, %p79
    %p81 = scmp.ne.s32.totalorder %s72, %s73
    %p82 = scmp.eq.s32.totalorder %s29, 0
    %p83 = por %p81, %p82
    %p84 = scmp.ne.s32.totalorder %s72, %s73
    %p85 = scmp.eq.s32.totalorder %s30, 3
    %p86 = por %p84, %p85
    %p88 = scmp.ne.s32.totalorder %s73, %s87
    %p89 = scmp.eq.s32.totalorder %s30, 0
    %p90 = por %p88, %p89
    %s92 = sadd.s32 %s91, 1
    %p95 = scmp.eq.s32.totalorder %s24, 3
    %p96 = scmp.ne.s32.totalorder %s91, %s93
    %p97 = scmp.eq.s32.totalorder %s24, 0
    %p98 = por %p96, %p97
    %p99 = scmp.ne.s32.totalorder %s91, %s93
    %p100 = scmp.eq.s32.totalorder %s29, 3
    %p101 = por %p99, %p100
    %p102 = scmp.ne.s32.totalorder %s93, %s94
    %p103 = scmp.eq.s32.totalorder %s29, 0
    %p104 = por %p102, %p103
    %p105 = scmp.ne.s32.totalorder %s93, %s94
    %p106 = scmp.eq.s32.totalorder %s30, 3
    %p107 = por %p105, %p106
    %p109 = scmp.ne.s32.totalorder %s94, %s108
    %p110 = scmp.eq.s32.totalorder %s30, 0
    %p111 = por %p109, %p110
    %s112 = ssub.s32 %s32, %s39
    %p113 = scmp.eq.s32.totalorder %s112, 0
    %s115 = sadd.s32 %s114, 1
    %s116 = scalar_select %p113, %s114, %s115
    %p119 = pneg %p113
    %p120 = scmp.eq.s32.totalorder %s24, 3
    %p121 = por %p119, %p120
    %p122 = scmp.ne.s32.totalorder %s114, %s117
    %p123 = scmp.eq.s32.totalorder %s24, 0
    %p124 = por %p122, %p123
    %p125 = scmp.ne.s32.totalorder %s114, %s117
    %p126 = scmp.eq.s32.totalorder %s29, 3
    %p127 = por %p125, %p126
    %p128 = scmp.ne.s32.totalorder %s117, %s118
    %p129 = scmp.eq.s32.totalorder %s29, 0
    %p130 = por %p128, %p129
    %p131 = scmp.ne.s32.totalorder %s117, %s118
    %p132 = scmp.eq.s32.totalorder %s30, 3
    %p133 = por %p131, %p132
    %p135 = scmp.ne.s32.totalorder %s118, %s134
    %p136 = scmp.eq.s32.totalorder %s30, 0
    %p137 = por %p135, %p136
    %s138 = ssub.s32 %s32, %s39
    %p139 = scmp.eq.s32.totalorder %s138, 0
    %s141 = sadd.s32 %s140, 1
    %s142 = scalar_select %p139, %s140, %s141
    %p145 = pneg %p139
    %p146 = scmp.eq.s32.totalorder %s24, 3
    %p147 = por %p145, %p146
    %p148 = scmp.ne.s32.totalorder %s140, %s143
    %p149 = scmp.eq.s32.totalorder %s24, 0
    %p150 = por %p148, %p149
    %p151 = scmp.ne.s32.totalorder %s140, %s143
    %p152 = scmp.eq.s32.totalorder %s29, 3
    %p153 = por %p151, %p152
    %p154 = scmp.ne.s32.totalorder %s143, %s144
    %p155 = scmp.eq.s32.totalorder %s29, 0
    %p156 = por %p154, %p155
    %p157 = scmp.ne.s32.totalorder %s143, %s144
    %p158 = scmp.eq.s32.totalorder %s30, 3
    %p159 = por %p157, %p158
    %p161 = scmp.ne.s32.totalorder %s144, %s160
    %p162 = scmp.eq.s32.totalorder %s30, 0
    %p163 = por %p161, %p162
    %s164 = ssub.s32 %s32, %s39
    %p165 = scmp.eq.s32.totalorder %s164, 0
    %s167 = sadd.s32 %s166, 1
    %s168 = scalar_select %p165, %s166, %s167
    %p171 = pneg %p165
    %p172 = scmp.eq.s32.totalorder %s24, 3
    %p173 = por %p171, %p172
    %p174 = scmp.ne.s32.totalorder %s166, %s169
    %p175 = scmp.eq.s32.totalorder %s24, 0
    %p176 = por %p174, %p175
    %p177 = scmp.ne.s32.totalorder %s166, %s169
    %p178 = scmp.eq.s32.totalorder %s29, 3
    %p179 = por %p177, %p178
    %p180 = scmp.ne.s32.totalorder %s169, %s170
    %p181 = scmp.eq.s32.totalorder %s29, 0
    %p182 = por %p180, %p181
    %p183 = scmp.ne.s32.totalorder %s169, %s170
    %p184 = scmp.eq.s32.totalorder %s30, 3
    %p185 = por %p183, %p184
    %p187 = scmp.ne.s32.totalorder %s170, %s186
    %p188 = scmp.eq.s32.totalorder %s30, 0
    %p189 = por %p187, %p188
    %s190 = ssub.s32 %s32, %s39
    %p191 = scmp.eq.s32.totalorder %s190, 0
    %s193 = sadd.s32 %s192, 1
    %s194 = scalar_select %p191, %s192, %s193
    %p197 = pneg %p191
    %p198 = scmp.eq.s32.totalorder %s24, 3
    %p199 = por %p197, %p198
    %p200 = scmp.ne.s32.totalorder %s192, %s195
    %p201 = scmp.eq.s32.totalorder %s24, 0
    %p202 = por %p200, %p201
    %p203 = scmp.ne.s32.totalorder %s192, %s195
    %p204 = scmp.eq.s32.totalorder %s29, 3
    %p205 = por %p203, %p204
    %p206 = scmp.ne.s32.totalorder %s195, %s196
    %p207 = scmp.eq.s32.totalorder %s29, 0
    %p208 = por %p206, %p207
    %p209 = scmp.ne.s32.totalorder %s195, %s196
    %p210 = scmp.eq.s32.totalorder %s30, 3
    %p211 = por %p209, %p210
    %p213 = scmp.ne.s32.totalorder %s196, %s212
    %p214 = scmp.eq.s32.totalorder %s30, 0
    %p215 = por %p213, %p214
    %s216 = ssub.s32 %s32, %s39
    %p217 = scmp.eq.s32.totalorder %s216, 0
    %s219 = sadd.s32 %s218, 1
    %s220 = scalar_select %p217, %s218, %s219
    %p223 = pneg %p217
    %p224 = scmp.eq.s32.totalorder %s24, 3
    %p225 = por %p223, %p224
    %p226 = scmp.ne.s32.totalorder %s218, %s221
    %p227 = scmp.eq.s32.totalorder %s24, 0
    %p228 = por %p226, %p227
    %p229 = scmp.ne.s32.totalorder %s218, %s221
    %p230 = scmp.eq.s32.totalorder %s29, 3
    %p231 = por %p229, %p230
    %p232 = scmp.ne.s32.totalorder %s221, %s222
    %p233 = scmp.eq.s32.totalorder %s29, 0
    %p234 = por %p232, %p233
    %p235 = scmp.ne.s32.totalorder %s221, %s222
    %p236 = scmp.eq.s32.totalorder %s30, 3
    %p237 = por %p235, %p236
    %p239 = scmp.ne.s32.totalorder %s222, %s238
    %p240 = scmp.eq.s32.totalorder %s30, 0
    %p241 = por %p239, %p240
    %s242 = ssub.s32 %s32, %s39
    %p243 = scmp.eq.s32.totalorder %s242, 0
    %s245 = sadd.s32 %s244, 1
    %s246 = scalar_select %p243, %s244, %s245
    %p249 = pneg %p243
    %p250 = scmp.eq.s32.totalorder %s24, 3
    %p251 = por %p249, %p250
    %p252 = scmp.ne.s32.totalorder %s244, %s247
    %p253 = scmp.eq.s32.totalorder %s24, 0
    %p254 = por %p252, %p253
    %p255 = scmp.ne.s32.totalorder %s244, %s247
    %p256 = scmp.eq.s32.totalorder %s29, 3
    %p257 = por %p255, %p256
    %p258 = scmp.ne.s32.totalorder %s247, %s248
    %p259 = scmp.eq.s32.totalorder %s29, 0
    %p260 = por %p258, %p259
    %p261 = scmp.ne.s32.totalorder %s247, %s248
    %p262 = scmp.eq.s32.totalorder %s30, 3
    %p263 = por %p261, %p262
    %p265 = scmp.ne.s32.totalorder %s248, %s264
    %p266 = scmp.eq.s32.totalorder %s30, 0
    %p267 = por %p265, %p266
    %s268 = ssub.s32 %s32, %s39
    %p269 = scmp.eq.s32.totalorder %s268, 0
    %s271 = sadd.s32 %s270, 1
    %s272 = scalar_select %p269, %s270, %s271
    %p275 = pneg %p269
    %p276 = scmp.eq.s32.totalorder %s24, 3
    %p277 = por %p275, %p276
    %p278 = scmp.ne.s32.totalorder %s270, %s273
    %p279 = scmp.eq.s32.totalorder %s24, 0
    %p280 = por %p278, %p279
    %p281 = scmp.ne.s32.totalorder %s270, %s273
    %p282 = scmp.eq.s32.totalorder %s29, 3
    %p283 = por %p281, %p282
    %p284 = scmp.ne.s32.totalorder %s273, %s274
    %p285 = scmp.eq.s32.totalorder %s29, 0
    %p286 = por %p284, %p285
    %p287 = scmp.ne.s32.totalorder %s273, %s274
    %p288 = scmp.eq.s32.totalorder %s30, 3
    %p289 = por %p287, %p288
    %p291 = scmp.ne.s32.totalorder %s274, %s290
    %p292 = scmp.eq.s32.totalorder %s30, 0
    %p293 = por %p291, %p292
    %s294 = ssub.s32 %s32, %s39
    %p295 = scmp.eq.s32.totalorder %s294, 0
    %s297 = sadd.s32 %s296, 1
    %s298 = scalar_select %p295, %s296, %s297
    %p301 = pneg %p295
    %p302 = scmp.eq.s32.totalorder %s24, 3
    %p303 = por %p301, %p302
    %p304 = scmp.ne.s32.totalorder %s296, %s299
    %p305 = scmp.eq.s32.totalorder %s24, 0
    %p306 = por %p304, %p305
    %p307 = scmp.ne.s32.totalorder %s296, %s299
    %p308 = scmp.eq.s32.totalorder %s29, 3
    %p309 = por %p307, %p308
    %p310 = scmp.ne.s32.totalorder %s299, %s300
    %p311 = scmp.eq.s32.totalorder %s29, 0
    %p312 = por %p310, %p311
    %p313 = scmp.ne.s32.totalorder %s299, %s300
    %p314 = scmp.eq.s32.totalorder %s30, 3
    %p315 = por %p313, %p314
    %p317 = scmp.ne.s32.totalorder %s300, %s316
    %p318 = scmp.eq.s32.totalorder %s30, 0
    %p319 = por %p317, %p318
    %s320 = ssub.s32 %s32, %s39
    %p321 = scmp.eq.s32.totalorder %s320, 0
    %s323 = sadd.s32 %s322, 1
    %s324 = scalar_select %p321, %s322, %s323
    %p327 = pneg %p321
    %p328 = scmp.eq.s32.totalorder %s24, 3
    %p329 = por %p327, %p328
    %p330 = scmp.ne.s32.totalorder %s322, %s325
    %p331 = scmp.eq.s32.totalorder %s24, 0
    %p332 = por %p330, %p331
    %p333 = scmp.ne.s32.totalorder %s322, %s325
    %p334 = scmp.eq.s32.totalorder %s29, 3
    %p335 = por %p333, %p334
    %p336 = scmp.ne.s32.totalorder %s325, %s326
    %p337 = scmp.eq.s32.totalorder %s29, 0
    %p338 = por %p336, %p337
    %p339 = scmp.ne.s32.totalorder %s325, %s326
    %p340 = scmp.eq.s32.totalorder %s30, 3
    %p341 = por %p339, %p340
    %p343 = scmp.ne.s32.totalorder %s326, %s342
    %p344 = scmp.eq.s32.totalorder %s30, 0
    %p345 = por %p343, %p344
    %s346 = ssub.s32 %s32, %s39
    %p347 = scmp.eq.s32.totalorder %s346, 0
    %s349 = sadd.s32 %s348, 1
    %s350 = scalar_select %p347, %s348, %s349
    %p353 = pneg %p347
    %p354 = scmp.eq.s32.totalorder %s24, 3
    %p355 = por %p353, %p354
    %p356 = scmp.ne.s32.totalorder %s348, %s351
    %p357 = scmp.eq.s32.totalorder %s24, 0
    %p358 = por %p356, %p357
    %p359 = scmp.ne.s32.totalorder %s348, %s351
    %p360 = scmp.eq.s32.totalorder %s29, 3
    %p361 = por %p359, %p360
    %p362 = scmp.ne.s32.totalorder %s351, %s352
    %p363 = scmp.eq.s32.totalorder %s29, 0
    %p364 = por %p362, %p363
    %p365 = scmp.ne.s32.totalorder %s351, %s352
    %p366 = scmp.eq.s32.totalorder %s30, 3
    %p367 = por %p365, %p366
    %p369 = scmp.ne.s32.totalorder %s352, %s368
    %p370 = scmp.eq.s32.totalorder %s30, 0
    %p371 = por %p369, %p370
    %s372 = ssub.s32 %s32, %s39
    %p373 = scmp.eq.s32.totalorder %s372, 0
    %s375 = sadd.s32 %s374, 1
    %s376 = scalar_select %p373, %s374, %s375
    %p379 = pneg %p373
    %p380 = scmp.eq.s32.totalorder %s24, 3
    %p381 = por %p379, %p380
    %p382 = scmp.ne.s32.totalorder %s374, %s377
    %p383 = scmp.eq.s32.totalorder %s24, 0
    %p384 = por %p382, %p383
    %p385 = scmp.ne.s32.totalorder %s374, %s377
    %p386 = scmp.eq.s32.totalorder %s29, 3
    %p387 = por %p385, %p386
    %p388 = scmp.ne.s32.totalorder %s377, %s378
    %p389 = scmp.eq.s32.totalorder %s29, 0
    %p390 = por %p388, %p389
    %p391 = scmp.ne.s32.totalorder %s377, %s378
    %p392 = scmp.eq.s32.totalorder %s30, 3
    %p393 = por %p391, %p392
    %p395 = scmp.ne.s32.totalorder %s378, %s394
    %p396 = scmp.eq.s32.totalorder %s30, 0
    %p397 = por %p395, %p396
    %s399 = sadd.s32 %s398, 1
    %p402 = scmp.eq.s32.totalorder %s24, 3
    %p403 = scmp.ne.s32.totalorder %s398, %s400
    %p404 = scmp.eq.s32.totalorder %s24, 0
    %p405 = por %p403, %p404
    %p406 = scmp.ne.s32.totalorder %s398, %s400
    %p407 = scmp.eq.s32.totalorder %s29, 3
    %p408 = por %p406, %p407
    %p409 = scmp.ne.s32.totalorder %s400, %s401
    %p410 = scmp.eq.s32.totalorder %s29, 0
    %p411 = por %p409, %p410
    %p412 = scmp.ne.s32.totalorder %s400, %s401
    %p413 = scmp.eq.s32.totalorder %s30, 3
    %p414 = por %p412, %p413
    %p416 = scmp.ne.s32.totalorder %s401, %s415
    %p417 = scmp.eq.s32.totalorder %s30, 0
    %p418 = por %p416, %p417
    %s420 = sadd.s32 %s419, 1
    %p423 = scmp.eq.s32.totalorder %s24, 3
    %p424 = scmp.ne.s32.totalorder %s419, %s421
    %p425 = scmp.eq.s32.totalorder %s24, 0
    %p426 = por %p424, %p425
    %p427 = scmp.ne.s32.totalorder %s419, %s421
    %p428 = scmp.eq.s32.totalorder %s29, 3
    %p429 = por %p427, %p428
    %p430 = scmp.ne.s32.totalorder %s421, %s422
    %p431 = scmp.eq.s32.totalorder %s29, 0
    %p432 = por %p430, %p431
    %p433 = scmp.ne.s32.totalorder %s421, %s422
    %p434 = scmp.eq.s32.totalorder %s30, 3
    %p435 = por %p433, %p434
    %p437 = scmp.ne.s32.totalorder %s422, %s436
    %p438 = scmp.eq.s32.totalorder %s30, 0
    %p439 = por %p437, %p438
    %s441 = sadd.s32 %s440, 1
    %p444 = scmp.eq.s32.totalorder %s24, 3
    %p445 = scmp.ne.s32.totalorder %s440, %s442
    %p446 = scmp.eq.s32.totalorder %s24, 0
    %p447 = por %p445, %p446
    %p448 = scmp.ne.s32.totalorder %s440, %s442
    %p449 = scmp.eq.s32.totalorder %s29, 3
    %p450 = por %p448, %p449
    %p451 = scmp.ne.s32.totalorder %s442, %s443
    %p452 = scmp.eq.s32.totalorder %s29, 0
    %p453 = por %p451, %p452
    %p454 = scmp.ne.s32.totalorder %s442, %s443
    %p455 = scmp.eq.s32.totalorder %s30, 3
    %p456 = por %p454, %p455
    %p458 = scmp.ne.s32.totalorder %s443, %s457
    %p459 = scmp.eq.s32.totalorder %s30, 0
    %p460 = por %p458, %p459
    %s462 = sadd.s32 %s461, 1
    %p465 = scmp.eq.s32.totalorder %s24, 3
    %p466 = scmp.ne.s32.totalorder %s461, %s463
    %p467 = scmp.eq.s32.totalorder %s24, 0
    %p468 = por %p466, %p467
    %p469 = scmp.ne.s32.totalorder %s461, %s463
    %p470 = scmp.eq.s32.totalorder %s29, 3
    %p471 = por %p469, %p470
    %p472 = scmp.ne.s32.totalorder %s463, %s464
    %p473 = scmp.eq.s32.totalorder %s29, 0
    %p474 = por %p472, %p473
    %p475 = scmp.ne.s32.totalorder %s463, %s464
    %p476 = scmp.eq.s32.totalorder %s30, 3
    %p477 = por %p475, %p476
    %p479 = scmp.ne.s32.totalorder %s464, %s478
    %p480 = scmp.eq.s32.totalorder %s30, 0
    %p481 = por %p479, %p480
    %s482 = ssub.s32 %s31, %s43
    %p483 = scmp.eq.s32.totalorder %s482, 0
    %s485 = sadd.s32 %s484, 1
    %s486 = scalar_select %p483, %s484, %s485
    %p489 = pneg %p483
    %p490 = scmp.eq.s32.totalorder %s24, 3
    %p491 = por %p489, %p490
    %p492 = scmp.ne.s32.totalorder %s484, %s487
    %p493 = scmp.eq.s32.totalorder %s24, 0
    %p494 = por %p492, %p493
    %p495 = scmp.ne.s32.totalorder %s484, %s487
    %p496 = scmp.eq.s32.totalorder %s29, 3
    %p497 = por %p495, %p496
    %p498 = scmp.ne.s32.totalorder %s487, %s488
    %p499 = scmp.eq.s32.totalorder %s29, 0
    %p500 = por %p498, %p499
    %p501 = scmp.ne.s32.totalorder %s487, %s488
    %p502 = scmp.eq.s32.totalorder %s30, 3
    %p503 = por %p501, %p502
    %p505 = scmp.ne.s32.totalorder %s488, %s504
    %p506 = scmp.eq.s32.totalorder %s30, 0
    %p507 = por %p505, %p506
    %p508 = scmp.le.s32.totalorder 1, %s24
    %p509 = scmp.lt.s32.totalorder %s24, 5
    %p510 = pnand %p508, %p509
    %p511 = pneg %p510
    // Predicated region
    $region9: #{vit_forward.1} parent=5 // pred_check
      _
    $region10: #{vit_forward.1} parent=5 // pred_check_branch
      %513 = sbr.rel (%p510) target = $region12
    $region11: #{vit_forward.1} parent=5 // pred_region
      %s514 = ssub.s32 %s24, 1
      // Predicated region
      $region13: #{vit_forward.1} parent=11 // pred_check
        %p515 = pneg %p83
      $region14: #{vit_forward.1} parent=11 // pred_check_branch
        %517 = sbr.rel (%p515) target = $region16
      $region15: #{vit_forward.1} parent=11 // pred_region
        _
      $region16: #{vit_forward.1} parent=11 // pred_fallthru
        _
      // Predicated region
      $region17: #{vit_forward.1} parent=11 // pred_check
        %p518 = pneg %p104
      $region18: #{vit_forward.1} parent=11 // pred_check_branch
        %520 = sbr.rel (%p518) target = $region20
      $region19: #{vit_forward.1} parent=11 // pred_region
        _
      $region20: #{vit_forward.1} parent=11 // pred_fallthru
        _
      // Predicated region
      $region21: #{vit_forward.1} parent=11 // pred_check
        %p521 = pneg %p411
      $region22: #{vit_forward.1} parent=11 // pred_check_branch
        %523 = sbr.rel (%p521) target = $region24
      $region23: #{vit_forward.1} parent=11 // pred_region
        _
      $region24: #{vit_forward.1} parent=11 // pred_fallthru
        _
      // Predicated region
      $region25: #{vit_forward.1} parent=11 // pred_check
        %p524 = pneg %p432
      $region26: #{vit_forward.1} parent=11 // pred_check_branch
        %526 = sbr.rel (%p524) target = $region28
      $region27: #{vit_forward.1} parent=11 // pred_region
        _
      $region28: #{vit_forward.1} parent=11 // pred_fallthru
        _
      // Predicated region
      $region29: #{vit_forward.1} parent=11 // pred_check
        %p527 = pneg %p453
      $region30: #{vit_forward.1} parent=11 // pred_check_branch
        %529 = sbr.rel (%p527) target = $region32
      $region31: #{vit_forward.1} parent=11 // pred_region
        _
      $region32: #{vit_forward.1} parent=11 // pred_fallthru
        _
      // Predicated region
      $region33: #{vit_forward.1} parent=11 // pred_check
        %p530 = pneg %p474
      $region34: #{vit_forward.1} parent=11 // pred_check_branch
        %532 = sbr.rel (%p530) target = $region36
      $region35: #{vit_forward.1} parent=11 // pred_region
        _
      $region36: #{vit_forward.1} parent=11 // pred_fallthru
        _
    $region12: #{vit_forward.1} parent=5 // pred_fallthru
      _
    %p533 = scmp.lt.s32.totalorder %s24, 4
    // Predicated region
    $region37: #{vit_forward.1} parent=5 // pred_check
      %p534 = pneg %p533
    $region38: #{vit_forward.1} parent=5 // pred_check_branch
      %536 = sbr.rel (%p534) target = $region40
    $region39: #{vit_forward.1} parent=5 // pred_region
      // Predicated region
      $region41: #{vit_forward.1} parent=39 // pred_check
        %p537 = pneg %p56
      $region42: #{vit_forward.1} parent=39 // pred_check_branch
        %539 = sbr.rel (%p537) target = $region44
      $region43: #{vit_forward.1} parent=39 // pred_region
        %s540 = smul.u32 6, %s31
        %p541 = scmp.lt.s32.totalorder %s540, 11
        %s542 = scalar_select %p541, %s540, 11
        %s543 = smul.addr %s542, 8
        %s544 = scalar_lea.vmem %s0, %s543
        %s545 = smul.u32 6, %s31
      $region44: #{vit_forward.1} parent=39 // pred_fallthru
        _
      // Predicated region
      $region45: #{vit_forward.1} parent=39 // pred_check
        %p546 = pneg %p124
      $region46: #{vit_forward.1} parent=39 // pred_check_branch
        %548 = sbr.rel (%p546) target = $region48
      $region47: #{vit_forward.1} parent=39 // pred_region
        %p549 = scmp.lt.s32.totalorder %s32, 1
        %s550 = scalar_select %p549, %s32, 1
        %s551 = scalar_lea.vmem %s3, %s550
      $region48: #{vit_forward.1} parent=39 // pred_fallthru
        _
      // Predicated region
      $region49: #{vit_forward.1} parent=39 // pred_check
        %p552 = pneg %p150
      $region50: #{vit_forward.1} parent=39 // pred_check_branch
        %554 = sbr.rel (%p552) target = $region52
      $region51: #{vit_forward.1} parent=39 // pred_region
        %p555 = scmp.lt.s32.totalorder %s32, 1
        %s556 = scalar_select %p555, %s32, 1
        %s557 = scalar_lea.vmem %s4, %s556
      $region52: #{vit_forward.1} parent=39 // pred_fallthru
        _
      // Predicated region
      $region53: #{vit_forward.1} parent=39 // pred_check
        %p558 = pneg %p176
      $region54: #{vit_forward.1} parent=39 // pred_check_branch
        %560 = sbr.rel (%p558) target = $region56
      $region55: #{vit_forward.1} parent=39 // pred_region
        %p561 = scmp.lt.s32.totalorder %s32, 1
        %s562 = scalar_select %p561, %s32, 1
        %s563 = smul.addr %s562, 48
        %s564 = smul.addr %s563, 4
        %s565 = scalar_lea.vmem %s5, %s564
      $region56: #{vit_forward.1} parent=39 // pred_fallthru
        _
      // Predicated region
      $region57: #{vit_forward.1} parent=39 // pred_check
        %p566 = pneg %p202
      $region58: #{vit_forward.1} parent=39 // pred_check_branch
        %568 = sbr.rel (%p566) target = $region60
      $region59: #{vit_forward.1} parent=39 // pred_region
        %p569 = scmp.lt.s32.totalorder %s32, 1
        %s570 = scalar_select %p569, %s32, 1
        %s571 = smul.addr %s570, 16
        %s572 = smul.addr %s571, 4
        %s573 = scalar_lea.vmem %s6, %s572
      $region60: #{vit_forward.1} parent=39 // pred_fallthru
        _
      // Predicated region
      $region61: #{vit_forward.1} parent=39 // pred_check
        %p574 = pneg %p228
      $region62: #{vit_forward.1} parent=39 // pred_check_branch
        %576 = sbr.rel (%p574) target = $region64
      $region63: #{vit_forward.1} parent=39 // pred_region
        %p577 = scmp.lt.s32.totalorder %s32, 1
        %s578 = scalar_select %p577, %s32, 1
        %s579 = scalar_lea.vmem %s7, %s578
      $region64: #{vit_forward.1} parent=39 // pred_fallthru
        _
      // Predicated region
      $region65: #{vit_forward.1} parent=39 // pred_check
        %p580 = pneg %p254
      $region66: #{vit_forward.1} parent=39 // pred_check_branch
        %582 = sbr.rel (%p580) target = $region68
      $region67: #{vit_forward.1} parent=39 // pred_region
        %p583 = scmp.lt.s32.totalorder %s32, 1
        %s584 = scalar_select %p583, %s32, 1
        %s585 = scalar_lea.vmem %s8, %s584
      $region68: #{vit_forward.1} parent=39 // pred_fallthru
        _
      // Predicated region
      $region69: #{vit_forward.1} parent=39 // pred_check
        %p586 = pneg %p280
      $region70: #{vit_forward.1} parent=39 // pred_check_branch
        %588 = sbr.rel (%p586) target = $region72
      $region71: #{vit_forward.1} parent=39 // pred_region
        %p589 = scmp.lt.s32.totalorder %s32, 1
        %s590 = scalar_select %p589, %s32, 1
        %s591 = scalar_lea.vmem %s9, %s590
      $region72: #{vit_forward.1} parent=39 // pred_fallthru
        _
      // Predicated region
      $region73: #{vit_forward.1} parent=39 // pred_check
        %p592 = pneg %p306
      $region74: #{vit_forward.1} parent=39 // pred_check_branch
        %594 = sbr.rel (%p592) target = $region76
      $region75: #{vit_forward.1} parent=39 // pred_region
        %p595 = scmp.lt.s32.totalorder %s32, 1
        %s596 = scalar_select %p595, %s32, 1
        %s597 = smul.addr %s596, 32
        %s598 = smul.addr %s597, 4
        %s599 = scalar_lea.vmem %s10, %s598
      $region76: #{vit_forward.1} parent=39 // pred_fallthru
        _
      // Predicated region
      $region77: #{vit_forward.1} parent=39 // pred_check
        %p600 = pneg %p332
      $region78: #{vit_forward.1} parent=39 // pred_check_branch
        %602 = sbr.rel (%p600) target = $region80
      $region79: #{vit_forward.1} parent=39 // pred_region
        %p603 = scmp.lt.s32.totalorder %s32, 1
        %s604 = scalar_select %p603, %s32, 1
        %s605 = smul.addr %s604, 2
        %s606 = scalar_lea.vmem %s11, %s605
      $region80: #{vit_forward.1} parent=39 // pred_fallthru
        _
      // Predicated region
      $region81: #{vit_forward.1} parent=39 // pred_check
        %p607 = pneg %p358
      $region82: #{vit_forward.1} parent=39 // pred_check_branch
        %609 = sbr.rel (%p607) target = $region84
      $region83: #{vit_forward.1} parent=39 // pred_region
        %p610 = scmp.lt.s32.totalorder %s32, 1
        %s611 = scalar_select %p610, %s32, 1
        %s612 = smul.addr %s611, 32
        %s613 = smul.addr %s612, 4
        %s614 = scalar_lea.vmem %s12, %s613
      $region84: #{vit_forward.1} parent=39 // pred_fallthru
        _
      // Predicated region
      $region85: #{vit_forward.1} parent=39 // pred_check
        %p615 = pneg %p384
      $region86: #{vit_forward.1} parent=39 // pred_check_branch
        %617 = sbr.rel (%p615) target = $region88
      $region87: #{vit_forward.1} parent=39 // pred_region
        %p618 = scmp.lt.s32.totalorder %s32, 1
        %s619 = scalar_select %p618, %s32, 1
        %s620 = scalar_lea.vmem %s13, %s619
      $region88: #{vit_forward.1} parent=39 // pred_fallthru
        _
    $region40: #{vit_forward.1} parent=5 // pred_fallthru
      _
    %p621 = scmp.le.s32.totalorder 1, %s24
    %p622 = scmp.lt.s32.totalorder %s24, 5
    %p623 = pnand %p621, %p622
    %p624 = pneg %p623
    // Predicated region
    $region89: #{vit_forward.1} parent=5 // pred_check
      _
    $region90: #{vit_forward.1} parent=5 // pred_check_branch
      %626 = sbr.rel (%p623) target = $region92
    $region91: #{vit_forward.1} parent=5 // pred_region
      %s627 = ssub.s32 %s24, 1
      %s628 = smul.u32 6, %s33
      %p629 = scmp.lt.s32.totalorder %s628, 11
      %s630 = scalar_select %p629, %s628, 11
      %s631 = smul.addr %s630, 8
      %s632 = scalar_lea.vmem %s0, %s631
      %p633 = pneg %p62
      %p634 = pneg %p59
      %p635 = pneg %p83
      %p636 = pneg %p80
      %p637 = pneg %p104
      %p638 = pneg %p101
      %p639 = scmp.lt.s32.totalorder %s34, 1
      %s640 = scalar_select %p639, %s34, 1
      %s641 = scalar_lea.vmem %s3, %s640
      %p642 = pneg %p130
      %p643 = pneg %p127
      %p644 = scmp.lt.s32.totalorder %s34, 1
      %s645 = scalar_select %p644, %s34, 1
      %s646 = scalar_lea.vmem %s4, %s645
      %p647 = pneg %p156
      %p648 = pneg %p153
      %p649 = scmp.lt.s32.totalorder %s34, 1
      %s650 = scalar_select %p649, %s34, 1
      %s651 = smul.addr %s650, 48
      %s652 = smul.addr %s651, 4
      %s653 = scalar_lea.vmem %s5, %s652
      %p654 = pneg %p182
      %p655 = pneg %p179
      %p656 = scmp.lt.s32.totalorder %s34, 1
      %s657 = scalar_select %p656, %s34, 1
      %s658 = smul.addr %s657, 16
      %s659 = smul.addr %s658, 4
      %s660 = scalar_lea.vmem %s6, %s659
      %p661 = pneg %p208
      %p662 = pneg %p205
      %p663 = scmp.lt.s32.totalorder %s34, 1
      %s664 = scalar_select %p663, %s34, 1
      %s665 = scalar_lea.vmem %s7, %s664
      %p666 = pneg %p234
      %p667 = pneg %p231
      %p668 = scmp.lt.s32.totalorder %s34, 1
      %s669 = scalar_select %p668, %s34, 1
      %s670 = scalar_lea.vmem %s8, %s669
      %p671 = pneg %p260
      %p672 = pneg %p257
      %p673 = scmp.lt.s32.totalorder %s34, 1
      %s674 = scalar_select %p673, %s34, 1
      %s675 = scalar_lea.vmem %s9, %s674
      %p676 = pneg %p286
      %p677 = pneg %p283
      %p678 = scmp.lt.s32.totalorder %s34, 1
      %s679 = scalar_select %p678, %s34, 1
      %s680 = smul.addr %s679, 32
      %s681 = smul.addr %s680, 4
      %s682 = scalar_lea.vmem %s10, %s681
      %p683 = pneg %p312
      %p684 = pneg %p309
      %p685 = scmp.lt.s32.totalorder %s34, 1
      %s686 = scalar_select %p685, %s34, 1
      %s687 = smul.addr %s686, 2
      %s688 = scalar_lea.vmem %s11, %s687
      %p689 = pneg %p338
      %p690 = pneg %p335
      %p691 = scmp.lt.s32.totalorder %s34, 1
      %s692 = scalar_select %p691, %s34, 1
      %s693 = smul.addr %s692, 32
      %s694 = smul.addr %s693, 4
      %s695 = scalar_lea.vmem %s12, %s694
      %p696 = pneg %p364
      %p697 = pneg %p361
      %p698 = scmp.lt.s32.totalorder %s34, 1
      %s699 = scalar_select %p698, %s34, 1
      %s700 = scalar_lea.vmem %s13, %s699
      %p701 = pneg %p390
      %p702 = pneg %p387
      %p703 = pneg %p411
      %p704 = pneg %p408
      %p705 = pneg %p432
      %p706 = pneg %p429
      %p707 = pneg %p453
      %p708 = pneg %p450
      %p709 = pneg %p474
      %p710 = pneg %p471
      %p711 = pneg %p500
      %p712 = pneg %p497
      %p713 = scmp.lt.s32.totalorder %s33, 1
      %s714 = scalar_select %p713, %s33, 1
      %s715 = smul.addr %s714, 2
      %s716 = scalar_lea.vmem %s18, %s715
      %s717 = smul.u32 6, %s33
      %p718 = scmp.lt.s32.totalorder %s717, 11
      %s719 = scalar_select %p718, %s717, 11
      %s720 = smul.addr %s719, 8
      %s721 = scalar_lea.vmem %s0, %s720
      %s722 = smul.u32 6, %s33
      %p723 = scmp.lt.s32.totalorder %s34, 1
      %s724 = scalar_select %p723, %s34, 1
      %s725 = scalar_lea.vmem %s3, %s724
      %p726 = scmp.lt.s32.totalorder %s34, 1
      %s727 = scalar_select %p726, %s34, 1
      %s728 = scalar_lea.vmem %s4, %s727
      %p729 = scmp.lt.s32.totalorder %s34, 1
      %s730 = scalar_select %p729, %s34, 1
      %s731 = smul.addr %s730, 48
      %s732 = smul.addr %s731, 4
      %s733 = scalar_lea.vmem %s5, %s732
      %p734 = scmp.lt.s32.totalorder %s34, 1
      %s735 = scalar_select %p734, %s34, 1
      %s736 = smul.addr %s735, 16
      %s737 = smul.addr %s736, 4
      %s738 = scalar_lea.vmem %s6, %s737
      %p739 = scmp.lt.s32.totalorder %s34, 1
      %s740 = scalar_select %p739, %s34, 1
      %s741 = scalar_lea.vmem %s7, %s740
      %p742 = scmp.lt.s32.totalorder %s34, 1
      %s743 = scalar_select %p742, %s34, 1
      %s744 = scalar_lea.vmem %s8, %s743
      %p745 = scmp.lt.s32.totalorder %s34, 1
      %s746 = scalar_select %p745, %s34, 1
      %s747 = scalar_lea.vmem %s9, %s746
      %p748 = scmp.lt.s32.totalorder %s34, 1
      %s749 = scalar_select %p748, %s34, 1
      %s750 = smul.addr %s749, 32
      %s751 = smul.addr %s750, 4
      %s752 = scalar_lea.vmem %s10, %s751
      %p753 = scmp.lt.s32.totalorder %s34, 1
      %s754 = scalar_select %p753, %s34, 1
      %s755 = smul.addr %s754, 2
      %s756 = scalar_lea.vmem %s11, %s755
      %p757 = scmp.lt.s32.totalorder %s34, 1
      %s758 = scalar_select %p757, %s34, 1
      %s759 = smul.addr %s758, 32
      %s760 = smul.addr %s759, 4
      %s761 = scalar_lea.vmem %s12, %s760
      %p762 = scmp.lt.s32.totalorder %s34, 1
      %s763 = scalar_select %p762, %s34, 1
      %s764 = scalar_lea.vmem %s13, %s763
      %p765 = scmp.lt.s32.totalorder %s33, 1
      %s766 = scalar_select %p765, %s33, 1
      %s767 = smul.addr %s766, 2
      %s768 = scalar_lea.vmem %s18, %s767
      %p770 = scmp.eq.s32.totalorder %s34, 0
      // Predicated region
      $region93: #{vit_forward.1} parent=91 // pred_check
        %p771 = pneg %p770
      $region94: #{vit_forward.1} parent=91 // pred_check_branch
        %773 = sbr.rel (%p771) target = $region96
      $region95: #{vit_forward.1} parent=91 // pred_region
        %v774 = vld [vmem:[%s721] sm:$0xff]
        %v775 = vld [vmem:[%s721 + $0x8] sm:$0xff]
        %v776 = vld [vmem:[%s721 + $0x10] sm:$0xff]
        %v777 = vld [vmem:[%s721 + $0x18] sm:$0xff]
        %v778 = vld [vmem:[%s721 + $0x20] sm:$0xff]
        %v779 = vld [vmem:[%s721 + $0x28] sm:$0xff]
        %v780 = vpack.c.bf16 %v775, %v774
        %v781 = vpack.c.bf16 %v777, %v776
        %v782 = vpack.c.bf16 %v779, %v778
        %v783 = vld [vmem:[%s1] sm:$0xf]
        %v784 = vld [vmem:[%s1 + $0x4] sm:$0xf]
        %v787 = vunpack.c.l.b16 %v783
        %v788 = vunpack.c.l.b16 %v784
        %v789 = vpack.c.b16 %v788, %v787
        %vm791 = vcmask 130048
        %v793 = vsel %vm791, %v780, 0
        %v796 = vsel %vm791, %v781, 0
        %v799 = vsel %vm791, %v782, 0
        %801 = vmatpush.bf16.msra.mxu0 0
        %802 = vmatpush.bf16.msra.mxu0 0
        %803 = vmatpush.bf16.msra.mxu0 0
        %804 = vmatpush.bf16.msra.mxu0 0
        %805 = vmatpush.bf16.msra.mxu0 0
        %806 = vmatpush.bf16.msra.mxu0 0
        %807 = vmatpush.bf16.msra.mxu0 0
        %808 = vmatpush.bf16.msra.mxu0 %v789
        %809 = vmatmul.bf16.gmra.mxu0 %v793
        %v810 = vpop.f32.mrf.mxu0
        %v811 = vadd.f32 0.0, %v810
        %v812 = vpop.f32.mrf.mxu0
        %v813 = vadd.f32 0.0, %v812
        %814 = vmatmul.bf16.gmra.mxu0 %v796
        %v815 = vpop.f32.mrf.mxu0
        %v816 = vadd.f32 0.0, %v815
        %v817 = vpop.f32.mrf.mxu0
        %v818 = vadd.f32 0.0, %v817
        %819 = vmatmul.bf16.gmra.mxu0 %v799
        %v820 = vpop.f32.mrf.mxu0
        %v821 = vadd.f32 0.0, %v820
        %v822 = vpop.f32.mrf.mxu0
        %v823 = vadd.f32 0.0, %v822
        %824 = vdwg.mxu0
        %v825 = vld [vmem:[%s2] sm:$0xff]
        %v826 = vld [vmem:[%s2 + $0x8] sm:$0xff]
        %v827 = vld [vmem:[%s2 + $0x10] sm:$0xff]
        %v828 = vadd.f32 %v811, %v825
        %v829 = vadd.f32 %v813, %v826
        %v830 = vadd.f32 %v816, %v827
        %v831 = vadd.f32 %v818, %v825
        %v832 = vadd.f32 %v821, %v826
        %v833 = vadd.f32 %v823, %v827
        %834 = vst [vmem:[#allocation2] sm:$0xff] %v828
        %835 = vst [vmem:[#allocation2 + $0x8] sm:$0xff] %v829
        %836 = vst [vmem:[#allocation2 + $0x10] sm:$0xff] %v830
        %837 = vst [vmem:[#allocation2 + $0x18] sm:$0xff] %v831
        %838 = vst [vmem:[#allocation2 + $0x20] sm:$0xff] %v832
        %839 = vst [vmem:[#allocation2 + $0x28] sm:$0xff] %v833
      $region96: #{vit_forward.1} parent=91 // pred_fallthru
        _
      %v840 = vld [vmem:[#allocation2] sm:$0xff]
      %v841 = vld [vmem:[#allocation2 + $0x8] sm:$0xff]
      %v842 = vld [vmem:[#allocation2 + $0x10] sm:$0xff]
      %v843 = vld [vmem:[#allocation2 + $0x18] sm:$0xff]
      %v844 = vld [vmem:[#allocation2 + $0x20] sm:$0xff]
      %v845 = vld [vmem:[#allocation2 + $0x28] sm:$0xff]
      %v846 = vld [vmem:[%s725] sm:$0x1]
      %v847 = vld [vmem:[%s728] sm:$0x1]
      %848 = vadd.xlane.f32.xlu0 %v840
      %v849 = vpop.xlane.xlu0 %848
      %850 = vadd.xlane.f32.xlu0 %v841
      %v851 = vpop.xlane.xlu0 %850
      %852 = vadd.xlane.f32.xlu0 %v842
      %v853 = vpop.xlane.xlu0 %852
      %854 = vadd.xlane.f32.xlu0 %v843
      %v855 = vpop.xlane.xlu0 %854
      %856 = vadd.xlane.f32.xlu0 %v844
      %v857 = vpop.xlane.xlu0 %856
      %858 = vadd.xlane.f32.xlu0 %v845
      %v859 = vpop.xlane.xlu0 %858
      %v860 = vrcp.pop 128.0
      %v861 = vmul.f32 128.0, %v860
      %v862 = vsub.f32 1.0, %v861
      %v863 = vmul.f32 %v860, %v862
      %v864 = vadd.f32 %v860, %v863
      %vm865 = vweird.f32 %v860
      %v866 = vsel %vm865, %v860, %v864
      %v867 = vmul.f32 %v849, %v866
      %v868 = vmul.f32 %v851, %v866
      %v869 = vmul.f32 %v853, %v866
      %v870 = vmul.f32 %v855, %v866
      %v871 = vmul.f32 %v857, %v866
      %v872 = vmul.f32 %v859, %v866
      %v873 = vsub.f32 %v840, %v867
      %v874 = vsub.f32 %v841, %v868
      %v875 = vsub.f32 %v842, %v869
      %v876 = vsub.f32 %v843, %v870
      %v877 = vsub.f32 %v844, %v871
      %v878 = vsub.f32 %v845, %v872
      %v879 = vmul.f32 %v873, %v873
      %v880 = vmul.f32 %v874, %v874
      %v881 = vmul.f32 %v875, %v875
      %v882 = vmul.f32 %v876, %v876
      %v883 = vmul.f32 %v877, %v877
      %v884 = vmul.f32 %v878, %v878
      %885 = vadd.xlane.f32.xlu0 %v879
      %v886 = vpop.xlane.xlu0 %885
      %887 = vadd.xlane.f32.xlu0 %v880
      %v888 = vpop.xlane.xlu0 %887
      %889 = vadd.xlane.f32.xlu0 %v881
      %v890 = vpop.xlane.xlu0 %889
      %891 = vadd.xlane.f32.xlu0 %v882
      %v892 = vpop.xlane.xlu0 %891
      %893 = vadd.xlane.f32.xlu0 %v883
      %v894 = vpop.xlane.xlu0 %893
      %895 = vadd.xlane.f32.xlu0 %v884
      %v896 = vpop.xlane.xlu0 %895
      %v897 = vmul.f32 %v886, %v866
      %v898 = vmul.f32 %v888, %v866
      %v899 = vmul.f32 %v890, %v866
      %v900 = vmul.f32 %v892, %v866
      %v901 = vmul.f32 %v894, %v866
      %v902 = vmul.f32 %v896, %v866
      %v903 = vadd.f32 %v897, 1e-05
      %v904 = vadd.f32 %v898, 1e-05
      %v905 = vadd.f32 %v899, 1e-05
      %v906 = vadd.f32 %v900, 1e-05
      %v907 = vadd.f32 %v901, 1e-05
      %v908 = vadd.f32 %v902, 1e-05
      %v909 = vrsqrt.pop %v903
      %v910 = vmul.f32 %v909, %v903
      %v911 = vmul.f32 %v910, %v909
      %v912 = vmul.f32 0.5, %v911
      %v913 = vsub.f32 1.5, %v912
      %v914 = vmul.f32 %v909, %v913
      %vm915 = vweird.f32 %v903
      %vm916 = vweird.f32 %v909
      %vm917 = vmor %vm915, %vm916
      %v918 = vsel %vm917, %v909, %v914
      %v919 = vrsqrt.pop %v904
      %v920 = vmul.f32 %v919, %v904
      %v921 = vmul.f32 %v920, %v919
      %v922 = vmul.f32 0.5, %v921
      %v923 = vsub.f32 1.5, %v922
      %v924 = vmul.f32 %v919, %v923
      %vm925 = vweird.f32 %v904
      %vm926 = vweird.f32 %v919
      %vm927 = vmor %vm925, %vm926
      %v928 = vsel %vm927, %v919, %v924
      %v929 = vrsqrt.pop %v905
      %v930 = vmul.f32 %v929, %v905
      %v931 = vmul.f32 %v930, %v929
      %v932 = vmul.f32 0.5, %v931
      %v933 = vsub.f32 1.5, %v932
      %v934 = vmul.f32 %v929, %v933
      %vm935 = vweird.f32 %v905
      %vm936 = vweird.f32 %v929
      %vm937 = vmor %vm935, %vm936
      %v938 = vsel %vm937, %v929, %v934
      %v939 = vrsqrt.pop %v906
      %v940 = vmul.f32 %v939, %v906
      %v941 = vmul.f32 %v940, %v939
      %v942 = vmul.f32 0.5, %v941
      %v943 = vsub.f32 1.5, %v942
      %v944 = vmul.f32 %v939, %v943
      %vm945 = vweird.f32 %v906
      %vm946 = vweird.f32 %v939
      %vm947 = vmor %vm945, %vm946
      %v948 = vsel %vm947, %v939, %v944
      %v949 = vrsqrt.pop %v907
      %v950 = vmul.f32 %v949, %v907
      %v951 = vmul.f32 %v950, %v949
      %v952 = vmul.f32 0.5, %v951
      %v953 = vsub.f32 1.5, %v952
      %v954 = vmul.f32 %v949, %v953
      %vm955 = vweird.f32 %v907
      %vm956 = vweird.f32 %v949
      %vm957 = vmor %vm955, %vm956
      %v958 = vsel %vm957, %v949, %v954
      %v959 = vrsqrt.pop %v908
      %v960 = vmul.f32 %v959, %v908
      %v961 = vmul.f32 %v960, %v959
      %v962 = vmul.f32 0.5, %v961
      %v963 = vsub.f32 1.5, %v962
      %v964 = vmul.f32 %v959, %v963
      %vm965 = vweird.f32 %v908
      %vm966 = vweird.f32 %v959
      %vm967 = vmor %vm965, %vm966
      %v968 = vsel %vm967, %v959, %v964
      %v969 = vmul.f32 %v873, %v918
      %v970 = vmul.f32 %v874, %v928
      %v971 = vmul.f32 %v875, %v938
      %v972 = vmul.f32 %v876, %v948
      %v973 = vmul.f32 %v877, %v958
      %v974 = vmul.f32 %v878, %v968
      %v976 = vperm.slane %v846, 0
      %v978 = vmul.f32 %v969, %v976
      %v979 = vmul.f32 %v970, %v976
      %v980 = vmul.f32 %v971, %v976
      %v981 = vmul.f32 %v972, %v976
      %v982 = vmul.f32 %v973, %v976
      %v983 = vmul.f32 %v974, %v976
      %v985 = vperm.slane %v847, 0
      %v987 = vadd.f32 %v978, %v985
      %v988 = vadd.f32 %v979, %v985
      %v989 = vadd.f32 %v980, %v985
      %v990 = vadd.f32 %v981, %v985
      %v991 = vadd.f32 %v982, %v985
      %v992 = vadd.f32 %v983, %v985
      %v993 = vpack.c.bf16 %v988, %v987
      %v994 = vpack.c.bf16 %v990, %v989
      %v995 = vpack.c.bf16 %v992, %v991
      %v996 = vld [vmem:[%s733] sm:$0xff]
      %v997 = vld [vmem:[%s733 + $0x8] sm:$0xf]
      %v998 = vld [vmem:[%s733 + $0xc] sm:$0xff]
      %v999 = vld [vmem:[%s733 + $0x14] sm:$0xf]
      %v1000 = vld [vmem:[%s733 + $0x18] sm:$0xff]
      %v1001 = vld [vmem:[%s733 + $0x20] sm:$0xf]
      %v1002 = vld [vmem:[%s733 + $0x24] sm:$0xff]
      %v1003 = vld [vmem:[%s733 + $0x2c] sm:$0xf]
      %v1004 = vld [vmem:[%s733 + $0x30] sm:$0xff]
      %v1005 = vld [vmem:[%s733 + $0x38] sm:$0xf]
      %v1006 = vld [vmem:[%s733 + $0x3c] sm:$0xff]
      %v1007 = vld [vmem:[%s733 + $0x44] sm:$0xf]
      %v1008 = vld [vmem:[%s733 + $0x48] sm:$0xff]
      %v1009 = vld [vmem:[%s733 + $0x50] sm:$0xf]
      %v1010 = vld [vmem:[%s733 + $0x54] sm:$0xff]
      %v1011 = vld [vmem:[%s733 + $0x5c] sm:$0xf]
      %v1012 = vld [vmem:[%s733 + $0x60] sm:$0xff]
      %v1013 = vld [vmem:[%s733 + $0x68] sm:$0xf]
      %v1014 = vld [vmem:[%s733 + $0x6c] sm:$0xff]
      %v1015 = vld [vmem:[%s733 + $0x74] sm:$0xf]
      %v1016 = vld [vmem:[%s733 + $0x78] sm:$0xff]
      %v1017 = vld [vmem:[%s733 + $0x80] sm:$0xf]
      %v1018 = vld [vmem:[%s733 + $0x84] sm:$0xff]
      %v1019 = vld [vmem:[%s733 + $0x8c] sm:$0xf]
      %v1020 = vld [vmem:[%s733 + $0x90] sm:$0xff]
      %v1021 = vld [vmem:[%s733 + $0x98] sm:$0xf]
      %v1022 = vld [vmem:[%s733 + $0x9c] sm:$0xff]
      %v1023 = vld [vmem:[%s733 + $0xa4] sm:$0xf]
      %v1024 = vld [vmem:[%s733 + $0xa8] sm:$0xff]
      %v1025 = vld [vmem:[%s733 + $0xb0] sm:$0xf]
      %v1026 = vld [vmem:[%s733 + $0xb4] sm:$0xff]
      %v1027 = vld [vmem:[%s733 + $0xbc] sm:$0xf]
      %v1060 = vunpack.c.l.b16 %v996
      %v1061 = vunpack.c.h.b16 %v996
      %v1062 = vunpack.c.l.b16 %v997
      %v1063 = vunpack.c.l.b16 %v998
      %v1064 = vunpack.c.h.b16 %v998
      %v1065 = vunpack.c.l.b16 %v999
      %v1066 = vunpack.c.l.b16 %v1000
      %v1067 = vunpack.c.h.b16 %v1000
      %v1068 = vunpack.c.l.b16 %v1001
      %v1069 = vunpack.c.l.b16 %v1002
      %v1070 = vunpack.c.h.b16 %v1002
      %v1071 = vunpack.c.l.b16 %v1003
      %v1072 = vunpack.c.l.b16 %v1004
      %v1073 = vunpack.c.h.b16 %v1004
      %v1074 = vunpack.c.l.b16 %v1005
      %v1075 = vunpack.c.l.b16 %v1006
      %v1076 = vunpack.c.h.b16 %v1006
      %v1077 = vunpack.c.l.b16 %v1007
      %v1078 = vunpack.c.l.b16 %v1008
      %v1079 = vunpack.c.h.b16 %v1008
      %v1080 = vunpack.c.l.b16 %v1009
      %v1081 = vunpack.c.l.b16 %v1010
      %v1082 = vunpack.c.h.b16 %v1010
      %v1083 = vunpack.c.l.b16 %v1011
      %v1084 = vunpack.c.l.b16 %v1012
      %v1085 = vunpack.c.h.b16 %v1012
      %v1086 = vunpack.c.l.b16 %v1013
      %v1087 = vunpack.c.l.b16 %v1014
      %v1088 = vunpack.c.h.b16 %v1014
      %v1089 = vunpack.c.l.b16 %v1015
      %v1090 = vunpack.c.l.b16 %v1016
      %v1091 = vunpack.c.h.b16 %v1016
      %v1092 = vunpack.c.l.b16 %v1017
      %v1093 = vunpack.c.l.b16 %v1018
      %v1094 = vunpack.c.h.b16 %v1018
      %v1095 = vunpack.c.l.b16 %v1019
      %v1096 = vunpack.c.l.b16 %v1020
      %v1097 = vunpack.c.h.b16 %v1020
      %v1098 = vunpack.c.l.b16 %v1021
      %v1099 = vunpack.c.l.b16 %v1022
      %v1100 = vunpack.c.h.b16 %v1022
      %v1101 = vunpack.c.l.b16 %v1023
      %v1102 = vunpack.c.l.b16 %v1024
      %v1103 = vunpack.c.h.b16 %v1024
      %v1104 = vunpack.c.l.b16 %v1025
      %v1105 = vunpack.c.l.b16 %v1026
      %v1106 = vunpack.c.h.b16 %v1026
      %v1107 = vunpack.c.l.b16 %v1027
      %v1108 = vpack.c.b16 %v1063, %v1060
      %v1109 = vpack.c.b16 %v1064, %v1061
      %v1110 = vpack.c.b16 %v1065, %v1062
      %v1111 = vpack.c.b16 %v1069, %v1066
      %v1112 = vpack.c.b16 %v1070, %v1067
      %v1113 = vpack.c.b16 %v1071, %v1068
      %v1114 = vpack.c.b16 %v1075, %v1072
      %v1115 = vpack.c.b16 %v1076, %v1073
      %v1116 = vpack.c.b16 %v1077, %v1074
      %v1117 = vpack.c.b16 %v1081, %v1078
      %v1118 = vpack.c.b16 %v1082, %v1079
      %v1119 = vpack.c.b16 %v1083, %v1080
      %v1120 = vpack.c.b16 %v1087, %v1084
      %v1121 = vpack.c.b16 %v1088, %v1085
      %v1122 = vpack.c.b16 %v1089, %v1086
      %v1123 = vpack.c.b16 %v1093, %v1090
      %v1124 = vpack.c.b16 %v1094, %v1091
      %v1125 = vpack.c.b16 %v1095, %v1092
      %v1126 = vpack.c.b16 %v1099, %v1096
      %v1127 = vpack.c.b16 %v1100, %v1097
      %v1128 = vpack.c.b16 %v1101, %v1098
      %v1129 = vpack.c.b16 %v1105, %v1102
      %v1130 = vpack.c.b16 %v1106, %v1103
      %v1131 = vpack.c.b16 %v1107, %v1104
      %1156 = vmatpush.bf16.msra.mxu0 %v1129
      %1157 = vmatpush.bf16.msra.mxu0 %v1126
      %1158 = vmatpush.bf16.msra.mxu0 %v1123
      %1159 = vmatpush.bf16.msra.mxu0 %v1120
      %1160 = vmatpush.bf16.msra.mxu0 %v1117
      %1161 = vmatpush.bf16.msra.mxu0 %v1114
      %1162 = vmatpush.bf16.msra.mxu0 %v1111
      %1163 = vmatpush.bf16.msra.mxu0 %v1108
      %1164 = vmatmul.bf16.gmra.mxu0 %v993
      %v1165 = vpop.f32.mrf.mxu0
      %v1166 = vadd.f32 0.0, %v1165
      %v1167 = vpop.f32.mrf.mxu0
      %v1168 = vadd.f32 0.0, %v1167
      %1169 = vmatmul.bf16.gmra.mxu0 %v994
      %v1170 = vpop.f32.mrf.mxu0
      %v1171 = vadd.f32 0.0, %v1170
      %v1172 = vpop.f32.mrf.mxu0
      %v1173 = vadd.f32 0.0, %v1172
      %1174 = vmatmul.bf16.gmra.mxu0 %v995
      %v1175 = vpop.f32.mrf.mxu0
      %v1176 = vadd.f32 0.0, %v1175
      %v1177 = vpop.f32.mrf.mxu0
      %v1178 = vadd.f32 0.0, %v1177
      %1179 = vdwg.mxu0
      %1180 = vmatpush.bf16.msra.mxu0 %v1130
      %1181 = vmatpush.bf16.msra.mxu0 %v1127
      %1182 = vmatpush.bf16.msra.mxu0 %v1124
      %1183 = vmatpush.bf16.msra.mxu0 %v1121
      %1184 = vmatpush.bf16.msra.mxu0 %v1118
      %1185 = vmatpush.bf16.msra.mxu0 %v1115
      %1186 = vmatpush.bf16.msra.mxu0 %v1112
      %1187 = vmatpush.bf16.msra.mxu0 %v1109
      %1188 = vmatmul.bf16.gmra.mxu0 %v993
      %v1189 = vpop.f32.mrf.mxu0
      %v1190 = vadd.f32 0.0, %v1189
      %v1191 = vpop.f32.mrf.mxu0
      %v1192 = vadd.f32 0.0, %v1191
      %1193 = vmatmul.bf16.gmra.mxu0 %v994
      %v1194 = vpop.f32.mrf.mxu0
      %v1195 = vadd.f32 0.0, %v1194
      %v1196 = vpop.f32.mrf.mxu0
      %v1197 = vadd.f32 0.0, %v1196
      %1198 = vmatmul.bf16.gmra.mxu0 %v995
      %v1199 = vpop.f32.mrf.mxu0
      %v1200 = vadd.f32 0.0, %v1199
      %v1201 = vpop.f32.mrf.mxu0
      %v1202 = vadd.f32 0.0, %v1201
      %1203 = vdwg.mxu0
      %1204 = vmatpush.bf16.msra.mxu0 %v1131
      %1205 = vmatpush.bf16.msra.mxu0 %v1128
      %1206 = vmatpush.bf16.msra.mxu0 %v1125
      %1207 = vmatpush.bf16.msra.mxu0 %v1122
      %1208 = vmatpush.bf16.msra.mxu0 %v1119
      %1209 = vmatpush.bf16.msra.mxu0 %v1116
      %1210 = vmatpush.bf16.msra.mxu0 %v1113
      %1211 = vmatpush.bf16.msra.mxu0 %v1110
      %1212 = vmatmul.bf16.gmra.mxu0 %v993
      %v1213 = vpop.f32.mrf.mxu0
      %v1214 = vadd.f32 0.0, %v1213
      %v1215 = vpop.f32.mrf.mxu0
      %v1216 = vadd.f32 0.0, %v1215
      %1217 = vmatmul.bf16.gmra.mxu0 %v994
      %v1218 = vpop.f32.mrf.mxu0
      %v1219 = vadd.f32 0.0, %v1218
      %v1220 = vpop.f32.mrf.mxu0
      %v1221 = vadd.f32 0.0, %v1220
      %1222 = vmatmul.bf16.gmra.mxu0 %v995
      %v1223 = vpop.f32.mrf.mxu0
      %v1224 = vadd.f32 0.0, %v1223
      %v1225 = vpop.f32.mrf.mxu0
      %v1226 = vadd.f32 0.0, %v1225
      %1227 = vdwg.mxu0
      %1234 = vrot.lane.b32.xlu0 %v1166, 96
      %v1235 = vpop.permute.xlu0 %1234
      %1236 = vrot.lane.b32.xlu0 %v1168, 96
      %v1237 = vpop.permute.xlu0 %1236
      %1238 = vrot.lane.b32.xlu0 %v1171, 96
      %v1239 = vpop.permute.xlu0 %1238
      %1240 = vrot.lane.b32.xlu0 %v1173, 96
      %v1241 = vpop.permute.xlu0 %1240
      %1242 = vrot.lane.b32.xlu0 %v1176, 96
      %v1243 = vpop.permute.xlu0 %1242
      %1244 = vrot.lane.b32.xlu0 %v1178, 96
      %v1245 = vpop.permute.xlu0 %1244
      %1252 = vrot.lane.b32.xlu0 %v1166, 64
      %v1253 = vpop.permute.xlu0 %1252
      %1254 = vrot.lane.b32.xlu0 %v1168, 64
      %v1255 = vpop.permute.xlu0 %1254
      %1256 = vrot.lane.b32.xlu0 %v1171, 64
      %v1257 = vpop.permute.xlu0 %1256
      %1258 = vrot.lane.b32.xlu0 %v1173, 64
      %v1259 = vpop.permute.xlu0 %1258
      %1260 = vrot.lane.b32.xlu0 %v1176, 64
      %v1261 = vpop.permute.xlu0 %1260
      %1262 = vrot.lane.b32.xlu0 %v1178, 64
      %v1263 = vpop.permute.xlu0 %1262
      %1270 = vrot.lane.b32.xlu0 %v1166, 32
      %v1271 = vpop.permute.xlu0 %1270
      %1272 = vrot.lane.b32.xlu0 %v1168, 32
      %v1273 = vpop.permute.xlu0 %1272
      %1274 = vrot.lane.b32.xlu0 %v1171, 32
      %v1275 = vpop.permute.xlu0 %1274
      %1276 = vrot.lane.b32.xlu0 %v1173, 32
      %v1277 = vpop.permute.xlu0 %1276
      %1278 = vrot.lane.b32.xlu0 %v1176, 32
      %v1279 = vpop.permute.xlu0 %1278
      %1280 = vrot.lane.b32.xlu0 %v1178, 32
      %v1281 = vpop.permute.xlu0 %1280
      %v1288 = vpack.c.bf16 %v1166, %v1166
      %v1289 = vpack.c.bf16 %v1168, %v1168
      %v1290 = vpack.c.bf16 %v1171, %v1171
      %v1291 = vpack.c.bf16 %v1173, %v1173
      %v1292 = vpack.c.bf16 %v1176, %v1176
      %v1293 = vpack.c.bf16 %v1178, %v1178
      %v1294 = vpack.c.bf16 %v1235, %v1235
      %v1295 = vpack.c.bf16 %v1237, %v1237
      %v1296 = vpack.c.bf16 %v1239, %v1239
      %v1297 = vpack.c.bf16 %v1241, %v1241
      %v1298 = vpack.c.bf16 %v1243, %v1243
      %v1299 = vpack.c.bf16 %v1245, %v1245
      %v1300 = vpack.c.bf16 %v1253, %v1253
      %v1301 = vpack.c.bf16 %v1255, %v1255
      %v1302 = vpack.c.bf16 %v1257, %v1257
      %v1303 = vpack.c.bf16 %v1259, %v1259
      %v1304 = vpack.c.bf16 %v1261, %v1261
      %v1305 = vpack.c.bf16 %v1263, %v1263
      %v1306 = vpack.c.bf16 %v1271, %v1271
      %v1307 = vpack.c.bf16 %v1273, %v1273
      %v1308 = vpack.c.bf16 %v1275, %v1275
      %v1309 = vpack.c.bf16 %v1277, %v1277
      %v1310 = vpack.c.bf16 %v1279, %v1279
      %v1311 = vpack.c.bf16 %v1281, %v1281
      %1318 = vrot.lane.b32.xlu0 %v1190, 96
      %v1319 = vpop.permute.xlu0 %1318
      %1320 = vrot.lane.b32.xlu0 %v1192, 96
      %v1321 = vpop.permute.xlu0 %1320
      %1322 = vrot.lane.b32.xlu0 %v1195, 96
      %v1323 = vpop.permute.xlu0 %1322
      %1324 = vrot.lane.b32.xlu0 %v1197, 96
      %v1325 = vpop.permute.xlu0 %1324
      %1326 = vrot.lane.b32.xlu0 %v1200, 96
      %v1327 = vpop.permute.xlu0 %1326
      %1328 = vrot.lane.b32.xlu0 %v1202, 96
      %v1329 = vpop.permute.xlu0 %1328
      %1336 = vrot.lane.b32.xlu0 %v1190, 64
      %v1337 = vpop.permute.xlu0 %1336
      %1338 = vrot.lane.b32.xlu0 %v1192, 64
      %v1339 = vpop.permute.xlu0 %1338
      %1340 = vrot.lane.b32.xlu0 %v1195, 64
      %v1341 = vpop.permute.xlu0 %1340
      %1342 = vrot.lane.b32.xlu0 %v1197, 64
      %v1343 = vpop.permute.xlu0 %1342
      %1344 = vrot.lane.b32.xlu0 %v1200, 64
      %v1345 = vpop.permute.xlu0 %1344
      %1346 = vrot.lane.b32.xlu0 %v1202, 64
      %v1347 = vpop.permute.xlu0 %1346
      %1354 = vrot.lane.b32.xlu0 %v1190, 32
      %v1355 = vpop.permute.xlu0 %1354
      %1356 = vrot.lane.b32.xlu0 %v1192, 32
      %v1357 = vpop.permute.xlu0 %1356
      %1358 = vrot.lane.b32.xlu0 %v1195, 32
      %v1359 = vpop.permute.xlu0 %1358
      %1360 = vrot.lane.b32.xlu0 %v1197, 32
      %v1361 = vpop.permute.xlu0 %1360
      %1362 = vrot.lane.b32.xlu0 %v1200, 32
      %v1363 = vpop.permute.xlu0 %1362
      %1364 = vrot.lane.b32.xlu0 %v1202, 32
      %v1365 = vpop.permute.xlu0 %1364
      %v1372 = vpack.c.bf16 %v1190, %v1190
      %v1373 = vpack.c.bf16 %v1192, %v1192
      %v1374 = vpack.c.bf16 %v1195, %v1195
      %v1375 = vpack.c.bf16 %v1197, %v1197
      %v1376 = vpack.c.bf16 %v1200, %v1200
      %v1377 = vpack.c.bf16 %v1202, %v1202
      %v1378 = vpack.c.bf16 %v1319, %v1319
      %v1379 = vpack.c.bf16 %v1321, %v1321
      %v1380 = vpack.c.bf16 %v1323, %v1323
      %v1381 = vpack.c.bf16 %v1325, %v1325
      %v1382 = vpack.c.bf16 %v1327, %v1327
      %v1383 = vpack.c.bf16 %v1329, %v1329
      %v1384 = vpack.c.bf16 %v1337, %v1337
      %v1385 = vpack.c.bf16 %v1339, %v1339
      %v1386 = vpack.c.bf16 %v1341, %v1341
      %v1387 = vpack.c.bf16 %v1343, %v1343
      %v1388 = vpack.c.bf16 %v1345, %v1345
      %v1389 = vpack.c.bf16 %v1347, %v1347
      %v1390 = vpack.c.bf16 %v1355, %v1355
      %v1391 = vpack.c.bf16 %v1357, %v1357
      %v1392 = vpack.c.bf16 %v1359, %v1359
      %v1393 = vpack.c.bf16 %v1361, %v1361
      %v1394 = vpack.c.bf16 %v1363, %v1363
      %v1395 = vpack.c.bf16 %v1365, %v1365
      %1402 = vrot.lane.b32.xlu0 %v1214, 96
      %v1403 = vpop.permute.xlu0 %1402
      %1404 = vrot.lane.b32.xlu0 %v1216, 96
      %v1405 = vpop.permute.xlu0 %1404
      %1406 = vrot.lane.b32.xlu0 %v1219, 96
      %v1407 = vpop.permute.xlu0 %1406
      %1408 = vrot.lane.b32.xlu0 %v1221, 96
      %v1409 = vpop.permute.xlu0 %1408
      %1410 = vrot.lane.b32.xlu0 %v1224, 96
      %v1411 = vpop.permute.xlu0 %1410
      %1412 = vrot.lane.b32.xlu0 %v1226, 96
      %v1413 = vpop.permute.xlu0 %1412
      %1420 = vrot.lane.b32.xlu0 %v1214, 64
      %v1421 = vpop.permute.xlu0 %1420
      %1422 = vrot.lane.b32.xlu0 %v1216, 64
      %v1423 = vpop.permute.xlu0 %1422
      %1424 = vrot.lane.b32.xlu0 %v1219, 64
      %v1425 = vpop.permute.xlu0 %1424
      %1426 = vrot.lane.b32.xlu0 %v1221, 64
      %v1427 = vpop.permute.xlu0 %1426
      %1428 = vrot.lane.b32.xlu0 %v1224, 64
      %v1429 = vpop.permute.xlu0 %1428
      %1430 = vrot.lane.b32.xlu0 %v1226, 64
      %v1431 = vpop.permute.xlu0 %1430
      %1438 = vrot.lane.b32.xlu0 %v1214, 32
      %v1439 = vpop.permute.xlu0 %1438
      %1440 = vrot.lane.b32.xlu0 %v1216, 32
      %v1441 = vpop.permute.xlu0 %1440
      %1442 = vrot.lane.b32.xlu0 %v1219, 32
      %v1443 = vpop.permute.xlu0 %1442
      %1444 = vrot.lane.b32.xlu0 %v1221, 32
      %v1445 = vpop.permute.xlu0 %1444
      %1446 = vrot.lane.b32.xlu0 %v1224, 32
      %v1447 = vpop.permute.xlu0 %1446
      %1448 = vrot.lane.b32.xlu0 %v1226, 32
      %v1449 = vpop.permute.xlu0 %1448
      %v1456 = vpack.c.bf16 %v1214, %v1214
      %v1457 = vpack.c.bf16 %v1216, %v1216
      %v1458 = vpack.c.bf16 %v1219, %v1219
      %v1459 = vpack.c.bf16 %v1221, %v1221
      %v1460 = vpack.c.bf16 %v1224, %v1224
      %v1461 = vpack.c.bf16 %v1226, %v1226
      %v1462 = vpack.c.bf16 %v1403, %v1403
      %v1463 = vpack.c.bf16 %v1405, %v1405
      %v1464 = vpack.c.bf16 %v1407, %v1407
      %v1465 = vpack.c.bf16 %v1409, %v1409
      %v1466 = vpack.c.bf16 %v1411, %v1411
      %v1467 = vpack.c.bf16 %v1413, %v1413
      %v1468 = vpack.c.bf16 %v1421, %v1421
      %v1469 = vpack.c.bf16 %v1423, %v1423
      %v1470 = vpack.c.bf16 %v1425, %v1425
      %v1471 = vpack.c.bf16 %v1427, %v1427
      %v1472 = vpack.c.bf16 %v1429, %v1429
      %v1473 = vpack.c.bf16 %v1431, %v1431
      %v1474 = vpack.c.bf16 %v1439, %v1439
      %v1475 = vpack.c.bf16 %v1441, %v1441
      %v1476 = vpack.c.bf16 %v1443, %v1443
      %v1477 = vpack.c.bf16 %v1445, %v1445
      %v1478 = vpack.c.bf16 %v1447, %v1447
      %v1479 = vpack.c.bf16 %v1449, %v1449
      %v1483 = vunpack.c.l.b16 %v1288
      %v1484 = vunpack.c.l.b16 %v1289
      %v1485 = vunpack.c.l.b16 %v1290
      %v1486 = vpack.c.b16 %v1484, %v1483
      %v1487 = vpack.c.b16 %v1485, %v1485
      %v1491 = vunpack.c.l.b16 %v1372
      %v1492 = vunpack.c.l.b16 %v1373
      %v1493 = vunpack.c.l.b16 %v1374
      %v1494 = vpack.c.b16 %v1492, %v1491
      %v1495 = vpack.c.b16 %v1493, %v1493
      %vm1496 = vcmask 261120
      %v1498 = vsel %vm1496, %v1486, 0
      %v1501 = vsel %vm1496, %v1487, 0
      %v1504 = vsel %vm1496, %v1494, 0
      %v1507 = vsel %vm1496, %v1495, 0
      %1509 = vmatpush.bf16.xpose.msra.mxu0 0
      %1510 = vmatpush.bf16.xpose.msra.mxu0 0
      %1511 = vmatpush.bf16.xpose.msra.mxu0 0
      %1512 = vmatpush.bf16.xpose.msra.mxu0 0
      %1513 = vmatpush.bf16.xpose.msra.mxu0 0
      %1514 = vmatpush.bf16.xpose.msra.mxu0 0
      %1515 = vmatpush.bf16.xpose.msra.mxu0 %v1507
      %1516 = vmatpush.bf16.xpose.msra.mxu0 %v1504
      %1517 = vmatmul.bf16.gmra.mxu0 %v1498
      %v1518 = vpop.f32.mrf.mxu0
      %v1519 = vadd.f32 0.0, %v1518
      %v1520 = vpop.f32.mrf.mxu0
      %v1521 = vadd.f32 0.0, %v1520
      %1522 = vmatmul.bf16.gmra.mxu0 %v1501
      %v1523 = vpop.f32.mrf.mxu0
      %v1524 = vadd.f32 0.0, %v1523
      %v1525 = vpop.f32.mrf.mxu0
      %1526 = vdwg.mxu0
      %v1530 = vunpack.c.l.b16 %v1291
      %v1531 = vunpack.c.l.b16 %v1292
      %v1532 = vunpack.c.l.b16 %v1293
      %v1533 = vpack.c.b16 %v1531, %v1530
      %v1534 = vpack.c.b16 %v1532, %v1532
      %v1538 = vunpack.c.l.b16 %v1375
      %v1539 = vunpack.c.l.b16 %v1376
      %v1540 = vunpack.c.l.b16 %v1377
      %v1541 = vpack.c.b16 %v1539, %v1538
      %v1542 = vpack.c.b16 %v1540, %v1540
      %v1544 = vsel %vm1496, %v1533, 0
      %v1547 = vsel %vm1496, %v1534, 0
      %v1550 = vsel %vm1496, %v1541, 0
      %v1553 = vsel %vm1496, %v1542, 0
      %1555 = vmatpush.bf16.xpose.msra.mxu0 0
      %1556 = vmatpush.bf16.xpose.msra.mxu0 0
      %1557 = vmatpush.bf16.xpose.msra.mxu0 0
      %1558 = vmatpush.bf16.xpose.msra.mxu0 0
      %1559 = vmatpush.bf16.xpose.msra.mxu0 0
      %1560 = vmatpush.bf16.xpose.msra.mxu0 0
      %1561 = vmatpush.bf16.xpose.msra.mxu0 %v1553
      %1562 = vmatpush.bf16.xpose.msra.mxu0 %v1550
      %1563 = vmatmul.bf16.gmra.mxu0 %v1544
      %v1564 = vpop.f32.mrf.mxu0
      %v1565 = vadd.f32 0.0, %v1564
      %v1566 = vpop.f32.mrf.mxu0
      %v1567 = vadd.f32 0.0, %v1566
      %1568 = vmatmul.bf16.gmra.mxu0 %v1547
      %v1569 = vpop.f32.mrf.mxu0
      %v1570 = vadd.f32 0.0, %v1569
      %v1571 = vpop.f32.mrf.mxu0
      %1572 = vdwg.mxu0
      %v1576 = vunpack.c.l.b16 %v1294
      %v1577 = vunpack.c.l.b16 %v1295
      %v1578 = vunpack.c.l.b16 %v1296
      %v1579 = vpack.c.b16 %v1577, %v1576
      %v1580 = vpack.c.b16 %v1578, %v1578
      %v1584 = vunpack.c.l.b16 %v1378
      %v1585 = vunpack.c.l.b16 %v1379
      %v1586 = vunpack.c.l.b16 %v1380
      %v1587 = vpack.c.b16 %v1585, %v1584
      %v1588 = vpack.c.b16 %v1586, %v1586
      %v1590 = vsel %vm1496, %v1579, 0
      %v1593 = vsel %vm1496, %v1580, 0
      %v1596 = vsel %vm1496, %v1587, 0
      %v1599 = vsel %vm1496, %v1588, 0
      %1601 = vmatpush.bf16.xpose.msra.mxu0 0
      %1602 = vmatpush.bf16.xpose.msra.mxu0 0
      %1603 = vmatpush.bf16.xpose.msra.mxu0 0
      %1604 = vmatpush.bf16.xpose.msra.mxu0 0
      %1605 = vmatpush.bf16.xpose.msra.mxu0 0
      %1606 = vmatpush.bf16.xpose.msra.mxu0 0
      %1607 = vmatpush.bf16.xpose.msra.mxu0 %v1599
      %1608 = vmatpush.bf16.xpose.msra.mxu0 %v1596
      %1609 = vmatmul.bf16.gmra.mxu0 %v1590
      %v1610 = vpop.f32.mrf.mxu0
      %v1611 = vadd.f32 0.0, %v1610
      %v1612 = vpop.f32.mrf.mxu0
      %v1613 = vadd.f32 0.0, %v1612
      %1614 = vmatmul.bf16.gmra.mxu0 %v1593
      %v1615 = vpop.f32.mrf.mxu0
      %v1616 = vadd.f32 0.0, %v1615
      %v1617 = vpop.f32.mrf.mxu0
      %1618 = vdwg.mxu0
      %v1622 = vunpack.c.l.b16 %v1297
      %v1623 = vunpack.c.l.b16 %v1298
      %v1624 = vunpack.c.l.b16 %v1299
      %v1625 = vpack.c.b16 %v1623, %v1622
      %v1626 = vpack.c.b16 %v1624, %v1624
      %v1630 = vunpack.c.l.b16 %v1381
      %v1631 = vunpack.c.l.b16 %v1382
      %v1632 = vunpack.c.l.b16 %v1383
      %v1633 = vpack.c.b16 %v1631, %v1630
      %v1634 = vpack.c.b16 %v1632, %v1632
      %v1636 = vsel %vm1496, %v1625, 0
      %v1639 = vsel %vm1496, %v1626, 0
      %v1642 = vsel %vm1496, %v1633, 0
      %v1645 = vsel %vm1496, %v1634, 0
      %1647 = vmatpush.bf16.xpose.msra.mxu0 0
      %1648 = vmatpush.bf16.xpose.msra.mxu0 0
      %1649 = vmatpush.bf16.xpose.msra.mxu0 0
      %1650 = vmatpush.bf16.xpose.msra.mxu0 0
      %1651 = vmatpush.bf16.xpose.msra.mxu0 0
      %1652 = vmatpush.bf16.xpose.msra.mxu0 0
      %1653 = vmatpush.bf16.xpose.msra.mxu0 %v1645
      %1654 = vmatpush.bf16.xpose.msra.mxu0 %v1642
      %1655 = vmatmul.bf16.gmra.mxu0 %v1636
      %v1656 = vpop.f32.mrf.mxu0
      %v1657 = vadd.f32 0.0, %v1656
      %v1658 = vpop.f32.mrf.mxu0
      %v1659 = vadd.f32 0.0, %v1658
      %1660 = vmatmul.bf16.gmra.mxu0 %v1639
      %v1661 = vpop.f32.mrf.mxu0
      %v1662 = vadd.f32 0.0, %v1661
      %v1663 = vpop.f32.mrf.mxu0
      %1664 = vdwg.mxu0
      %v1668 = vunpack.c.l.b16 %v1300
      %v1669 = vunpack.c.l.b16 %v1301
      %v1670 = vunpack.c.l.b16 %v1302
      %v1671 = vpack.c.b16 %v1669, %v1668
      %v1672 = vpack.c.b16 %v1670, %v1670
      %v1676 = vunpack.c.l.b16 %v1384
      %v1677 = vunpack.c.l.b16 %v1385
      %v1678 = vunpack.c.l.b16 %v1386
      %v1679 = vpack.c.b16 %v1677, %v1676
      %v1680 = vpack.c.b16 %v1678, %v1678
      %v1682 = vsel %vm1496, %v1671, 0
      %v1685 = vsel %vm1496, %v1672, 0
      %v1688 = vsel %vm1496, %v1679, 0
      %v1691 = vsel %vm1496, %v1680, 0
      %1693 = vmatpush.bf16.xpose.msra.mxu0 0
      %1694 = vmatpush.bf16.xpose.msra.mxu0 0
      %1695 = vmatpush.bf16.xpose.msra.mxu0 0
      %1696 = vmatpush.bf16.xpose.msra.mxu0 0
      %1697 = vmatpush.bf16.xpose.msra.mxu0 0
      %1698 = vmatpush.bf16.xpose.msra.mxu0 0
      %1699 = vmatpush.bf16.xpose.msra.mxu0 %v1691
      %1700 = vmatpush.bf16.xpose.msra.mxu0 %v1688
      %1701 = vmatmul.bf16.gmra.mxu0 %v1682
      %v1702 = vpop.f32.mrf.mxu0
      %v1703 = vadd.f32 0.0, %v1702
      %v1704 = vpop.f32.mrf.mxu0
      %v1705 = vadd.f32 0.0, %v1704
      %1706 = vmatmul.bf16.gmra.mxu0 %v1685
      %v1707 = vpop.f32.mrf.mxu0
      %v1708 = vadd.f32 0.0, %v1707
      %v1709 = vpop.f32.mrf.mxu0
      %1710 = vdwg.mxu0
      %v1714 = vunpack.c.l.b16 %v1303
      %v1715 = vunpack.c.l.b16 %v1304
      %v1716 = vunpack.c.l.b16 %v1305
      %v1717 = vpack.c.b16 %v1715, %v1714
      %v1718 = vpack.c.b16 %v1716, %v1716
      %v1722 = vunpack.c.l.b16 %v1387
      %v1723 = vunpack.c.l.b16 %v1388
      %v1724 = vunpack.c.l.b16 %v1389
      %v1725 = vpack.c.b16 %v1723, %v1722
      %v1726 = vpack.c.b16 %v1724, %v1724
      %v1728 = vsel %vm1496, %v1717, 0
      %v1731 = vsel %vm1496, %v1718, 0
      %v1734 = vsel %vm1496, %v1725, 0
      %v1737 = vsel %vm1496, %v1726, 0
      %1739 = vmatpush.bf16.xpose.msra.mxu0 0
      %1740 = vmatpush.bf16.xpose.msra.mxu0 0
      %1741 = vmatpush.bf16.xpose.msra.mxu0 0
      %1742 = vmatpush.bf16.xpose.msra.mxu0 0
      %1743 = vmatpush.bf16.xpose.msra.mxu0 0
      %1744 = vmatpush.bf16.xpose.msra.mxu0 0
      %1745 = vmatpush.bf16.xpose.msra.mxu0 %v1737
      %1746 = vmatpush.bf16.xpose.msra.mxu0 %v1734
      %1747 = vmatmul.bf16.gmra.mxu0 %v1728
      %v1748 = vpop.f32.mrf.mxu0
      %v1749 = vadd.f32 0.0, %v1748
      %v1750 = vpop.f32.mrf.mxu0
      %v1751 = vadd.f32 0.0, %v1750
      %1752 = vmatmul.bf16.gmra.mxu0 %v1731
      %v1753 = vpop.f32.mrf.mxu0
      %v1754 = vadd.f32 0.0, %v1753
      %v1755 = vpop.f32.mrf.mxu0
      %1756 = vdwg.mxu0
      %v1760 = vunpack.c.l.b16 %v1306
      %v1761 = vunpack.c.l.b16 %v1307
      %v1762 = vunpack.c.l.b16 %v1308
      %v1763 = vpack.c.b16 %v1761, %v1760
      %v1764 = vpack.c.b16 %v1762, %v1762
      %v1768 = vunpack.c.l.b16 %v1390
      %v1769 = vunpack.c.l.b16 %v1391
      %v1770 = vunpack.c.l.b16 %v1392
      %v1771 = vpack.c.b16 %v1769, %v1768
      %v1772 = vpack.c.b16 %v1770, %v1770
      %v1774 = vsel %vm1496, %v1763, 0
      %v1777 = vsel %vm1496, %v1764, 0
      %v1780 = vsel %vm1496, %v1771, 0
      %v1783 = vsel %vm1496, %v1772, 0
      %1785 = vmatpush.bf16.xpose.msra.mxu0 0
      %1786 = vmatpush.bf16.xpose.msra.mxu0 0
      %1787 = vmatpush.bf16.xpose.msra.mxu0 0
      %1788 = vmatpush.bf16.xpose.msra.mxu0 0
      %1789 = vmatpush.bf16.xpose.msra.mxu0 0
      %1790 = vmatpush.bf16.xpose.msra.mxu0 0
      %1791 = vmatpush.bf16.xpose.msra.mxu0 %v1783
      %1792 = vmatpush.bf16.xpose.msra.mxu0 %v1780
      %1793 = vmatmul.bf16.gmra.mxu0 %v1774
      %v1794 = vpop.f32.mrf.mxu0
      %v1795 = vadd.f32 0.0, %v1794
      %v1796 = vpop.f32.mrf.mxu0
      %v1797 = vadd.f32 0.0, %v1796
      %1798 = vmatmul.bf16.gmra.mxu0 %v1777
      %v1799 = vpop.f32.mrf.mxu0
      %v1800 = vadd.f32 0.0, %v1799
      %v1801 = vpop.f32.mrf.mxu0
      %1802 = vdwg.mxu0
      %v1806 = vunpack.c.l.b16 %v1309
      %v1807 = vunpack.c.l.b16 %v1310
      %v1808 = vunpack.c.l.b16 %v1311
      %v1809 = vpack.c.b16 %v1807, %v1806
      %v1810 = vpack.c.b16 %v1808, %v1808
      %v1814 = vunpack.c.l.b16 %v1393
      %v1815 = vunpack.c.l.b16 %v1394
      %v1816 = vunpack.c.l.b16 %v1395
      %v1817 = vpack.c.b16 %v1815, %v1814
      %v1818 = vpack.c.b16 %v1816, %v1816
      %v1820 = vsel %vm1496, %v1809, 0
      %v1823 = vsel %vm1496, %v1810, 0
      %v1826 = vsel %vm1496, %v1817, 0
      %v1829 = vsel %vm1496, %v1818, 0
      %1831 = vmatpush.bf16.xpose.msra.mxu0 0
      %1832 = vmatpush.bf16.xpose.msra.mxu0 0
      %1833 = vmatpush.bf16.xpose.msra.mxu0 0
      %1834 = vmatpush.bf16.xpose.msra.mxu0 0
      %1835 = vmatpush.bf16.xpose.msra.mxu0 0
      %1836 = vmatpush.bf16.xpose.msra.mxu0 0
      %1837 = vmatpush.bf16.xpose.msra.mxu0 %v1829
      %1838 = vmatpush.bf16.xpose.msra.mxu0 %v1826
      %1839 = vmatmul.bf16.gmra.mxu0 %v1820
      %v1840 = vpop.f32.mrf.mxu0
      %v1841 = vadd.f32 0.0, %v1840
      %v1842 = vpop.f32.mrf.mxu0
      %v1843 = vadd.f32 0.0, %v1842
      %1844 = vmatmul.bf16.gmra.mxu0 %v1823
      %v1845 = vpop.f32.mrf.mxu0
      %v1846 = vadd.f32 0.0, %v1845
      %v1847 = vpop.f32.mrf.mxu0
      %1848 = vdwg.mxu0
      %v1849 = vmul.f32 %v1519, 0.17677669
      %v1850 = vmul.f32 %v1521, 0.17677669
      %v1851 = vmul.f32 %v1524, 0.17677669
      %v1852 = vmul.f32 %v1565, 0.17677669
      %v1853 = vmul.f32 %v1567, 0.17677669
      %v1854 = vmul.f32 %v1570, 0.17677669
      %v1855 = vmul.f32 %v1611, 0.17677669
      %v1856 = vmul.f32 %v1613, 0.17677669
      %v1857 = vmul.f32 %v1616, 0.17677669
      %v1858 = vmul.f32 %v1657, 0.17677669
      %v1859 = vmul.f32 %v1659, 0.17677669
      %v1860 = vmul.f32 %v1662, 0.17677669
      %v1861 = vmul.f32 %v1703, 0.17677669
      %v1862 = vmul.f32 %v1705, 0.17677669
      %v1863 = vmul.f32 %v1708, 0.17677669
      %v1864 = vmul.f32 %v1749, 0.17677669
      %v1865 = vmul.f32 %v1751, 0.17677669
      %v1866 = vmul.f32 %v1754, 0.17677669
      %v1867 = vmul.f32 %v1795, 0.17677669
      %v1868 = vmul.f32 %v1797, 0.17677669
      %v1869 = vmul.f32 %v1800, 0.17677669
      %v1870 = vmul.f32 %v1841, 0.17677669
      %v1871 = vmul.f32 %v1843, 0.17677669
      %v1872 = vmul.f32 %v1846, 0.17677669
      %v1873 = vlaneseq
      %v1874 = vand.u32 %v1873, 127
      %vm1875 = vcmp.lt.s32.totalorder %v1874, 17
      %v1876 = vsel %vm1875, 1, 0
      %vm1877 = vcmp.eq.s32.totalorder %v1876, 1
      %v1878 = vsel %vm1877, %v1849, -1e+30
      %v1879 = vsel %vm1877, %v1850, -1e+30
      %v1880 = vsel %vm1877, %v1851, -1e+30
      %v1881 = vsel %vm1877, %v1852, -1e+30
      %v1882 = vsel %vm1877, %v1853, -1e+30
      %v1883 = vsel %vm1877, %v1854, -1e+30
      %v1884 = vsel %vm1877, %v1855, -1e+30
      %v1885 = vsel %vm1877, %v1856, -1e+30
      %v1886 = vsel %vm1877, %v1857, -1e+30
      %v1887 = vsel %vm1877, %v1858, -1e+30
      %v1888 = vsel %vm1877, %v1859, -1e+30
      %v1889 = vsel %vm1877, %v1860, -1e+30
      %v1890 = vsel %vm1877, %v1861, -1e+30
      %v1891 = vsel %vm1877, %v1862, -1e+30
      %v1892 = vsel %vm1877, %v1863, -1e+30
      %v1893 = vsel %vm1877, %v1864, -1e+30
      %v1894 = vsel %vm1877, %v1865, -1e+30
      %v1895 = vsel %vm1877, %v1866, -1e+30
      %v1896 = vsel %vm1877, %v1867, -1e+30
      %v1897 = vsel %vm1877, %v1868, -1e+30
      %v1898 = vsel %vm1877, %v1869, -1e+30
      %v1899 = vsel %vm1877, %v1870, -1e+30
      %v1900 = vsel %vm1877, %v1871, -1e+30
      %v1901 = vsel %vm1877, %v1872, -1e+30
      %vm1902 = vcmask 195584
      %v1903 = vsel %vm1902, %v1878, -inf
      %1904 = vmax.xlane.f32.xlu0 %v1903
      %v1905 = vpop.xlane.xlu0 %1904
      %v1906 = vsel %vm1902, %v1879, -inf
      %1907 = vmax.xlane.f32.xlu0 %v1906
      %v1908 = vpop.xlane.xlu0 %1907
      %v1909 = vsel %vm1902, %v1880, -inf
      %1910 = vmax.xlane.f32.xlu0 %v1909
      %v1911 = vpop.xlane.xlu0 %1910
      %v1912 = vsel %vm1902, %v1881, -inf
      %1913 = vmax.xlane.f32.xlu0 %v1912
      %v1914 = vpop.xlane.xlu0 %1913
      %v1915 = vsel %vm1902, %v1882, -inf
      %1916 = vmax.xlane.f32.xlu0 %v1915
      %v1917 = vpop.xlane.xlu0 %1916
      %v1918 = vsel %vm1902, %v1883, -inf
      %1919 = vmax.xlane.f32.xlu0 %v1918
      %v1920 = vpop.xlane.xlu0 %1919
      %v1921 = vsel %vm1902, %v1884, -inf
      %1922 = vmax.xlane.f32.xlu0 %v1921
      %v1923 = vpop.xlane.xlu0 %1922
      %v1924 = vsel %vm1902, %v1885, -inf
      %1925 = vmax.xlane.f32.xlu0 %v1924
      %v1926 = vpop.xlane.xlu0 %1925
      %v1927 = vsel %vm1902, %v1886, -inf
      %1928 = vmax.xlane.f32.xlu0 %v1927
      %v1929 = vpop.xlane.xlu0 %1928
      %v1930 = vsel %vm1902, %v1887, -inf
      %1931 = vmax.xlane.f32.xlu0 %v1930
      %v1932 = vpop.xlane.xlu0 %1931
      %v1933 = vsel %vm1902, %v1888, -inf
      %1934 = vmax.xlane.f32.xlu0 %v1933
      %v1935 = vpop.xlane.xlu0 %1934
      %v1936 = vsel %vm1902, %v1889, -inf
      %1937 = vmax.xlane.f32.xlu0 %v1936
      %v1938 = vpop.xlane.xlu0 %1937
      %v1939 = vsel %vm1902, %v1890, -inf
      %1940 = vmax.xlane.f32.xlu0 %v1939
      %v1941 = vpop.xlane.xlu0 %1940
      %v1942 = vsel %vm1902, %v1891, -inf
      %1943 = vmax.xlane.f32.xlu0 %v1942
      %v1944 = vpop.xlane.xlu0 %1943
      %v1945 = vsel %vm1902, %v1892, -inf
      %1946 = vmax.xlane.f32.xlu0 %v1945
      %v1947 = vpop.xlane.xlu0 %1946
      %v1948 = vsel %vm1902, %v1893, -inf
      %1949 = vmax.xlane.f32.xlu0 %v1948
      %v1950 = vpop.xlane.xlu0 %1949
      %v1951 = vsel %vm1902, %v1894, -inf
      %1952 = vmax.xlane.f32.xlu0 %v1951
      %v1953 = vpop.xlane.xlu0 %1952
      %v1954 = vsel %vm1902, %v1895, -inf
      %1955 = vmax.xlane.f32.xlu0 %v1954
      %v1956 = vpop.xlane.xlu0 %1955
      %v1957 = vsel %vm1902, %v1896, -inf
      %1958 = vmax.xlane.f32.xlu0 %v1957
      %v1959 = vpop.xlane.xlu0 %1958
      %v1960 = vsel %vm1902, %v1897, -inf
      %1961 = vmax.xlane.f32.xlu0 %v1960
      %v1962 = vpop.xlane.xlu0 %1961
      %v1963 = vsel %vm1902, %v1898, -inf
      %1964 = vmax.xlane.f32.xlu0 %v1963
      %v1965 = vpop.xlane.xlu0 %1964
      %v1966 = vsel %vm1902, %v1899, -inf
      %1967 = vmax.xlane.f32.xlu0 %v1966
      %v1968 = vpop.xlane.xlu0 %1967
      %v1969 = vsel %vm1902, %v1900, -inf
      %1970 = vmax.xlane.f32.xlu0 %v1969
      %v1971 = vpop.xlane.xlu0 %1970
      %v1972 = vsel %vm1902, %v1901, -inf
      %1973 = vmax.xlane.f32.xlu0 %v1972
      %v1974 = vpop.xlane.xlu0 %1973
      %v1975 = vsub.f32 %v1878, %v1905
      %v1976 = vsub.f32 %v1879, %v1908
      %v1977 = vsub.f32 %v1880, %v1911
      %v1978 = vsub.f32 %v1881, %v1914
      %v1979 = vsub.f32 %v1882, %v1917
      %v1980 = vsub.f32 %v1883, %v1920
      %v1981 = vsub.f32 %v1884, %v1923
      %v1982 = vsub.f32 %v1885, %v1926
      %v1983 = vsub.f32 %v1886, %v1929
      %v1984 = vsub.f32 %v1887, %v1932
      %v1985 = vsub.f32 %v1888, %v1935
      %v1986 = vsub.f32 %v1889, %v1938
      %v1987 = vsub.f32 %v1890, %v1941
      %v1988 = vsub.f32 %v1891, %v1944
      %v1989 = vsub.f32 %v1892, %v1947
      %v1990 = vsub.f32 %v1893, %v1950
      %v1991 = vsub.f32 %v1894, %v1953
      %v1992 = vsub.f32 %v1895, %v1956
      %v1993 = vsub.f32 %v1896, %v1959
      %v1994 = vsub.f32 %v1897, %v1962
      %v1995 = vsub.f32 %v1898, %v1965
      %v1996 = vsub.f32 %v1899, %v1968
      %v1997 = vsub.f32 %v1900, %v1971
      %v1998 = vsub.f32 %v1901, %v1974
      %v1999 = vmul.f32 %v1975, 1.442695
      %v2000 = vpow.pop %v1999
      %v2001 = vmul.f32 %v1976, 1.442695
      %v2002 = vpow.pop %v2001
      %v2003 = vmul.f32 %v1977, 1.442695
      %v2004 = vpow.pop %v2003
      %v2005 = vmul.f32 %v1978, 1.442695
      %v2006 = vpow.pop %v2005
      %v2007 = vmul.f32 %v1979, 1.442695
      %v2008 = vpow.pop %v2007
      %v2009 = vmul.f32 %v1980, 1.442695
      %v2010 = vpow.pop %v2009
      %v2011 = vmul.f32 %v1981, 1.442695
      %v2012 = vpow.pop %v2011
      %v2013 = vmul.f32 %v1982, 1.442695
      %v2014 = vpow.pop %v2013
      %v2015 = vmul.f32 %v1983, 1.442695
      %v2016 = vpow.pop %v2015
      %v2017 = vmul.f32 %v1984, 1.442695
      %v2018 = vpow.pop %v2017
      %v2019 = vmul.f32 %v1985, 1.442695
      %v2020 = vpow.pop %v2019
      %v2021 = vmul.f32 %v1986, 1.442695
      %v2022 = vpow.pop %v2021
      %v2023 = vmul.f32 %v1987, 1.442695
      %v2024 = vpow.pop %v2023
      %v2025 = vmul.f32 %v1988, 1.442695
      %v2026 = vpow.pop %v2025
      %v2027 = vmul.f32 %v1989, 1.442695
      %v2028 = vpow.pop %v2027
      %v2029 = vmul.f32 %v1990, 1.442695
      %v2030 = vpow.pop %v2029
      %v2031 = vmul.f32 %v1991, 1.442695
      %v2032 = vpow.pop %v2031
      %v2033 = vmul.f32 %v1992, 1.442695
      %v2034 = vpow.pop %v2033
      %v2035 = vmul.f32 %v1993, 1.442695
      %v2036 = vpow.pop %v2035
      %v2037 = vmul.f32 %v1994, 1.442695
      %v2038 = vpow.pop %v2037
      %v2039 = vmul.f32 %v1995, 1.442695
      %v2040 = vpow.pop %v2039
      %v2041 = vmul.f32 %v1996, 1.442695
      %v2042 = vpow.pop %v2041
      %v2043 = vmul.f32 %v1997, 1.442695
      %v2044 = vpow.pop %v2043
      %v2045 = vmul.f32 %v1998, 1.442695
      %v2046 = vpow.pop %v2045
      %v2047 = vsel %vm1902, %v2000, 0.0
      %2048 = vadd.xlane.f32.xlu0 %v2047
      %v2049 = vpop.xlane.xlu0 %2048
      %v2050 = vsel %vm1902, %v2002, 0.0
      %2051 = vadd.xlane.f32.xlu0 %v2050
      %v2052 = vpop.xlane.xlu0 %2051
      %v2053 = vsel %vm1902, %v2004, 0.0
      %2054 = vadd.xlane.f32.xlu0 %v2053
      %v2055 = vpop.xlane.xlu0 %2054
      %v2056 = vsel %vm1902, %v2006, 0.0
      %2057 = vadd.xlane.f32.xlu0 %v2056
      %v2058 = vpop.xlane.xlu0 %2057
      %v2059 = vsel %vm1902, %v2008, 0.0
      %2060 = vadd.xlane.f32.xlu0 %v2059
      %v2061 = vpop.xlane.xlu0 %2060
      %v2062 = vsel %vm1902, %v2010, 0.0
      %2063 = vadd.xlane.f32.xlu0 %v2062
      %v2064 = vpop.xlane.xlu0 %2063
      %v2065 = vsel %vm1902, %v2012, 0.0
      %2066 = vadd.xlane.f32.xlu0 %v2065
      %v2067 = vpop.xlane.xlu0 %2066
      %v2068 = vsel %vm1902, %v2014, 0.0
      %2069 = vadd.xlane.f32.xlu0 %v2068
      %v2070 = vpop.xlane.xlu0 %2069
      %v2071 = vsel %vm1902, %v2016, 0.0
      %2072 = vadd.xlane.f32.xlu0 %v2071
      %v2073 = vpop.xlane.xlu0 %2072
      %v2074 = vsel %vm1902, %v2018, 0.0
      %2075 = vadd.xlane.f32.xlu0 %v2074
      %v2076 = vpop.xlane.xlu0 %2075
      %v2077 = vsel %vm1902, %v2020, 0.0
      %2078 = vadd.xlane.f32.xlu0 %v2077
      %v2079 = vpop.xlane.xlu0 %2078
      %v2080 = vsel %vm1902, %v2022, 0.0
      %2081 = vadd.xlane.f32.xlu0 %v2080
      %v2082 = vpop.xlane.xlu0 %2081
      %v2083 = vsel %vm1902, %v2024, 0.0
      %2084 = vadd.xlane.f32.xlu0 %v2083
      %v2085 = vpop.xlane.xlu0 %2084
      %v2086 = vsel %vm1902, %v2026, 0.0
      %2087 = vadd.xlane.f32.xlu0 %v2086
      %v2088 = vpop.xlane.xlu0 %2087
      %v2089 = vsel %vm1902, %v2028, 0.0
      %2090 = vadd.xlane.f32.xlu0 %v2089
      %v2091 = vpop.xlane.xlu0 %2090
      %v2092 = vsel %vm1902, %v2030, 0.0
      %2093 = vadd.xlane.f32.xlu0 %v2092
      %v2094 = vpop.xlane.xlu0 %2093
      %v2095 = vsel %vm1902, %v2032, 0.0
      %2096 = vadd.xlane.f32.xlu0 %v2095
      %v2097 = vpop.xlane.xlu0 %2096
      %v2098 = vsel %vm1902, %v2034, 0.0
      %2099 = vadd.xlane.f32.xlu0 %v2098
      %v2100 = vpop.xlane.xlu0 %2099
      %v2101 = vsel %vm1902, %v2036, 0.0
      %2102 = vadd.xlane.f32.xlu0 %v2101
      %v2103 = vpop.xlane.xlu0 %2102
      %v2104 = vsel %vm1902, %v2038, 0.0
      %2105 = vadd.xlane.f32.xlu0 %v2104
      %v2106 = vpop.xlane.xlu0 %2105
      %v2107 = vsel %vm1902, %v2040, 0.0
      %2108 = vadd.xlane.f32.xlu0 %v2107
      %v2109 = vpop.xlane.xlu0 %2108
      %v2110 = vsel %vm1902, %v2042, 0.0
      %2111 = vadd.xlane.f32.xlu0 %v2110
      %v2112 = vpop.xlane.xlu0 %2111
      %v2113 = vsel %vm1902, %v2044, 0.0
      %2114 = vadd.xlane.f32.xlu0 %v2113
      %v2115 = vpop.xlane.xlu0 %2114
      %v2116 = vsel %vm1902, %v2046, 0.0
      %2117 = vadd.xlane.f32.xlu0 %v2116
      %v2118 = vpop.xlane.xlu0 %2117
      %v2119 = vrcp.pop %v2049
      %v2120 = vrcp.pop %v2052
      %v2121 = vrcp.pop %v2055
      %v2122 = vrcp.pop %v2058
      %v2123 = vrcp.pop %v2061
      %v2124 = vrcp.pop %v2064
      %v2125 = vrcp.pop %v2067
      %v2126 = vrcp.pop %v2070
      %v2127 = vrcp.pop %v2073
      %v2128 = vrcp.pop %v2076
      %v2129 = vrcp.pop %v2079
      %v2130 = vrcp.pop %v2082
      %v2131 = vrcp.pop %v2085
      %v2132 = vrcp.pop %v2088
      %v2133 = vrcp.pop %v2091
      %v2134 = vrcp.pop %v2094
      %v2135 = vrcp.pop %v2097
      %v2136 = vrcp.pop %v2100
      %v2137 = vrcp.pop %v2103
      %v2138 = vrcp.pop %v2106
      %v2139 = vrcp.pop %v2109
      %v2140 = vrcp.pop %v2112
      %v2141 = vrcp.pop %v2115
      %v2142 = vrcp.pop %v2118
      %v2143 = vmul.f32 %v2000, %v2119
      %v2144 = vmul.f32 %v2002, %v2120
      %v2145 = vmul.f32 %v2004, %v2121
      %v2146 = vmul.f32 %v2006, %v2122
      %v2147 = vmul.f32 %v2008, %v2123
      %v2148 = vmul.f32 %v2010, %v2124
      %v2149 = vmul.f32 %v2012, %v2125
      %v2150 = vmul.f32 %v2014, %v2126
      %v2151 = vmul.f32 %v2016, %v2127
      %v2152 = vmul.f32 %v2018, %v2128
      %v2153 = vmul.f32 %v2020, %v2129
      %v2154 = vmul.f32 %v2022, %v2130
      %v2155 = vmul.f32 %v2024, %v2131
      %v2156 = vmul.f32 %v2026, %v2132
      %v2157 = vmul.f32 %v2028, %v2133
      %v2158 = vmul.f32 %v2030, %v2134
      %v2159 = vmul.f32 %v2032, %v2135
      %v2160 = vmul.f32 %v2034, %v2136
      %v2161 = vmul.f32 %v2036, %v2137
      %v2162 = vmul.f32 %v2038, %v2138
      %v2163 = vmul.f32 %v2040, %v2139
      %v2164 = vmul.f32 %v2042, %v2140
      %v2165 = vmul.f32 %v2044, %v2141
      %v2166 = vmul.f32 %v2046, %v2142
      %v2167 = vpack.c.bf16 %v2143, %v2143
      %v2168 = vpack.c.bf16 %v2144, %v2144
      %v2169 = vpack.c.bf16 %v2145, %v2145
      %v2170 = vpack.c.bf16 %v2146, %v2146
      %v2171 = vpack.c.bf16 %v2147, %v2147
      %v2172 = vpack.c.bf16 %v2148, %v2148
      %v2173 = vpack.c.bf16 %v2149, %v2149
      %v2174 = vpack.c.bf16 %v2150, %v2150
      %v2175 = vpack.c.bf16 %v2151, %v2151
      %v2176 = vpack.c.bf16 %v2152, %v2152
      %v2177 = vpack.c.bf16 %v2153, %v2153
      %v2178 = vpack.c.bf16 %v2154, %v2154
      %v2179 = vpack.c.bf16 %v2155, %v2155
      %v2180 = vpack.c.bf16 %v2156, %v2156
      %v2181 = vpack.c.bf16 %v2157, %v2157
      %v2182 = vpack.c.bf16 %v2158, %v2158
      %v2183 = vpack.c.bf16 %v2159, %v2159
      %v2184 = vpack.c.bf16 %v2160, %v2160
      %v2185 = vpack.c.bf16 %v2161, %v2161
      %v2186 = vpack.c.bf16 %v2162, %v2162
      %v2187 = vpack.c.bf16 %v2163, %v2163
      %v2188 = vpack.c.bf16 %v2164, %v2164
      %v2189 = vpack.c.bf16 %v2165, %v2165
      %v2190 = vpack.c.bf16 %v2166, %v2166
      %v2194 = vunpack.c.l.b16 %v2167
      %v2195 = vunpack.c.l.b16 %v2168
      %v2196 = vunpack.c.l.b16 %v2169
      %v2197 = vpack.c.b16 %v2195, %v2194
      %v2198 = vpack.c.b16 %v2196, %v2196
      %v2202 = vunpack.c.l.b16 %v1456
      %v2203 = vunpack.c.l.b16 %v1457
      %v2204 = vunpack.c.l.b16 %v1458
      %v2205 = vpack.c.b16 %v2203, %v2202
      %v2206 = vpack.c.b16 %v2204, %v2204
      %v2209 = vsel %vm1902, %v2197, 0
      %v2212 = vsel %vm1902, %v2198, 0
      %vm2214 = vcmask 1043456
      %v2216 = vsel %vm2214, %v2206, 0
      %2218 = vmatpush.bf16.msra.mxu0 0
      %2219 = vmatpush.bf16.msra.mxu0 0
      %2220 = vmatpush.bf16.msra.mxu0 0
      %2221 = vmatpush.bf16.msra.mxu0 0
      %2222 = vmatpush.bf16.msra.mxu0 0
      %2223 = vmatpush.bf16.msra.mxu0 0
      %2224 = vmatpush.bf16.msra.mxu0 %v2216
      %2225 = vmatpush.bf16.msra.mxu0 %v2205
      %2226 = vmatmul.bf16.gmra.mxu0 %v2209
      %v2227 = vpop.f32.mrf.mxu0
      %v2228 = vadd.f32 0.0, %v2227
      %v2229 = vpop.f32.mrf.mxu0
      %v2230 = vadd.f32 0.0, %v2229
      %2231 = vmatmul.bf16.gmra.mxu0 %v2212
      %v2232 = vpop.f32.mrf.mxu0
      %v2233 = vadd.f32 0.0, %v2232
      %v2234 = vpop.f32.mrf.mxu0
      %2235 = vdwg.mxu0
      %v2239 = vunpack.c.l.b16 %v2170
      %v2240 = vunpack.c.l.b16 %v2171
      %v2241 = vunpack.c.l.b16 %v2172
      %v2242 = vpack.c.b16 %v2240, %v2239
      %v2243 = vpack.c.b16 %v2241, %v2241
      %v2247 = vunpack.c.l.b16 %v1459
      %v2248 = vunpack.c.l.b16 %v1460
      %v2249 = vunpack.c.l.b16 %v1461
      %v2250 = vpack.c.b16 %v2248, %v2247
      %v2251 = vpack.c.b16 %v2249, %v2249
      %v2254 = vsel %vm1902, %v2242, 0
      %v2257 = vsel %vm1902, %v2243, 0
      %v2260 = vsel %vm2214, %v2251, 0
      %2262 = vmatpush.bf16.msra.mxu0 0
      %2263 = vmatpush.bf16.msra.mxu0 0
      %2264 = vmatpush.bf16.msra.mxu0 0
      %2265 = vmatpush.bf16.msra.mxu0 0
      %2266 = vmatpush.bf16.msra.mxu0 0
      %2267 = vmatpush.bf16.msra.mxu0 0
      %2268 = vmatpush.bf16.msra.mxu0 %v2260
      %2269 = vmatpush.bf16.msra.mxu0 %v2250
      %2270 = vmatmul.bf16.gmra.mxu0 %v2254
      %v2271 = vpop.f32.mrf.mxu0
      %v2272 = vadd.f32 0.0, %v2271
      %v2273 = vpop.f32.mrf.mxu0
      %v2274 = vadd.f32 0.0, %v2273
      %2275 = vmatmul.bf16.gmra.mxu0 %v2257
      %v2276 = vpop.f32.mrf.mxu0
      %v2277 = vadd.f32 0.0, %v2276
      %v2278 = vpop.f32.mrf.mxu0
      %2279 = vdwg.mxu0
      %v2283 = vunpack.c.l.b16 %v2173
      %v2284 = vunpack.c.l.b16 %v2174
      %v2285 = vunpack.c.l.b16 %v2175
      %v2286 = vpack.c.b16 %v2284, %v2283
      %v2287 = vpack.c.b16 %v2285, %v2285
      %v2291 = vunpack.c.l.b16 %v1462
      %v2292 = vunpack.c.l.b16 %v1463
      %v2293 = vunpack.c.l.b16 %v1464
      %v2294 = vpack.c.b16 %v2292, %v2291
      %v2295 = vpack.c.b16 %v2293, %v2293
      %v2298 = vsel %vm1902, %v2286, 0
      %v2301 = vsel %vm1902, %v2287, 0
      %v2304 = vsel %vm2214, %v2295, 0
      %2306 = vmatpush.bf16.msra.mxu0 0
      %2307 = vmatpush.bf16.msra.mxu0 0
      %2308 = vmatpush.bf16.msra.mxu0 0
      %2309 = vmatpush.bf16.msra.mxu0 0
      %2310 = vmatpush.bf16.msra.mxu0 0
      %2311 = vmatpush.bf16.msra.mxu0 0
      %2312 = vmatpush.bf16.msra.mxu0 %v2304
      %2313 = vmatpush.bf16.msra.mxu0 %v2294
      %2314 = vmatmul.bf16.gmra.mxu0 %v2298
      %v2315 = vpop.f32.mrf.mxu0
      %v2316 = vadd.f32 0.0, %v2315
      %v2317 = vpop.f32.mrf.mxu0
      %v2318 = vadd.f32 0.0, %v2317
      %2319 = vmatmul.bf16.gmra.mxu0 %v2301
      %v2320 = vpop.f32.mrf.mxu0
      %v2321 = vadd.f32 0.0, %v2320
      %v2322 = vpop.f32.mrf.mxu0
      %2323 = vdwg.mxu0
      %v2327 = vunpack.c.l.b16 %v2176
      %v2328 = vunpack.c.l.b16 %v2177
      %v2329 = vunpack.c.l.b16 %v2178
      %v2330 = vpack.c.b16 %v2328, %v2327
      %v2331 = vpack.c.b16 %v2329, %v2329
      %v2335 = vunpack.c.l.b16 %v1465
      %v2336 = vunpack.c.l.b16 %v1466
      %v2337 = vunpack.c.l.b16 %v1467
      %v2338 = vpack.c.b16 %v2336, %v2335
      %v2339 = vpack.c.b16 %v2337, %v2337
      %v2342 = vsel %vm1902, %v2330, 0
      %v2345 = vsel %vm1902, %v2331, 0
      %v2348 = vsel %vm2214, %v2339, 0
      %2350 = vmatpush.bf16.msra.mxu0 0
      %2351 = vmatpush.bf16.msra.mxu0 0
      %2352 = vmatpush.bf16.msra.mxu0 0
      %2353 = vmatpush.bf16.msra.mxu0 0
      %2354 = vmatpush.bf16.msra.mxu0 0
      %2355 = vmatpush.bf16.msra.mxu0 0
      %2356 = vmatpush.bf16.msra.mxu0 %v2348
      %2357 = vmatpush.bf16.msra.mxu0 %v2338
      %2358 = vmatmul.bf16.gmra.mxu0 %v2342
      %v2359 = vpop.f32.mrf.mxu0
      %v2360 = vadd.f32 0.0, %v2359
      %v2361 = vpop.f32.mrf.mxu0
      %v2362 = vadd.f32 0.0, %v2361
      %2363 = vmatmul.bf16.gmra.mxu0 %v2345
      %v2364 = vpop.f32.mrf.mxu0
      %v2365 = vadd.f32 0.0, %v2364
      %v2366 = vpop.f32.mrf.mxu0
      %2367 = vdwg.mxu0
      %v2371 = vunpack.c.l.b16 %v2179
      %v2372 = vunpack.c.l.b16 %v2180
      %v2373 = vunpack.c.l.b16 %v2181
      %v2374 = vpack.c.b16 %v2372, %v2371
      %v2375 = vpack.c.b16 %v2373, %v2373
      %v2379 = vunpack.c.l.b16 %v1468
      %v2380 = vunpack.c.l.b16 %v1469
      %v2381 = vunpack.c.l.b16 %v1470
      %v2382 = vpack.c.b16 %v2380, %v2379
      %v2383 = vpack.c.b16 %v2381, %v2381
      %v2386 = vsel %vm1902, %v2374, 0
      %v2389 = vsel %vm1902, %v2375, 0
      %v2392 = vsel %vm2214, %v2383, 0
      %2394 = vmatpush.bf16.msra.mxu0 0
      %2395 = vmatpush.bf16.msra.mxu0 0
      %2396 = vmatpush.bf16.msra.mxu0 0
      %2397 = vmatpush.bf16.msra.mxu0 0
      %2398 = vmatpush.bf16.msra.mxu0 0
      %2399 = vmatpush.bf16.msra.mxu0 0
      %2400 = vmatpush.bf16.msra.mxu0 %v2392
      %2401 = vmatpush.bf16.msra.mxu0 %v2382
      %2402 = vmatmul.bf16.gmra.mxu0 %v2386
      %v2403 = vpop.f32.mrf.mxu0
      %v2404 = vadd.f32 0.0, %v2403
      %v2405 = vpop.f32.mrf.mxu0
      %v2406 = vadd.f32 0.0, %v2405
      %2407 = vmatmul.bf16.gmra.mxu0 %v2389
      %v2408 = vpop.f32.mrf.mxu0
      %v2409 = vadd.f32 0.0, %v2408
      %v2410 = vpop.f32.mrf.mxu0
      %2411 = vdwg.mxu0
      %v2415 = vunpack.c.l.b16 %v2182
      %v2416 = vunpack.c.l.b16 %v2183
      %v2417 = vunpack.c.l.b16 %v2184
      %v2418 = vpack.c.b16 %v2416, %v2415
      %v2419 = vpack.c.b16 %v2417, %v2417
      %v2423 = vunpack.c.l.b16 %v1471
      %v2424 = vunpack.c.l.b16 %v1472
      %v2425 = vunpack.c.l.b16 %v1473
      %v2426 = vpack.c.b16 %v2424, %v2423
      %v2427 = vpack.c.b16 %v2425, %v2425
      %v2430 = vsel %vm1902, %v2418, 0
      %v2433 = vsel %vm1902, %v2419, 0
      %v2436 = vsel %vm2214, %v2427, 0
      %2438 = vmatpush.bf16.msra.mxu0 0
      %2439 = vmatpush.bf16.msra.mxu0 0
      %2440 = vmatpush.bf16.msra.mxu0 0
      %2441 = vmatpush.bf16.msra.mxu0 0
      %2442 = vmatpush.bf16.msra.mxu0 0
      %2443 = vmatpush.bf16.msra.mxu0 0
      %2444 = vmatpush.bf16.msra.mxu0 %v2436
      %2445 = vmatpush.bf16.msra.mxu0 %v2426
      %2446 = vmatmul.bf16.gmra.mxu0 %v2430
      %v2447 = vpop.f32.mrf.mxu0
      %v2448 = vadd.f32 0.0, %v2447
      %v2449 = vpop.f32.mrf.mxu0
      %v2450 = vadd.f32 0.0, %v2449
      %2451 = vmatmul.bf16.gmra.mxu0 %v2433
      %v2452 = vpop.f32.mrf.mxu0
      %v2453 = vadd.f32 0.0, %v2452
      %v2454 = vpop.f32.mrf.mxu0
      %2455 = vdwg.mxu0
      %v2459 = vunpack.c.l.b16 %v2185
      %v2460 = vunpack.c.l.b16 %v2186
      %v2461 = vunpack.c.l.b16 %v2187
      %v2462 = vpack.c.b16 %v2460, %v2459
      %v2463 = vpack.c.b16 %v2461, %v2461
      %v2467 = vunpack.c.l.b16 %v1474
      %v2468 = vunpack.c.l.b16 %v1475
      %v2469 = vunpack.c.l.b16 %v1476
      %v2470 = vpack.c.b16 %v2468, %v2467
      %v2471 = vpack.c.b16 %v2469, %v2469
      %v2474 = vsel %vm1902, %v2462, 0
      %v2477 = vsel %vm1902, %v2463, 0
      %v2480 = vsel %vm2214, %v2471, 0
      %2482 = vmatpush.bf16.msra.mxu0 0
      %2483 = vmatpush.bf16.msra.mxu0 0
      %2484 = vmatpush.bf16.msra.mxu0 0
      %2485 = vmatpush.bf16.msra.mxu0 0
      %2486 = vmatpush.bf16.msra.mxu0 0
      %2487 = vmatpush.bf16.msra.mxu0 0
      %2488 = vmatpush.bf16.msra.mxu0 %v2480
      %2489 = vmatpush.bf16.msra.mxu0 %v2470
      %2490 = vmatmul.bf16.gmra.mxu0 %v2474
      %v2491 = vpop.f32.mrf.mxu0
      %v2492 = vadd.f32 0.0, %v2491
      %v2493 = vpop.f32.mrf.mxu0
      %v2494 = vadd.f32 0.0, %v2493
      %2495 = vmatmul.bf16.gmra.mxu0 %v2477
      %v2496 = vpop.f32.mrf.mxu0
      %v2497 = vadd.f32 0.0, %v2496
      %v2498 = vpop.f32.mrf.mxu0
      %2499 = vdwg.mxu0
      %v2503 = vunpack.c.l.b16 %v2188
      %v2504 = vunpack.c.l.b16 %v2189
      %v2505 = vunpack.c.l.b16 %v2190
      %v2506 = vpack.c.b16 %v2504, %v2503
      %v2507 = vpack.c.b16 %v2505, %v2505
      %v2511 = vunpack.c.l.b16 %v1477
      %v2512 = vunpack.c.l.b16 %v1478
      %v2513 = vunpack.c.l.b16 %v1479
      %v2514 = vpack.c.b16 %v2512, %v2511
      %v2515 = vpack.c.b16 %v2513, %v2513
      %v2518 = vsel %vm1902, %v2506, 0
      %v2521 = vsel %vm1902, %v2507, 0
      %v2524 = vsel %vm2214, %v2515, 0
      %2526 = vmatpush.bf16.msra.mxu0 0
      %2527 = vmatpush.bf16.msra.mxu0 0
      %2528 = vmatpush.bf16.msra.mxu0 0
      %2529 = vmatpush.bf16.msra.mxu0 0
      %2530 = vmatpush.bf16.msra.mxu0 0
      %2531 = vmatpush.bf16.msra.mxu0 0
      %2532 = vmatpush.bf16.msra.mxu0 %v2524
      %2533 = vmatpush.bf16.msra.mxu0 %v2514
      %2534 = vmatmul.bf16.gmra.mxu0 %v2518
      %v2535 = vpop.f32.mrf.mxu0
      %v2536 = vadd.f32 0.0, %v2535
      %v2537 = vpop.f32.mrf.mxu0
      %v2538 = vadd.f32 0.0, %v2537
      %2539 = vmatmul.bf16.gmra.mxu0 %v2521
      %v2540 = vpop.f32.mrf.mxu0
      %v2541 = vadd.f32 0.0, %v2540
      %v2542 = vpop.f32.mrf.mxu0
      %2543 = vdwg.mxu0
      %2550 = vrot.lane.b32.xlu0 %v2316, 32
      %v2551 = vpop.permute.xlu0 %2550
      %2552 = vrot.lane.b32.xlu0 %v2318, 32
      %v2553 = vpop.permute.xlu0 %2552
      %2554 = vrot.lane.b32.xlu0 %v2321, 32
      %v2555 = vpop.permute.xlu0 %2554
      %2556 = vrot.lane.b32.xlu0 %v2360, 32
      %v2557 = vpop.permute.xlu0 %2556
      %2558 = vrot.lane.b32.xlu0 %v2362, 32
      %v2559 = vpop.permute.xlu0 %2558
      %2560 = vrot.lane.b32.xlu0 %v2365, 32
      %v2561 = vpop.permute.xlu0 %2560
      %2574 = vrot.lane.b32.xlu0 %v2404, 64
      %v2575 = vpop.permute.xlu0 %2574
      %2576 = vrot.lane.b32.xlu0 %v2406, 64
      %v2577 = vpop.permute.xlu0 %2576
      %2578 = vrot.lane.b32.xlu0 %v2409, 64
      %v2579 = vpop.permute.xlu0 %2578
      %2580 = vrot.lane.b32.xlu0 %v2448, 64
      %v2581 = vpop.permute.xlu0 %2580
      %2582 = vrot.lane.b32.xlu0 %v2450, 64
      %v2583 = vpop.permute.xlu0 %2582
      %2584 = vrot.lane.b32.xlu0 %v2453, 64
      %v2585 = vpop.permute.xlu0 %2584
      %2598 = vrot.lane.b32.xlu0 %v2492, 96
      %v2599 = vpop.permute.xlu0 %2598
      %2600 = vrot.lane.b32.xlu0 %v2494, 96
      %v2601 = vpop.permute.xlu0 %2600
      %2602 = vrot.lane.b32.xlu0 %v2497, 96
      %v2603 = vpop.permute.xlu0 %2602
      %2604 = vrot.lane.b32.xlu0 %v2536, 96
      %v2605 = vpop.permute.xlu0 %2604
      %2606 = vrot.lane.b32.xlu0 %v2538, 96
      %v2607 = vpop.permute.xlu0 %2606
      %2608 = vrot.lane.b32.xlu0 %v2541, 96
      %v2609 = vpop.permute.xlu0 %2608
      %v2616 = vsel %vm1496, %v2228, %v2551
      %v2617 = vsel %vm1496, %v2230, %v2553
      %v2618 = vsel %vm1496, %v2233, %v2555
      %v2619 = vsel %vm1496, %v2272, %v2557
      %v2620 = vsel %vm1496, %v2274, %v2559
      %v2621 = vsel %vm1496, %v2277, %v2561
      %vm2622 = vcmask 523264
      %v2623 = vsel %vm2622, %v2616, %v2575
      %v2624 = vsel %vm2622, %v2617, %v2577
      %v2625 = vsel %vm2622, %v2618, %v2579
      %v2626 = vsel %vm2622, %v2619, %v2581
      %v2627 = vsel %vm2622, %v2620, %v2583
      %v2628 = vsel %vm2622, %v2621, %v2585
      %vm2629 = vcmask 785408
      %v2630 = vsel %vm2629, %v2623, %v2599
      %v2631 = vsel %vm2629, %v2624, %v2601
      %v2632 = vsel %vm2629, %v2625, %v2603
      %v2633 = vsel %vm2629, %v2626, %v2605
      %v2634 = vsel %vm2629, %v2627, %v2607
      %v2635 = vsel %vm2629, %v2628, %v2609
      %v2636 = vpack.c.bf16 %v2631, %v2630
      %v2637 = vpack.c.bf16 %v2633, %v2632
      %v2638 = vpack.c.bf16 %v2635, %v2634
      %v2639 = vld [vmem:[%s738] sm:$0xf]
      %v2640 = vld [vmem:[%s738 + $0x4] sm:$0xf]
      %v2641 = vld [vmem:[%s738 + $0x8] sm:$0xf]
      %v2642 = vld [vmem:[%s738 + $0xc] sm:$0xf]
      %v2643 = vld [vmem:[%s738 + $0x10] sm:$0xf]
      %v2644 = vld [vmem:[%s738 + $0x14] sm:$0xf]
      %v2645 = vld [vmem:[%s738 + $0x18] sm:$0xf]
      %v2646 = vld [vmem:[%s738 + $0x1c] sm:$0xf]
      %v2647 = vld [vmem:[%s738 + $0x20] sm:$0xf]
      %v2648 = vld [vmem:[%s738 + $0x24] sm:$0xf]
      %v2649 = vld [vmem:[%s738 + $0x28] sm:$0xf]
      %v2650 = vld [vmem:[%s738 + $0x2c] sm:$0xf]
      %v2651 = vld [vmem:[%s738 + $0x30] sm:$0xf]
      %v2652 = vld [vmem:[%s738 + $0x34] sm:$0xf]
      %v2653 = vld [vmem:[%s738 + $0x38] sm:$0xf]
      %v2654 = vld [vmem:[%s738 + $0x3c] sm:$0xf]
      %v2671 = vunpack.c.l.b16 %v2639
      %v2672 = vunpack.c.l.b16 %v2640
      %v2673 = vunpack.c.l.b16 %v2641
      %v2674 = vunpack.c.l.b16 %v2642
      %v2675 = vunpack.c.l.b16 %v2643
      %v2676 = vunpack.c.l.b16 %v2644
      %v2677 = vunpack.c.l.b16 %v2645
      %v2678 = vunpack.c.l.b16 %v2646
      %v2679 = vunpack.c.l.b16 %v2647
      %v2680 = vunpack.c.l.b16 %v2648
      %v2681 = vunpack.c.l.b16 %v2649
      %v2682 = vunpack.c.l.b16 %v2650
      %v2683 = vunpack.c.l.b16 %v2651
      %v2684 = vunpack.c.l.b16 %v2652
      %v2685 = vunpack.c.l.b16 %v2653
      %v2686 = vunpack.c.l.b16 %v2654
      %v2687 = vpack.c.b16 %v2672, %v2671
      %v2688 = vpack.c.b16 %v2674, %v2673
      %v2689 = vpack.c.b16 %v2676, %v2675
      %v2690 = vpack.c.b16 %v2678, %v2677
      %v2691 = vpack.c.b16 %v2680, %v2679
      %v2692 = vpack.c.b16 %v2682, %v2681
      %v2693 = vpack.c.b16 %v2684, %v2683
      %v2694 = vpack.c.b16 %v2686, %v2685
      %2703 = vmatpush.bf16.msra.mxu0 %v2694
      %2704 = vmatpush.bf16.msra.mxu0 %v2693
      %2705 = vmatpush.bf16.msra.mxu0 %v2692
      %2706 = vmatpush.bf16.msra.mxu0 %v2691
      %2707 = vmatpush.bf16.msra.mxu0 %v2690
      %2708 = vmatpush.bf16.msra.mxu0 %v2689
      %2709 = vmatpush.bf16.msra.mxu0 %v2688
      %2710 = vmatpush.bf16.msra.mxu0 %v2687
      %2711 = vmatmul.bf16.gmra.mxu0 %v2636
      %v2712 = vpop.f32.mrf.mxu0
      %v2713 = vadd.f32 0.0, %v2712
      %v2714 = vpop.f32.mrf.mxu0
      %v2715 = vadd.f32 0.0, %v2714
      %2716 = vmatmul.bf16.gmra.mxu0 %v2637
      %v2717 = vpop.f32.mrf.mxu0
      %v2718 = vadd.f32 0.0, %v2717
      %v2719 = vpop.f32.mrf.mxu0
      %v2720 = vadd.f32 0.0, %v2719
      %2721 = vmatmul.bf16.gmra.mxu0 %v2638
      %v2722 = vpop.f32.mrf.mxu0
      %v2723 = vadd.f32 0.0, %v2722
      %v2724 = vpop.f32.mrf.mxu0
      %v2725 = vadd.f32 0.0, %v2724
      %2726 = vdwg.mxu0
      %v2727 = vadd.f32 %v840, %v2713
      %v2728 = vadd.f32 %v841, %v2715
      %v2729 = vadd.f32 %v842, %v2718
      %v2730 = vadd.f32 %v843, %v2720
      %v2731 = vadd.f32 %v844, %v2723
      %v2732 = vadd.f32 %v845, %v2725
      %v2733 = vld [vmem:[%s741] sm:$0x1]
      %v2735 = vperm.slane %v2733, 0
      %v2737 = vadd.f32 %v2727, %v2735
      %v2738 = vadd.f32 %v2728, %v2735
      %v2739 = vadd.f32 %v2729, %v2735
      %v2740 = vadd.f32 %v2730, %v2735
      %v2741 = vadd.f32 %v2731, %v2735
      %v2742 = vadd.f32 %v2732, %v2735
      %v2743 = vld [vmem:[%s744] sm:$0x1]
      %v2744 = vld [vmem:[%s747] sm:$0x1]
      %2745 = vadd.xlane.f32.xlu0 %v2737
      %v2746 = vpop.xlane.xlu0 %2745
      %2747 = vadd.xlane.f32.xlu0 %v2738
      %v2748 = vpop.xlane.xlu0 %2747
      %2749 = vadd.xlane.f32.xlu0 %v2739
      %v2750 = vpop.xlane.xlu0 %2749
      %2751 = vadd.xlane.f32.xlu0 %v2740
      %v2752 = vpop.xlane.xlu0 %2751
      %2753 = vadd.xlane.f32.xlu0 %v2741
      %v2754 = vpop.xlane.xlu0 %2753
      %2755 = vadd.xlane.f32.xlu0 %v2742
      %v2756 = vpop.xlane.xlu0 %2755
      %v2757 = vmul.f32 %v2746, %v866
      %v2758 = vmul.f32 %v2748, %v866
      %v2759 = vmul.f32 %v2750, %v866
      %v2760 = vmul.f32 %v2752, %v866
      %v2761 = vmul.f32 %v2754, %v866
      %v2762 = vmul.f32 %v2756, %v866
      %v2763 = vsub.f32 %v2737, %v2757
      %v2764 = vsub.f32 %v2738, %v2758
      %v2765 = vsub.f32 %v2739, %v2759
      %v2766 = vsub.f32 %v2740, %v2760
      %v2767 = vsub.f32 %v2741, %v2761
      %v2768 = vsub.f32 %v2742, %v2762
      %v2769 = vmul.f32 %v2763, %v2763
      %v2770 = vmul.f32 %v2764, %v2764
      %v2771 = vmul.f32 %v2765, %v2765
      %v2772 = vmul.f32 %v2766, %v2766
      %v2773 = vmul.f32 %v2767, %v2767
      %v2774 = vmul.f32 %v2768, %v2768
      %2775 = vadd.xlane.f32.xlu0 %v2769
      %v2776 = vpop.xlane.xlu0 %2775
      %2777 = vadd.xlane.f32.xlu0 %v2770
      %v2778 = vpop.xlane.xlu0 %2777
      %2779 = vadd.xlane.f32.xlu0 %v2771
      %v2780 = vpop.xlane.xlu0 %2779
      %2781 = vadd.xlane.f32.xlu0 %v2772
      %v2782 = vpop.xlane.xlu0 %2781
      %2783 = vadd.xlane.f32.xlu0 %v2773
      %v2784 = vpop.xlane.xlu0 %2783
      %2785 = vadd.xlane.f32.xlu0 %v2774
      %v2786 = vpop.xlane.xlu0 %2785
      %v2787 = vmul.f32 %v2776, %v866
      %v2788 = vmul.f32 %v2778, %v866
      %v2789 = vmul.f32 %v2780, %v866
      %v2790 = vmul.f32 %v2782, %v866
      %v2791 = vmul.f32 %v2784, %v866
      %v2792 = vmul.f32 %v2786, %v866
      %v2793 = vadd.f32 %v2787, 1e-05
      %v2794 = vadd.f32 %v2788, 1e-05
      %v2795 = vadd.f32 %v2789, 1e-05
      %v2796 = vadd.f32 %v2790, 1e-05
      %v2797 = vadd.f32 %v2791, 1e-05
      %v2798 = vadd.f32 %v2792, 1e-05
      %v2799 = vrsqrt.pop %v2793
      %v2800 = vmul.f32 %v2799, %v2793
      %v2801 = vmul.f32 %v2800, %v2799
      %v2802 = vmul.f32 0.5, %v2801
      %v2803 = vsub.f32 1.5, %v2802
      %v2804 = vmul.f32 %v2799, %v2803
      %vm2805 = vweird.f32 %v2793
      %vm2806 = vweird.f32 %v2799
      %vm2807 = vmor %vm2805, %vm2806
      %v2808 = vsel %vm2807, %v2799, %v2804
      %v2809 = vrsqrt.pop %v2794
      %v2810 = vmul.f32 %v2809, %v2794
      %v2811 = vmul.f32 %v2810, %v2809
      %v2812 = vmul.f32 0.5, %v2811
      %v2813 = vsub.f32 1.5, %v2812
      %v2814 = vmul.f32 %v2809, %v2813
      %vm2815 = vweird.f32 %v2794
      %vm2816 = vweird.f32 %v2809
      %vm2817 = vmor %vm2815, %vm2816
      %v2818 = vsel %vm2817, %v2809, %v2814
      %v2819 = vrsqrt.pop %v2795
      %v2820 = vmul.f32 %v2819, %v2795
      %v2821 = vmul.f32 %v2820, %v2819
      %v2822 = vmul.f32 0.5, %v2821
      %v2823 = vsub.f32 1.5, %v2822
      %v2824 = vmul.f32 %v2819, %v2823
      %vm2825 = vweird.f32 %v2795
      %vm2826 = vweird.f32 %v2819
      %vm2827 = vmor %vm2825, %vm2826
      %v2828 = vsel %vm2827, %v2819, %v2824
      %v2829 = vrsqrt.pop %v2796
      %v2830 = vmul.f32 %v2829, %v2796
      %v2831 = vmul.f32 %v2830, %v2829
      %v2832 = vmul.f32 0.5, %v2831
      %v2833 = vsub.f32 1.5, %v2832
      %v2834 = vmul.f32 %v2829, %v2833
      %vm2835 = vweird.f32 %v2796
      %vm2836 = vweird.f32 %v2829
      %vm2837 = vmor %vm2835, %vm2836
      %v2838 = vsel %vm2837, %v2829, %v2834
      %v2839 = vrsqrt.pop %v2797
      %v2840 = vmul.f32 %v2839, %v2797
      %v2841 = vmul.f32 %v2840, %v2839
      %v2842 = vmul.f32 0.5, %v2841
      %v2843 = vsub.f32 1.5, %v2842
      %v2844 = vmul.f32 %v2839, %v2843
      %vm2845 = vweird.f32 %v2797
      %vm2846 = vweird.f32 %v2839
      %vm2847 = vmor %vm2845, %vm2846
      %v2848 = vsel %vm2847, %v2839, %v2844
      %v2849 = vrsqrt.pop %v2798
      %v2850 = vmul.f32 %v2849, %v2798
      %v2851 = vmul.f32 %v2850, %v2849
      %v2852 = vmul.f32 0.5, %v2851
      %v2853 = vsub.f32 1.5, %v2852
      %v2854 = vmul.f32 %v2849, %v2853
      %vm2855 = vweird.f32 %v2798
      %vm2856 = vweird.f32 %v2849
      %vm2857 = vmor %vm2855, %vm2856
      %v2858 = vsel %vm2857, %v2849, %v2854
      %v2859 = vmul.f32 %v2763, %v2808
      %v2860 = vmul.f32 %v2764, %v2818
      %v2861 = vmul.f32 %v2765, %v2828
      %v2862 = vmul.f32 %v2766, %v2838
      %v2863 = vmul.f32 %v2767, %v2848
      %v2864 = vmul.f32 %v2768, %v2858
      %v2866 = vperm.slane %v2743, 0
      %v2868 = vmul.f32 %v2859, %v2866
      %v2869 = vmul.f32 %v2860, %v2866
      %v2870 = vmul.f32 %v2861, %v2866
      %v2871 = vmul.f32 %v2862, %v2866
      %v2872 = vmul.f32 %v2863, %v2866
      %v2873 = vmul.f32 %v2864, %v2866
      %v2875 = vperm.slane %v2744, 0
      %v2877 = vadd.f32 %v2868, %v2875
      %v2878 = vadd.f32 %v2869, %v2875
      %v2879 = vadd.f32 %v2870, %v2875
      %v2880 = vadd.f32 %v2871, %v2875
      %v2881 = vadd.f32 %v2872, %v2875
      %v2882 = vadd.f32 %v2873, %v2875
      %v2883 = vpack.c.bf16 %v2878, %v2877
      %v2884 = vpack.c.bf16 %v2880, %v2879
      %v2885 = vpack.c.bf16 %v2882, %v2881
      %v2886 = vld [vmem:[%s752] sm:$0xff]
      %v2887 = vld [vmem:[%s752 + $0x8] sm:$0xff]
      %v2888 = vld [vmem:[%s752 + $0x10] sm:$0xff]
      %v2889 = vld [vmem:[%s752 + $0x18] sm:$0xff]
      %v2890 = vld [vmem:[%s752 + $0x20] sm:$0xff]
      %v2891 = vld [vmem:[%s752 + $0x28] sm:$0xff]
      %v2892 = vld [vmem:[%s752 + $0x30] sm:$0xff]
      %v2893 = vld [vmem:[%s752 + $0x38] sm:$0xff]
      %v2894 = vld [vmem:[%s752 + $0x40] sm:$0xff]
      %v2895 = vld [vmem:[%s752 + $0x48] sm:$0xff]
      %v2896 = vld [vmem:[%s752 + $0x50] sm:$0xff]
      %v2897 = vld [vmem:[%s752 + $0x58] sm:$0xff]
      %v2898 = vld [vmem:[%s752 + $0x60] sm:$0xff]
      %v2899 = vld [vmem:[%s752 + $0x68] sm:$0xff]
      %v2900 = vld [vmem:[%s752 + $0x70] sm:$0xff]
      %v2901 = vld [vmem:[%s752 + $0x78] sm:$0xff]
      %v2902 = vld [vmem:[%s756] sm:$0x3]
      %v2904 = vperm.slane %v2902, 0
      %v2905 = vperm.slane %v2902, 1
      %v2924 = vunpack.c.l.b16 %v2886
      %v2925 = vunpack.c.h.b16 %v2886
      %v2926 = vunpack.c.l.b16 %v2887
      %v2927 = vunpack.c.h.b16 %v2887
      %v2928 = vunpack.c.l.b16 %v2888
      %v2929 = vunpack.c.h.b16 %v2888
      %v2930 = vunpack.c.l.b16 %v2889
      %v2931 = vunpack.c.h.b16 %v2889
      %v2932 = vunpack.c.l.b16 %v2890
      %v2933 = vunpack.c.h.b16 %v2890
      %v2934 = vunpack.c.l.b16 %v2891
      %v2935 = vunpack.c.h.b16 %v2891
      %v2936 = vunpack.c.l.b16 %v2892
      %v2937 = vunpack.c.h.b16 %v2892
      %v2938 = vunpack.c.l.b16 %v2893
      %v2939 = vunpack.c.h.b16 %v2893
      %v2940 = vunpack.c.l.b16 %v2894
      %v2941 = vunpack.c.h.b16 %v2894
      %v2942 = vunpack.c.l.b16 %v2895
      %v2943 = vunpack.c.h.b16 %v2895
      %v2944 = vunpack.c.l.b16 %v2896
      %v2945 = vunpack.c.h.b16 %v2896
      %v2946 = vunpack.c.l.b16 %v2897
      %v2947 = vunpack.c.h.b16 %v2897
      %v2948 = vunpack.c.l.b16 %v2898
      %v2949 = vunpack.c.h.b16 %v2898
      %v2950 = vunpack.c.l.b16 %v2899
      %v2951 = vunpack.c.h.b16 %v2899
      %v2952 = vunpack.c.l.b16 %v2900
      %v2953 = vunpack.c.h.b16 %v2900
      %v2954 = vunpack.c.l.b16 %v2901
      %v2955 = vunpack.c.h.b16 %v2901
      %v2956 = vpack.c.b16 %v2926, %v2924
      %v2957 = vpack.c.b16 %v2927, %v2925
      %v2958 = vpack.c.b16 %v2930, %v2928
      %v2959 = vpack.c.b16 %v2931, %v2929
      %v2960 = vpack.c.b16 %v2934, %v2932
      %v2961 = vpack.c.b16 %v2935, %v2933
      %v2962 = vpack.c.b16 %v2938, %v2936
      %v2963 = vpack.c.b16 %v2939, %v2937
      %v2964 = vpack.c.b16 %v2942, %v2940
      %v2965 = vpack.c.b16 %v2943, %v2941
      %v2966 = vpack.c.b16 %v2946, %v2944
      %v2967 = vpack.c.b16 %v2947, %v2945
      %v2968 = vpack.c.b16 %v2950, %v2948
      %v2969 = vpack.c.b16 %v2951, %v2949
      %v2970 = vpack.c.b16 %v2954, %v2952
      %v2971 = vpack.c.b16 %v2955, %v2953
      %2988 = vmatpush.bf16.msra.mxu0 %v2970
      %2989 = vmatpush.bf16.msra.mxu0 %v2968
      %2990 = vmatpush.bf16.msra.mxu0 %v2966
      %2991 = vmatpush.bf16.msra.mxu0 %v2964
      %2992 = vmatpush.bf16.msra.mxu0 %v2962
      %2993 = vmatpush.bf16.msra.mxu0 %v2960
      %2994 = vmatpush.bf16.msra.mxu0 %v2958
      %2995 = vmatpush.bf16.msra.mxu0 %v2956
      %2996 = vmatmul.bf16.gmra.mxu0 %v2883
      %v2997 = vpop.f32.mrf.mxu0
      %v2998 = vadd.f32 %v2904, %v2997
      %v2999 = vpop.f32.mrf.mxu0
      %v3000 = vadd.f32 %v2904, %v2999
      %3001 = vmatmul.bf16.gmra.mxu0 %v2884
      %v3002 = vpop.f32.mrf.mxu0
      %v3003 = vadd.f32 %v2904, %v3002
      %v3004 = vpop.f32.mrf.mxu0
      %v3005 = vadd.f32 %v2904, %v3004
      %3006 = vmatmul.bf16.gmra.mxu0 %v2885
      %v3007 = vpop.f32.mrf.mxu0
      %v3008 = vadd.f32 %v2904, %v3007
      %v3009 = vpop.f32.mrf.mxu0
      %v3010 = vadd.f32 %v2904, %v3009
      %3011 = vdwg.mxu0
      %3012 = vmatpush.bf16.msra.mxu0 %v2971
      %3013 = vmatpush.bf16.msra.mxu0 %v2969
      %3014 = vmatpush.bf16.msra.mxu0 %v2967
      %3015 = vmatpush.bf16.msra.mxu0 %v2965
      %3016 = vmatpush.bf16.msra.mxu0 %v2963
      %3017 = vmatpush.bf16.msra.mxu0 %v2961
      %3018 = vmatpush.bf16.msra.mxu0 %v2959
      %3019 = vmatpush.bf16.msra.mxu0 %v2957
      %3020 = vmatmul.bf16.gmra.mxu0 %v2883
      %v3021 = vpop.f32.mrf.mxu0
      %v3022 = vadd.f32 %v2905, %v3021
      %v3023 = vpop.f32.mrf.mxu0
      %v3024 = vadd.f32 %v2905, %v3023
      %3025 = vmatmul.bf16.gmra.mxu0 %v2884
      %v3026 = vpop.f32.mrf.mxu0
      %v3027 = vadd.f32 %v2905, %v3026
      %v3028 = vpop.f32.mrf.mxu0
      %v3029 = vadd.f32 %v2905, %v3028
      %3030 = vmatmul.bf16.gmra.mxu0 %v2885
      %v3031 = vpop.f32.mrf.mxu0
      %v3032 = vadd.f32 %v2905, %v3031
      %v3033 = vpop.f32.mrf.mxu0
      %v3034 = vadd.f32 %v2905, %v3033
      %3035 = vdwg.mxu0
      %v3036 = vmul.f32 %v2998, %v2998
      %v3037 = vmul.f32 %v3022, %v3022
      %v3038 = vmul.f32 %v3000, %v3000
      %v3039 = vmul.f32 %v3024, %v3024
      %v3040 = vmul.f32 %v3003, %v3003
      %v3041 = vmul.f32 %v3027, %v3027
      %v3042 = vmul.f32 %v3005, %v3005
      %v3043 = vmul.f32 %v3029, %v3029
      %v3044 = vmul.f32 %v3008, %v3008
      %v3045 = vmul.f32 %v3032, %v3032
      %v3046 = vmul.f32 %v3010, %v3010
      %v3047 = vmul.f32 %v3034, %v3034
      %v3048 = vmul.f32 %v2998, %v3036
      %v3049 = vmul.f32 %v3022, %v3037
      %v3050 = vmul.f32 %v3000, %v3038
      %v3051 = vmul.f32 %v3024, %v3039
      %v3052 = vmul.f32 %v3003, %v3040
      %v3053 = vmul.f32 %v3027, %v3041
      %v3054 = vmul.f32 %v3005, %v3042
      %v3055 = vmul.f32 %v3029, %v3043
      %v3056 = vmul.f32 %v3008, %v3044
      %v3057 = vmul.f32 %v3032, %v3045
      %v3058 = vmul.f32 %v3010, %v3046
      %v3059 = vmul.f32 %v3034, %v3047
      %v3060 = vmul.f32 %v3048, 0.044715
      %v3061 = vmul.f32 %v3049, 0.044715
      %v3062 = vmul.f32 %v3050, 0.044715
      %v3063 = vmul.f32 %v3051, 0.044715
      %v3064 = vmul.f32 %v3052, 0.044715
      %v3065 = vmul.f32 %v3053, 0.044715
      %v3066 = vmul.f32 %v3054, 0.044715
      %v3067 = vmul.f32 %v3055, 0.044715
      %v3068 = vmul.f32 %v3056, 0.044715
      %v3069 = vmul.f32 %v3057, 0.044715
      %v3070 = vmul.f32 %v3058, 0.044715
      %v3071 = vmul.f32 %v3059, 0.044715
      %v3072 = vadd.f32 %v2998, %v3060
      %v3073 = vadd.f32 %v3022, %v3061
      %v3074 = vadd.f32 %v3000, %v3062
      %v3075 = vadd.f32 %v3024, %v3063
      %v3076 = vadd.f32 %v3003, %v3064
      %v3077 = vadd.f32 %v3027, %v3065
      %v3078 = vadd.f32 %v3005, %v3066
      %v3079 = vadd.f32 %v3029, %v3067
      %v3080 = vadd.f32 %v3008, %v3068
      %v3081 = vadd.f32 %v3032, %v3069
      %v3082 = vadd.f32 %v3010, %v3070
      %v3083 = vadd.f32 %v3034, %v3071
      %v3084 = vmul.f32 %v3072, 0.7978846
      %v3085 = vmul.f32 %v3073, 0.7978846
      %v3086 = vmul.f32 %v3074, 0.7978846
      %v3087 = vmul.f32 %v3075, 0.7978846
      %v3088 = vmul.f32 %v3076, 0.7978846
      %v3089 = vmul.f32 %v3077, 0.7978846
      %v3090 = vmul.f32 %v3078, 0.7978846
      %v3091 = vmul.f32 %v3079, 0.7978846
      %v3092 = vmul.f32 %v3080, 0.7978846
      %v3093 = vmul.f32 %v3081, 0.7978846
      %v3094 = vmul.f32 %v3082, 0.7978846
      %v3095 = vmul.f32 %v3083, 0.7978846
      %v3096 = vtanh.pop %v3084
      %v3097 = vtanh.pop %v3085
      %v3098 = vtanh.pop %v3086
      %v3099 = vtanh.pop %v3087
      %v3100 = vtanh.pop %v3088
      %v3101 = vtanh.pop %v3089
      %v3102 = vtanh.pop %v3090
      %v3103 = vtanh.pop %v3091
      %v3104 = vtanh.pop %v3092
      %v3105 = vtanh.pop %v3093
      %v3106 = vtanh.pop %v3094
      %v3107 = vtanh.pop %v3095
      %v3108 = vadd.f32 %v3096, 1.0
      %v3109 = vadd.f32 %v3097, 1.0
      %v3110 = vadd.f32 %v3098, 1.0
      %v3111 = vadd.f32 %v3099, 1.0
      %v3112 = vadd.f32 %v3100, 1.0
      %v3113 = vadd.f32 %v3101, 1.0
      %v3114 = vadd.f32 %v3102, 1.0
      %v3115 = vadd.f32 %v3103, 1.0
      %v3116 = vadd.f32 %v3104, 1.0
      %v3117 = vadd.f32 %v3105, 1.0
      %v3118 = vadd.f32 %v3106, 1.0
      %v3119 = vadd.f32 %v3107, 1.0
      %v3120 = vmul.f32 %v3108, 0.5
      %v3121 = vmul.f32 %v3109, 0.5
      %v3122 = vmul.f32 %v3110, 0.5
      %v3123 = vmul.f32 %v3111, 0.5
      %v3124 = vmul.f32 %v3112, 0.5
      %v3125 = vmul.f32 %v3113, 0.5
      %v3126 = vmul.f32 %v3114, 0.5
      %v3127 = vmul.f32 %v3115, 0.5
      %v3128 = vmul.f32 %v3116, 0.5
      %v3129 = vmul.f32 %v3117, 0.5
      %v3130 = vmul.f32 %v3118, 0.5
      %v3131 = vmul.f32 %v3119, 0.5
      %v3132 = vmul.f32 %v2998, %v3120
      %v3133 = vmul.f32 %v3022, %v3121
      %v3134 = vmul.f32 %v3000, %v3122
      %v3135 = vmul.f32 %v3024, %v3123
      %v3136 = vmul.f32 %v3003, %v3124
      %v3137 = vmul.f32 %v3027, %v3125
      %v3138 = vmul.f32 %v3005, %v3126
      %v3139 = vmul.f32 %v3029, %v3127
      %v3140 = vmul.f32 %v3008, %v3128
      %v3141 = vmul.f32 %v3032, %v3129
      %v3142 = vmul.f32 %v3010, %v3130
      %v3143 = vmul.f32 %v3034, %v3131
      %v3144 = vpack.c.bf16 %v3134, %v3132
      %v3145 = vpack.c.bf16 %v3135, %v3133
      %v3146 = vpack.c.bf16 %v3138, %v3136
      %v3147 = vpack.c.bf16 %v3139, %v3137
      %v3148 = vpack.c.bf16 %v3142, %v3140
      %v3149 = vpack.c.bf16 %v3143, %v3141
      %v3150 = vld [vmem:[%s761] sm:$0xf]
      %v3151 = vld [vmem:[%s761 + $0x4] sm:$0xf]
      %v3152 = vld [vmem:[%s761 + $0x8] sm:$0xf]
      %v3153 = vld [vmem:[%s761 + $0xc] sm:$0xf]
      %v3154 = vld [vmem:[%s761 + $0x10] sm:$0xf]
      %v3155 = vld [vmem:[%s761 + $0x14] sm:$0xf]
      %v3156 = vld [vmem:[%s761 + $0x18] sm:$0xf]
      %v3157 = vld [vmem:[%s761 + $0x1c] sm:$0xf]
      %v3158 = vld [vmem:[%s761 + $0x20] sm:$0xf]
      %v3159 = vld [vmem:[%s761 + $0x24] sm:$0xf]
      %v3160 = vld [vmem:[%s761 + $0x28] sm:$0xf]
      %v3161 = vld [vmem:[%s761 + $0x2c] sm:$0xf]
      %v3162 = vld [vmem:[%s761 + $0x30] sm:$0xf]
      %v3163 = vld [vmem:[%s761 + $0x34] sm:$0xf]
      %v3164 = vld [vmem:[%s761 + $0x38] sm:$0xf]
      %v3165 = vld [vmem:[%s761 + $0x3c] sm:$0xf]
      %v3166 = vld [vmem:[%s761 + $0x40] sm:$0xf]
      %v3167 = vld [vmem:[%s761 + $0x44] sm:$0xf]
      %v3168 = vld [vmem:[%s761 + $0x48] sm:$0xf]
      %v3169 = vld [vmem:[%s761 + $0x4c] sm:$0xf]
      %v3170 = vld [vmem:[%s761 + $0x50] sm:$0xf]
      %v3171 = vld [vmem:[%s761 + $0x54] sm:$0xf]
      %v3172 = vld [vmem:[%s761 + $0x58] sm:$0xf]
      %v3173 = vld [vmem:[%s761 + $0x5c] sm:$0xf]
      %v3174 = vld [vmem:[%s761 + $0x60] sm:$0xf]
      %v3175 = vld [vmem:[%s761 + $0x64] sm:$0xf]
      %v3176 = vld [vmem:[%s761 + $0x68] sm:$0xf]
      %v3177 = vld [vmem:[%s761 + $0x6c] sm:$0xf]
      %v3178 = vld [vmem:[%s761 + $0x70] sm:$0xf]
      %v3179 = vld [vmem:[%s761 + $0x74] sm:$0xf]
      %v3180 = vld [vmem:[%s761 + $0x78] sm:$0xf]
      %v3181 = vld [vmem:[%s761 + $0x7c] sm:$0xf]
      %v3182 = vld [vmem:[%s764] sm:$0x1]
      %v3184 = vperm.slane %v3182, 0
      %v3218 = vunpack.c.l.b16 %v3150
      %v3219 = vunpack.c.l.b16 %v3151
      %v3220 = vunpack.c.l.b16 %v3152
      %v3221 = vunpack.c.l.b16 %v3153
      %v3222 = vunpack.c.l.b16 %v3154
      %v3223 = vunpack.c.l.b16 %v3155
      %v3224 = vunpack.c.l.b16 %v3156
      %v3225 = vunpack.c.l.b16 %v3157
      %v3226 = vunpack.c.l.b16 %v3158
      %v3227 = vunpack.c.l.b16 %v3159
      %v3228 = vunpack.c.l.b16 %v3160
      %v3229 = vunpack.c.l.b16 %v3161
      %v3230 = vunpack.c.l.b16 %v3162
      %v3231 = vunpack.c.l.b16 %v3163
      %v3232 = vunpack.c.l.b16 %v3164
      %v3233 = vunpack.c.l.b16 %v3165
      %v3234 = vunpack.c.l.b16 %v3166
      %v3235 = vunpack.c.l.b16 %v3167
      %v3236 = vunpack.c.l.b16 %v3168
      %v3237 = vunpack.c.l.b16 %v3169
      %v3238 = vunpack.c.l.b16 %v3170
      %v3239 = vunpack.c.l.b16 %v3171
      %v3240 = vunpack.c.l.b16 %v3172
      %v3241 = vunpack.c.l.b16 %v3173
      %v3242 = vunpack.c.l.b16 %v3174
      %v3243 = vunpack.c.l.b16 %v3175
      %v3244 = vunpack.c.l.b16 %v3176
      %v3245 = vunpack.c.l.b16 %v3177
      %v3246 = vunpack.c.l.b16 %v3178
      %v3247 = vunpack.c.l.b16 %v3179
      %v3248 = vunpack.c.l.b16 %v3180
      %v3249 = vunpack.c.l.b16 %v3181
      %v3250 = vpack.c.b16 %v3219, %v3218
      %v3251 = vpack.c.b16 %v3221, %v3220
      %v3252 = vpack.c.b16 %v3223, %v3222
      %v3253 = vpack.c.b16 %v3225, %v3224
      %v3254 = vpack.c.b16 %v3227, %v3226
      %v3255 = vpack.c.b16 %v3229, %v3228
      %v3256 = vpack.c.b16 %v3231, %v3230
      %v3257 = vpack.c.b16 %v3233, %v3232
      %v3258 = vpack.c.b16 %v3235, %v3234
      %v3259 = vpack.c.b16 %v3237, %v3236
      %v3260 = vpack.c.b16 %v3239, %v3238
      %v3261 = vpack.c.b16 %v3241, %v3240
      %v3262 = vpack.c.b16 %v3243, %v3242
      %v3263 = vpack.c.b16 %v3245, %v3244
      %v3264 = vpack.c.b16 %v3247, %v3246
      %v3265 = vpack.c.b16 %v3249, %v3248
      %3282 = vmatpush.bf16.msra.mxu0 %v3257
      %3283 = vmatpush.bf16.msra.mxu0 %v3256
      %3284 = vmatpush.bf16.msra.mxu0 %v3255
      %3285 = vmatpush.bf16.msra.mxu0 %v3254
      %3286 = vmatpush.bf16.msra.mxu0 %v3253
      %3287 = vmatpush.bf16.msra.mxu0 %v3252
      %3288 = vmatpush.bf16.msra.mxu0 %v3251
      %3289 = vmatpush.bf16.msra.mxu0 %v3250
      %3290 = vmatmul.bf16.gmra.mxu0 %v3144
      %v3291 = vpop.f32.mrf.mxu0
      %v3292 = vadd.f32 %v3184, %v3291
      %v3293 = vpop.f32.mrf.mxu0
      %v3294 = vadd.f32 %v3184, %v3293
      %3295 = vmatmul.bf16.gmra.mxu0 %v3146
      %v3296 = vpop.f32.mrf.mxu0
      %v3297 = vadd.f32 %v3184, %v3296
      %v3298 = vpop.f32.mrf.mxu0
      %v3299 = vadd.f32 %v3184, %v3298
      %3300 = vmatmul.bf16.gmra.mxu0 %v3148
      %v3301 = vpop.f32.mrf.mxu0
      %v3302 = vadd.f32 %v3184, %v3301
      %v3303 = vpop.f32.mrf.mxu0
      %v3304 = vadd.f32 %v3184, %v3303
      %3305 = vdwg.mxu0
      %3306 = vmatpush.bf16.msra.mxu0 %v3265
      %3307 = vmatpush.bf16.msra.mxu0 %v3264
      %3308 = vmatpush.bf16.msra.mxu0 %v3263
      %3309 = vmatpush.bf16.msra.mxu0 %v3262
      %3310 = vmatpush.bf16.msra.mxu0 %v3261
      %3311 = vmatpush.bf16.msra.mxu0 %v3260
      %3312 = vmatpush.bf16.msra.mxu0 %v3259
      %3313 = vmatpush.bf16.msra.mxu0 %v3258
      %3314 = vmatmul.bf16.gmra.mxu0 %v3145
      %v3315 = vpop.f32.mrf.mxu0
      %v3316 = vadd.f32 %v3292, %v3315
      %v3317 = vpop.f32.mrf.mxu0
      %v3318 = vadd.f32 %v3294, %v3317
      %3319 = vmatmul.bf16.gmra.mxu0 %v3147
      %v3320 = vpop.f32.mrf.mxu0
      %v3321 = vadd.f32 %v3297, %v3320
      %v3322 = vpop.f32.mrf.mxu0
      %v3323 = vadd.f32 %v3299, %v3322
      %3324 = vmatmul.bf16.gmra.mxu0 %v3149
      %v3325 = vpop.f32.mrf.mxu0
      %v3326 = vadd.f32 %v3302, %v3325
      %v3327 = vpop.f32.mrf.mxu0
      %v3328 = vadd.f32 %v3304, %v3327
      %3329 = vdwg.mxu0
      %v3330 = vadd.f32 %v2737, %v3316
      %v3331 = vadd.f32 %v2738, %v3318
      %v3332 = vadd.f32 %v2739, %v3321
      %v3333 = vadd.f32 %v2740, %v3323
      %v3334 = vadd.f32 %v2741, %v3326
      %v3335 = vadd.f32 %v2742, %v3328
      %3336 = vst [vmem:[#allocation2] sm:$0xff] %v3330
      %3337 = vst [vmem:[#allocation2 + $0x8] sm:$0xff] %v3331
      %3338 = vst [vmem:[#allocation2 + $0x10] sm:$0xff] %v3332
      %3339 = vst [vmem:[#allocation2 + $0x18] sm:$0xff] %v3333
      %3340 = vst [vmem:[#allocation2 + $0x20] sm:$0xff] %v3334
      %3341 = vst [vmem:[#allocation2 + $0x28] sm:$0xff] %v3335
      %p3342 = scmp.eq.s32.totalorder %s34, 1
      // Predicated region
      $region97: #{vit_forward.1} parent=91 // pred_check
        %p3343 = pneg %p3342
      $region98: #{vit_forward.1} parent=91 // pred_check_branch
        %3345 = sbr.rel (%p3343) target = $region100
      $region99: #{vit_forward.1} parent=91 // pred_region
        %v3347 = vrot.slane %v3333, 7
        %vm3349 = vcmask 1040384
        %v3350 = vsel %vm3349, %v3330, %v3347
        %v3351 = vld [vmem:[%s14] sm:$0x1]
        %v3352 = vld [vmem:[%s15] sm:$0x1]
        %vm3353 = vcmask 1041408
        %v3354 = vsel %vm3353, %v3350, 0.0
        %3355 = vadd.xlane.f32.xlu0 %v3354
        %v3356 = vpop.xlane.xlu0 %3355
        %v3357 = vmul.f32 %v3356, %v866
        %v3358 = vsub.f32 %v3350, %v3357
        %v3359 = vmul.f32 %v3358, %v3358
        %v3360 = vsel %vm3353, %v3359, 0.0
        %3361 = vadd.xlane.f32.xlu0 %v3360
        %v3362 = vpop.xlane.xlu0 %3361
        %v3363 = vmul.f32 %v3362, %v866
        %v3364 = vadd.f32 %v3363, 1e-05
        %v3365 = vrsqrt.pop %v3364
        %v3366 = vmul.f32 %v3365, %v3364
        %v3367 = vmul.f32 %v3366, %v3365
        %v3368 = vmul.f32 0.5, %v3367
        %v3369 = vsub.f32 1.5, %v3368
        %v3370 = vmul.f32 %v3365, %v3369
        %vm3371 = vweird.f32 %v3364
        %vm3372 = vweird.f32 %v3365
        %vm3373 = vmor %vm3371, %vm3372
        %v3374 = vsel %vm3373, %v3365, %v3370
        %v3375 = vmul.f32 %v3358, %v3374
        %v3377 = vperm.slane %v3351, 0
        %v3379 = vmul.f32 %v3375, %v3377
        %v3381 = vperm.slane %v3352, 0
        %v3383 = vadd.f32 %v3379, %v3381
        %v3384 = vpack.c.bf16 %v3383, %v3383
        %v3385 = vld [vmem:[%s16] sm:$0xf]
        %v3386 = vld [vmem:[%s16 + $0x4] sm:$0xf]
        %v3387 = vld [vmem:[%s16 + $0x8] sm:$0xf]
        %v3388 = vld [vmem:[%s16 + $0xc] sm:$0xf]
        %v3389 = vld [vmem:[%s16 + $0x10] sm:$0xf]
        %v3390 = vld [vmem:[%s16 + $0x14] sm:$0xf]
        %v3391 = vld [vmem:[%s16 + $0x18] sm:$0xf]
        %v3392 = vld [vmem:[%s16 + $0x1c] sm:$0xf]
        %v3393 = vld [vmem:[%s16 + $0x20] sm:$0xf]
        %v3394 = vld [vmem:[%s16 + $0x24] sm:$0xf]
        %v3395 = vld [vmem:[%s16 + $0x28] sm:$0xf]
        %v3396 = vld [vmem:[%s16 + $0x2c] sm:$0xf]
        %v3397 = vld [vmem:[%s16 + $0x30] sm:$0xf]
        %v3398 = vld [vmem:[%s16 + $0x34] sm:$0xf]
        %v3399 = vld [vmem:[%s16 + $0x38] sm:$0xf]
        %v3400 = vld [vmem:[%s16 + $0x3c] sm:$0xf]
        %v3401 = vld [vmem:[%s17] sm:$0x1]
        %v3403 = vperm.slane %v3401, 0
        %v3421 = vunpack.c.l.b16 %v3385
        %v3422 = vunpack.c.l.b16 %v3386
        %v3423 = vunpack.c.l.b16 %v3387
        %v3424 = vunpack.c.l.b16 %v3388
        %v3425 = vunpack.c.l.b16 %v3389
        %v3426 = vunpack.c.l.b16 %v3390
        %v3427 = vunpack.c.l.b16 %v3391
        %v3428 = vunpack.c.l.b16 %v3392
        %v3429 = vunpack.c.l.b16 %v3393
        %v3430 = vunpack.c.l.b16 %v3394
        %v3431 = vunpack.c.l.b16 %v3395
        %v3432 = vunpack.c.l.b16 %v3396
        %v3433 = vunpack.c.l.b16 %v3397
        %v3434 = vunpack.c.l.b16 %v3398
        %v3435 = vunpack.c.l.b16 %v3399
        %v3436 = vunpack.c.l.b16 %v3400
        %v3437 = vpack.c.b16 %v3422, %v3421
        %v3438 = vpack.c.b16 %v3424, %v3423
        %v3439 = vpack.c.b16 %v3426, %v3425
        %v3440 = vpack.c.b16 %v3428, %v3427
        %v3441 = vpack.c.b16 %v3430, %v3429
        %v3442 = vpack.c.b16 %v3432, %v3431
        %v3443 = vpack.c.b16 %v3434, %v3433
        %v3444 = vpack.c.b16 %v3436, %v3435
        %3453 = vmatpush.bf16.msra.mxu0 %v3444
        %3454 = vmatpush.bf16.msra.mxu0 %v3443
        %3455 = vmatpush.bf16.msra.mxu0 %v3442
        %3456 = vmatpush.bf16.msra.mxu0 %v3441
        %3457 = vmatpush.bf16.msra.mxu0 %v3440
        %3458 = vmatpush.bf16.msra.mxu0 %v3439
        %3459 = vmatpush.bf16.msra.mxu0 %v3438
        %3460 = vmatpush.bf16.msra.mxu0 %v3437
        %3461 = vmatmul.bf16.gmra.mxu0 %v3384
        %v3462 = vpop.f32.mrf.mxu0
        %v3463 = vadd.f32 %v3403, %v3462
        %v3464 = vpop.f32.mrf.mxu0
        %3465 = vdwg.mxu0
        %vm3466 = vcmask 9216
        %3467 = vst.msk [vmem:[%s768] sm:$0x3] %vm3466, %v3463
      $region100: #{vit_forward.1} parent=91 // pred_fallthru
        _
      %p3468 = scmp.lt.s32.totalorder %s33, 1
      %s3469 = scalar_select %p3468, %s33, 1
      %s3470 = smul.addr %s3469, 2
      %s3471 = scalar_lea.vmem %s18, %s3470
      // Predicated region
      $region101: #{vit_forward.1} parent=91 // pred_check
        %p3472 = pneg %p497
      $region102: #{vit_forward.1} parent=91 // pred_check_branch
        %3474 = sbr.rel (%p3472) target = $region104
      $region103: #{vit_forward.1} parent=91 // pred_region
        _
      $region104: #{vit_forward.1} parent=91 // pred_fallthru
        _
    $region92: #{vit_forward.1} parent=5 // pred_fallthru
      _
    %p3475 = scmp.le.s32.totalorder 2, %s24
    // Predicated region
    $region105: #{vit_forward.1} parent=5 // pred_check
      %p3476 = pneg %p3475
    $region106: #{vit_forward.1} parent=5 // pred_check_branch
      %3478 = sbr.rel (%p3476) target = $region108
    $region107: #{vit_forward.1} parent=5 // pred_region
      %s3479 = ssub.s32 %s24, 2
      // Predicated region
      $region109: #{vit_forward.1} parent=107 // pred_check
        %p3480 = pneg %p503
      $region110: #{vit_forward.1} parent=107 // pred_check_branch
        %3482 = sbr.rel (%p3480) target = $region112
      $region111: #{vit_forward.1} parent=107 // pred_region
        %p3483 = scmp.lt.s32.totalorder %s35, 1
        %s3484 = scalar_select %p3483, %s35, 1
        %s3485 = smul.addr %s3484, 2
        %s3486 = scalar_lea.vmem %s18, %s3485
      $region112: #{vit_forward.1} parent=107 // pred_fallthru
        _
    $region108: #{vit_forward.1} parent=5 // pred_fallthru
      _
  $region6: #{vit_forward.1} parent=0 // loop_footer
    %s28 = sadd.s32 1, %s24
  $region7: #{vit_forward.1} parent=0 // loop_footer_branch
    %23 = sbr.rel target = $region3
  $region8: #{vit_forward.1} parent=0 // loop_exit
    _

</llo_original>
